<compile_context>
chip_gen: v6e
topology: v6e:2x2x1
jax: 0.10.0
libtpu: 0.0.40
codegen_flags: <defaults>
</compile_context>

<pallas_src>
import functools
import math

import jax
import jax.numpy as jnp
import numpy as np
from jax.experimental import pallas as pl
from jax.experimental.pallas import tpu as pltpu


def _round_up(x, m):
    return ((x + m - 1) // m) * m


def _layer_norm(x, gamma, beta, eps=1e-5):
    mu = jnp.mean(x, axis=-1, keepdims=True)
    var = jnp.mean((x - mu) ** 2, axis=-1, keepdims=True)
    return (x - mu) * jax.lax.rsqrt(var + eps) * gamma + beta


def encoder_layer_kernel(
    # data blocks (TB batch elements per step)
    vid_ref, txt_ref, vpos_ref, tpos_ref, vmask_ref, tmask_ref,
    # resident packed weights (bf16 matmul weights, f32 vector slab, f32 b1)
    sa_qkv_w, sa_out_w, ca_qkv_w, ca_out_w, w1_ref, w2_ref, vec_ref, b1_ref,
    # outputs (lane-dense padded last dims)
    out_ref, attn_ref,
    *, nhead):
    f32 = jnp.float32
    bf16 = jnp.bfloat16

    vid = vid_ref[...].astype(f32)     # (TB, Lv, D)
    txt = txt_ref[...].astype(f32)     # (TB, Lt, D)
    vpos = vpos_ref[...].astype(f32)
    tpos = tpos_ref[...].astype(f32)
    vmask = vmask_ref[...]             # (TB, 1, Lv) f32, 1.0 = padded
    tmask = tmask_ref[...]             # (TB, 1, Lt) f32

    TB, Lv, D = vid.shape
    Lt = txt.shape[1]
    hd = D // nhead
    scale = f32(1.0 / math.sqrt(hd))
    neg = f32(-1e30)

    vec = vec_ref[...]                 # (16, D) f32 slab, loaded once
    def row(i):                        # (1, D)
        return vec[i:i + 1, :]

    b1 = b1_ref[...]                   # (1, F) f32

    def project(x16, w16, b):          # (M,D)bf16 @ (D,N)bf16 -> f32 + bias
        return jnp.dot(x16, w16, preferred_element_type=f32) + b

    def mha(q_in, k_in, v_in, Lq, Lk, qkv_w_ref, wo_ref, bq, bk, bv, bo,
            key_mask, want_weights, exact_softmax):
        # Flattened projections: M = TB*L rows per MXU pass.
        q16 = q_in.reshape(TB * Lq, D).astype(bf16)
        k16 = q16 if k_in is q_in else k_in.reshape(TB * Lk, D).astype(bf16)
        v16 = v_in.reshape(TB * Lk, D).astype(bf16)
        Q = project(q16, qkv_w_ref[0], bq).astype(bf16).reshape(TB, Lq, D)
        K = project(k16, qkv_w_ref[1], bk).astype(bf16).reshape(TB, Lk, D)
        V = project(v16, qkv_w_ref[2], bv).astype(bf16).reshape(TB, Lk, D)

        bias = key_mask * neg          # (TB, 1, Lk), broadcasts over queries

        ctx_heads = []
        p_sum = None
        for h in range(nhead):         # static head loop
            sl = slice(h * hd, (h + 1) * hd)
            s = jnp.einsum('bqd,bkd->bqk', Q[:, :, sl], K[:, :, sl],
                           preferred_element_type=f32) * scale + bias
            s = s - jnp.max(s, axis=-1, keepdims=True)
            e = jnp.exp(s)
            denom = jnp.sum(e, axis=-1, keepdims=True)
            if exact_softmax:
                p = e / denom
            else:
                p = e * pl.reciprocal(denom, approx=True)
            ctx_heads.append(
                jnp.einsum('bqk,bkd->bqd', p.astype(bf16), V[:, :, sl],
                           preferred_element_type=f32))        # (TB, Lq, hd)
            if want_weights:
                p_sum = p if p_sum is None else p_sum + p
        # Single full-depth output projection (contraction depth D, not hd).
        ctx = jnp.concatenate(ctx_heads, axis=-1)               # (TB, Lq, D)
        ctx16 = ctx.reshape(TB * Lq, D).astype(bf16)
        out = (jnp.dot(ctx16, wo_ref[...], preferred_element_type=f32)
               + bo).reshape(TB, Lq, D)
        return out, p_sum

    # --- video self-attention + add & norm --------------------------------
    qk = vid + vpos
    sa_out, _ = mha(qk, qk, vid, Lv, Lv, sa_qkv_w, sa_out_w,
                    row(0), row(1), row(2), row(3), vmask,
                    want_weights=False, exact_softmax=False)
    x = _layer_norm(vid + sa_out, row(9), row(10))

    # --- video-to-text cross-attention + add & norm ------------------------
    ca_out, p_sum = mha(x + vpos, txt + tpos, txt, Lv, Lt, ca_qkv_w, ca_out_w,
                        row(4), row(5), row(6), row(7), tmask,
                        want_weights=True, exact_softmax=True)
    x = _layer_norm(x + ca_out, row(11), row(12))

    # --- FFN + add & norm ---------------------------------------------------
    x16 = x.reshape(TB * Lv, D).astype(bf16)
    h1 = jnp.maximum(
        jnp.dot(x16, w1_ref[...], preferred_element_type=f32) + b1, 0.0)
    ff = (jnp.dot(h1.astype(bf16), w2_ref[...], preferred_element_type=f32)
          + row(8)).reshape(TB, Lv, D)
    x = _layer_norm(x + ff, row(13), row(14))

    # --- lane-dense stores (pad last dim to the output block width) --------
    d_pad = out_ref.shape[-1]
    lt_pad = attn_ref.shape[-1]
    if d_pad > D:
        x = jnp.concatenate([x, jnp.zeros((TB, Lv, d_pad - D), f32)], axis=-1)
    out_ref[...] = x

    p_avg = p_sum * f32(1.0 / nhead)   # head-averaged cross-attention map
    if lt_pad > Lt:
        p_avg = jnp.concatenate(
            [p_avg, jnp.zeros((TB, Lv, lt_pad - Lt), f32)], axis=-1)
    attn_ref[...] = p_avg


def _prep_weights(params, d_model):
    """Pack PyTorch-style params for the kernel.

    Matmul weights are pre-transposed (kernel does x @ W) and cast to bf16;
    all (D,)-sized biases / layernorm params are stacked into one (16, D) f32
    slab (few resident arrays -> few DMA descriptors)."""
    D = d_model
    f32 = jnp.float32
    bf16 = jnp.bfloat16

    def stack_qkv(w):   # PyTorch in_proj_weight (3D, D) -> (3, D, D) transposed
        return jnp.stack([w[:D].T, w[D:2 * D].T, w[2 * D:].T]).astype(bf16)

    sa_qkv = stack_qkv(params['sa_in_w'])
    ca_qkv = stack_qkv(params['ca_in_w'])
    sa_wo = params['sa_out_w'].T.astype(bf16)
    ca_wo = params['ca_out_w'].T.astype(bf16)
    w1 = params['w1'].T.astype(bf16)          # (D, F)
    w2 = params['w2'].T.astype(bf16)          # (F, D)

    sb, cb = params['sa_in_b'], params['ca_in_b']
    vec_rows = [
        sb[:D], sb[D:2 * D], sb[2 * D:], params['sa_out_b'],     # rows 0-3
        cb[:D], cb[D:2 * D], cb[2 * D:], params['ca_out_b'],     # rows 4-7
        params['b2'],                                            # row  8
        params['g1'], params['be1'],                             # rows 9-10
        params['g2'], params['be2'],                             # rows 11-12
        params['g3'], params['be3'],                             # rows 13-14
        jnp.zeros((D,), f32),                                    # row 15 (pad)
    ]
    vecs = jnp.stack(vec_rows).astype(f32)                       # (16, D)
    b1 = params['b1'].reshape(1, -1).astype(f32)                 # (1, F)

    return [sa_qkv, sa_wo, ca_qkv, ca_wo, w1, w2, vecs, b1]


def _pick_tb(B, per_batch_bytes, budget_bytes, Lv):
    """Largest divisor of B whose block fits the VMEM budget (M capped ~1024)."""
    best = 1
    for t in range(1, B + 1):
        if B % t:
            continue
        if t * per_batch_bytes <= budget_bytes and t * Lv <= 1024:
            best = t
    return best


def video_centered_encoder_layer(vid_src, txt_src, vid_mask, txt_mask,
                                 vid_pos, txt_pos, params, nhead):
    """PyTorch module convention:
       vid_src/vid_pos: (Lv, B, D); txt_src/txt_pos: (Lt, B, D);
       vid_mask: (B, Lv) bool; txt_mask: (B, Lt) bool (True = padded).
       Returns (vid_out (Lv, B, D), attn (B, Lv, Lt))."""
    Lv, B, D = vid_src.shape
    Lt = txt_src.shape[0]
    Fdim = params['w1'].shape[0]
    bf16 = jnp.bfloat16

    # Batch-first + bf16 streaming (cast fused with the transpose pass).
    vid = jnp.transpose(vid_src, (1, 0, 2)).astype(bf16)
    txt = jnp.transpose(txt_src, (1, 0, 2)).astype(bf16)
    vpos = jnp.transpose(vid_pos, (1, 0, 2)).astype(bf16)
    tpos = jnp.transpose(txt_pos, (1, 0, 2)).astype(bf16)
    vmask = vid_mask.astype(jnp.float32).reshape(B, 1, Lv)
    tmask = txt_mask.astype(jnp.float32).reshape(B, 1, Lt)

    weights = _prep_weights(params, D)
    w_bytes = sum(int(np.prod(w.shape)) * w.dtype.itemsize for w in weights)

    # Lane-dense output widths (multiple of 128); sliced back on the host.
    d_pad = _round_up(D, 128)
    lt_pad = _round_up(Lt, 128)

    # Chip-aware VMEM budget (v5e/v6e 128 MiB, v7x 64 MiB) with headroom.
    try:
        vmem_cap = int(pltpu.get_tpu_info().vmem_capacity_bytes)
    except Exception:
        vmem_cap = 64 << 20   # conservative fallback (v7x-sized)
    budget = vmem_cap - (16 << 20)

    # Generous per-batch-element VMEM estimate: double-buffered bf16 in blocks,
    # double-buffered f32 out blocks, live f32 intermediates (Q/K/V, scores,
    # ctx, h1).
    per_b = (2 * 2 * (2 * Lv * D + 2 * Lt * D)
             + 2 * 4 * (Lv + Lt)
             + 2 * 4 * (Lv * d_pad + Lv * lt_pad)
             + 4 * (6 * Lv * D + 3 * Lt * D + 3 * Lv * max(Lv, Lt) + Lv * Fdim))
    tb = _pick_tb(B, per_b, max(budget - w_bytes, 1 << 20), Lv)
    grid = (B // tb,)

    vmem_limit = int(min(max(w_bytes + tb * per_b + (8 << 20), 32 << 20),
                         budget))

    data_specs = [
        pl.BlockSpec((tb, Lv, D), lambda b: (b, 0, 0)),
        pl.BlockSpec((tb, Lt, D), lambda b: (b, 0, 0)),
        pl.BlockSpec((tb, Lv, D), lambda b: (b, 0, 0)),
        pl.BlockSpec((tb, Lt, D), lambda b: (b, 0, 0)),
        pl.BlockSpec((tb, 1, Lv), lambda b: (b, 0, 0)),
        pl.BlockSpec((tb, 1, Lt), lambda b: (b, 0, 0)),
    ]
    # Whole-array resident weights in VMEM: single-buffered, DMA'd once.
    weight_specs = [pl.BlockSpec(memory_space=pltpu.MemorySpace.VMEM)
                    for _ in weights]

    out_pad, attn_pad = pl.pallas_call(
        functools.partial(encoder_layer_kernel, nhead=nhead),
        out_shape=(
            jax.ShapeDtypeStruct((B, Lv, d_pad), jnp.float32),
            jax.ShapeDtypeStruct((B, Lv, lt_pad), jnp.float32),
        ),
        grid=grid,
        in_specs=data_specs + weight_specs,
        out_specs=(
            pl.BlockSpec((tb, Lv, d_pad), lambda b: (b, 0, 0)),
            pl.BlockSpec((tb, Lv, lt_pad), lambda b: (b, 0, 0)),
        ),
        compiler_params=pltpu.CompilerParams(
            dimension_semantics=("parallel",),   # batch-group steps independent
            vmem_limit_bytes=vmem_limit),
    )(vid, txt, vpos, tpos, vmask, tmask, *weights)

    out = out_pad[:, :, :D] if d_pad > D else out_pad
    attn = attn_pad[:, :, :Lt] if lt_pad > Lt else attn_pad
    return jnp.transpose(out, (1, 0, 2)), attn


# ------------------------- pure-JAX f32 reference ----------------------------
def _mha_ref(q_in, k_in, v_in, in_w, in_b, out_w, out_b, key_mask, nhead):
    D = q_in.shape[-1]
    hd = D // nhead
    wq, wk, wv = in_w[:D], in_w[D:2 * D], in_w[2 * D:]
    bq, bk, bv = in_b[:D], in_b[D:2 * D], in_b[2 * D:]
    Q = q_in @ wq.T + bq
    K = k_in @ wk.T + bk
    V = v_in @ wv.T + bv
    Lq, Lk = Q.shape[0], K.shape[0]
    Qh = Q.reshape(Lq, nhead, hd).transpose(1, 0, 2)
    Kh = K.reshape(Lk, nhead, hd).transpose(1, 0, 2)
    Vh = V.reshape(Lk, nhead, hd).transpose(1, 0, 2)
    s = jnp.einsum('hqd,hkd->hqk', Qh, Kh) / math.sqrt(hd)
    s = s + key_mask.astype(jnp.float32)[None, None, :] * (-1e30)
    p = jax.nn.softmax(s, axis=-1)
    ctx = jnp.einsum('hqk,hkd->hqd', p, Vh).transpose(1, 0, 2).reshape(Lq, D)
    return ctx @ out_w.T + out_b, p.mean(0)


def reference_forward(vid, txt, vmask, tmask, vpos, tpos, params, nhead):
    def one(v, t, vm, tm, vp, tp):
        qk = v + vp
        sa, _ = _mha_ref(qk, qk, v, params['sa_in_w'], params['sa_in_b'],
                         params['sa_out_w'], params['sa_out_b'], vm, nhead)
        x = _layer_norm(v + sa, params['g1'], params['be1'])
        ca, w = _mha_ref(x + vp, t + tp, t, params['ca_in_w'],
                         params['ca_in_b'], params['ca_out_w'],
                         params['ca_out_b'], tm, nhead)
        x = _layer_norm(x + ca, params['g2'], params['be2'])
        h1 = jnp.maximum(x @ params['w1'].T + params['b1'], 0.0)
        x = _layer_norm(x + (h1 @ params['w2'].T + params['b2']),
                        params['g3'], params['be3'])
        return x, w
    return jax.vmap(one)(vid, txt, vmask, tmask, vpos, tpos)


# ------------------------------- main ----------------------------------------
if __name__ == "__main__":
    B, Lv, Lt, D, H, Fdim = 2, 8, 8, 32, 4, 64

    key = jax.random.PRNGKey(0)
    ks = jax.random.split(key, 16)

    params = {
        'sa_in_w': 0.05 * jax.random.normal(ks[0], (3 * D, D), jnp.float32),
        'sa_in_b': 0.05 * jax.random.normal(ks[1], (3 * D,), jnp.float32),
        'sa_out_w': 0.05 * jax.random.normal(ks[2], (D, D), jnp.float32),
        'sa_out_b': 0.05 * jax.random.normal(ks[3], (D,), jnp.float32),
        'ca_in_w': 0.05 * jax.random.normal(ks[4], (3 * D, D), jnp.float32),
        'ca_in_b': 0.05 * jax.random.normal(ks[5], (3 * D,), jnp.float32),
        'ca_out_w': 0.05 * jax.random.normal(ks[6], (D, D), jnp.float32),
        'ca_out_b': 0.05 * jax.random.normal(ks[7], (D,), jnp.float32),
        'w1': 0.05 * jax.random.normal(ks[8], (Fdim, D), jnp.float32),
        'b1': 0.05 * jax.random.normal(ks[9], (Fdim,), jnp.float32),
        'w2': 0.05 * jax.random.normal(ks[10], (D, Fdim), jnp.float32),
        'b2': 0.05 * jax.random.normal(ks[11], (D,), jnp.float32),
        'g1': jnp.ones((D,), jnp.float32), 'be1': jnp.zeros((D,), jnp.float32),
        'g2': jnp.ones((D,), jnp.float32), 'be2': jnp.zeros((D,), jnp.float32),
        'g3': jnp.ones((D,), jnp.float32), 'be3': jnp.zeros((D,), jnp.float32),
    }

    # PyTorch-convention inputs: seq-first sequences, (B, L) boolean masks.
    vid_src = jax.random.normal(ks[12], (Lv, B, D), jnp.float32)
    txt_src = jax.random.normal(ks[13], (Lt, B, D), jnp.float32)
    vid_pos = jax.random.normal(ks[14], (Lv, B, D), jnp.float32)
    txt_pos = jax.random.normal(ks[15], (Lt, B, D), jnp.float32)
    vid_mask = jnp.zeros((B, Lv), jnp.bool_).at[1, Lv - 2:].set(True)
    txt_mask = jnp.zeros((B, Lt), jnp.bool_).at[1, Lt - 3:].set(True)

    out, attn = video_centered_encoder_layer(
        vid_src, txt_src, vid_mask, txt_mask, vid_pos, txt_pos, params, H)
    out = jax.block_until_ready(out)
    attn = jax.block_until_ready(attn)

    # Reference check (pure-JAX f32, batch-first layout).  Tolerance covers the
    # kernel's bf16 activation streaming + bf16 MXU matmuls (f32 accumulation,
    # f32 softmax / residual / layernorm).
    vid_b = jnp.transpose(vid_src, (1, 0, 2))
    txt_b = jnp.transpose(txt_src, (1, 0, 2))
    vp_b = jnp.transpose(vid_pos, (1, 0, 2))
    tp_b = jnp.transpose(txt_pos, (1, 0, 2))
    ref_out, ref_attn = reference_forward(
        vid_b, txt_b, vid_mask, txt_mask, vp_b, tp_b, params, H)
    ref_out = jnp.transpose(ref_out, (1, 0, 2))

    np.testing.assert_allclose(np.asarray(out), np.asarray(ref_out),
                               rtol=3e-2, atol=3e-2)
    np.testing.assert_allclose(np.asarray(attn), np.asarray(ref_attn),
                               rtol=3e-2, atol=3e-2)

    print("KERNEL_OK")
</pallas_src>

<mosaic_0001>
module attributes {stable_mosaic.version = 11 : i64} {
  func.func @encoder_layer_kernel(%arg0: i32, %arg1: memref<2x8x32xbf16, #tpu.memory_space<vmem>>, %arg2: memref<2x8x32xbf16, #tpu.memory_space<vmem>>, %arg3: memref<2x8x32xbf16, #tpu.memory_space<vmem>>, %arg4: memref<2x8x32xbf16, #tpu.memory_space<vmem>>, %arg5: memref<2x1x8xf32, #tpu.memory_space<vmem>>, %arg6: memref<2x1x8xf32, #tpu.memory_space<vmem>>, %arg7: memref<3x32x32xbf16, #tpu.memory_space<vmem>>, %arg8: memref<32x32xbf16, #tpu.memory_space<vmem>>, %arg9: memref<3x32x32xbf16, #tpu.memory_space<vmem>>, %arg10: memref<32x32xbf16, #tpu.memory_space<vmem>>, %arg11: memref<32x64xbf16, #tpu.memory_space<vmem>>, %arg12: memref<64x32xbf16, #tpu.memory_space<vmem>>, %arg13: memref<16x32xf32, #tpu.memory_space<vmem>>, %arg14: memref<1x64xf32, #tpu.memory_space<vmem>>, %arg15: memref<2x8x128xf32, #tpu.memory_space<vmem>>, %arg16: memref<2x8x128xf32, #tpu.memory_space<vmem>>) attributes {dimension_semantics = [#tpu.dimension_semantics<parallel>], iteration_bounds = array<i64: 1>, scalar_prefetch = 0 : i64, scratch_operands = 0 : i64, tpu.core_type = #tpu.core_type<tc>, window_params = [{transform_indices = @transform_0, window_bounds = array<i64: 2, 8, 32>}, {transform_indices = @transform_1, window_bounds = array<i64: 2, 8, 32>}, {transform_indices = @transform_2, window_bounds = array<i64: 2, 8, 32>}, {transform_indices = @transform_3, window_bounds = array<i64: 2, 8, 32>}, {transform_indices = @transform_4, window_bounds = array<i64: 2, 1, 8>}, {transform_indices = @transform_5, window_bounds = array<i64: 2, 1, 8>}, {pipeline_mode = #tpu.pipeline_mode<synchronous>, transform_indices = @transform_6, window_bounds = array<i64: 3, 32, 32>}, {pipeline_mode = #tpu.pipeline_mode<synchronous>, transform_indices = @transform_7, window_bounds = array<i64: 32, 32>}, {pipeline_mode = #tpu.pipeline_mode<synchronous>, transform_indices = @transform_8, window_bounds = array<i64: 3, 32, 32>}, {pipeline_mode = #tpu.pipeline_mode<synchronous>, transform_indices = @transform_9, window_bounds = array<i64: 32, 32>}, {pipeline_mode = #tpu.pipeline_mode<synchronous>, transform_indices = @transform_10, window_bounds = array<i64: 32, 64>}, {pipeline_mode = #tpu.pipeline_mode<synchronous>, transform_indices = @transform_11, window_bounds = array<i64: 64, 32>}, {pipeline_mode = #tpu.pipeline_mode<synchronous>, transform_indices = @transform_12, window_bounds = array<i64: 16, 32>}, {pipeline_mode = #tpu.pipeline_mode<synchronous>, transform_indices = @transform_13, window_bounds = array<i64: 1, 64>}, {transform_indices = @transform_14, window_bounds = array<i64: 2, 8, 128>}, {transform_indices = @transform_15, window_bounds = array<i64: 2, 8, 128>}]} {
    %c0 = arith.constant 0 : index
    %c0_0 = arith.constant 0 : index
    %c0_1 = arith.constant 0 : index
    %0 = vector.load %arg1[%c0, %c0_0, %c0_1] : memref<2x8x32xbf16, #tpu.memory_space<vmem>>, vector<2x8x32xbf16>
    %1 = arith.extf %0 : vector<2x8x32xbf16> to vector<2x8x32xf32>
    %c0_2 = arith.constant 0 : index
    %c0_3 = arith.constant 0 : index
    %c0_4 = arith.constant 0 : index
    %2 = vector.load %arg2[%c0_2, %c0_3, %c0_4] : memref<2x8x32xbf16, #tpu.memory_space<vmem>>, vector<2x8x32xbf16>
    %3 = arith.extf %2 : vector<2x8x32xbf16> to vector<2x8x32xf32>
    %c0_5 = arith.constant 0 : index
    %c0_6 = arith.constant 0 : index
    %c0_7 = arith.constant 0 : index
    %4 = vector.load %arg3[%c0_5, %c0_6, %c0_7] : memref<2x8x32xbf16, #tpu.memory_space<vmem>>, vector<2x8x32xbf16>
    %5 = arith.extf %4 : vector<2x8x32xbf16> to vector<2x8x32xf32>
    %c0_8 = arith.constant 0 : index
    %c0_9 = arith.constant 0 : index
    %c0_10 = arith.constant 0 : index
    %6 = vector.load %arg4[%c0_8, %c0_9, %c0_10] : memref<2x8x32xbf16, #tpu.memory_space<vmem>>, vector<2x8x32xbf16>
    %7 = arith.extf %6 : vector<2x8x32xbf16> to vector<2x8x32xf32>
    %c0_11 = arith.constant 0 : index
    %c0_12 = arith.constant 0 : index
    %c0_13 = arith.constant 0 : index
    %8 = vector.load %arg5[%c0_11, %c0_12, %c0_13] : memref<2x1x8xf32, #tpu.memory_space<vmem>>, vector<2x1x8xf32>
    %c0_14 = arith.constant 0 : index
    %c0_15 = arith.constant 0 : index
    %c0_16 = arith.constant 0 : index
    %9 = vector.load %arg6[%c0_14, %c0_15, %c0_16] : memref<2x1x8xf32, #tpu.memory_space<vmem>>, vector<2x1x8xf32>
    %c0_17 = arith.constant 0 : index
    %c0_18 = arith.constant 0 : index
    %10 = vector.load %arg13[%c0_17, %c0_18] : memref<16x32xf32, #tpu.memory_space<vmem>>, vector<16x32xf32>
    %c0_19 = arith.constant 0 : index
    %c0_20 = arith.constant 0 : index
    %11 = vector.load %arg14[%c0_19, %c0_20] : memref<1x64xf32, #tpu.memory_space<vmem>>, vector<1x64xf32>
    %12 = arith.addf %1, %5 : vector<2x8x32xf32>
    %13 = vector.extract_strided_slice %10 {offsets = [0, 0], sizes = [1, 32], strides = [1, 1]} : vector<16x32xf32> to vector<1x32xf32>
    %14 = vector.extract_strided_slice %10 {offsets = [1, 0], sizes = [1, 32], strides = [1, 1]} : vector<16x32xf32> to vector<1x32xf32>
    %15 = vector.extract_strided_slice %10 {offsets = [2, 0], sizes = [1, 32], strides = [1, 1]} : vector<16x32xf32> to vector<1x32xf32>
    %16 = vector.extract_strided_slice %10 {offsets = [3, 0], sizes = [1, 32], strides = [1, 1]} : vector<16x32xf32> to vector<1x32xf32>
    %17 = vector.shape_cast %12 : vector<2x8x32xf32> to vector<16x32xf32>
    %18 = arith.truncf %17 : vector<16x32xf32> to vector<16x32xbf16>
    %19 = vector.shape_cast %1 : vector<2x8x32xf32> to vector<16x32xf32>
    %20 = arith.truncf %19 : vector<16x32xf32> to vector<16x32xbf16>
    %c0_21 = arith.constant 0 : index
    %c0_22 = arith.constant 0 : index
    %c0_23 = arith.constant 0 : index
    %21 = vector.load %arg7[%c0_21, %c0_22, %c0_23] : memref<3x32x32xbf16, #tpu.memory_space<vmem>>, vector<1x32x32xbf16>
    %22 = vector.shape_cast %21 : vector<1x32x32xbf16> to vector<32x32xbf16>
    %cst = arith.constant dense<0.000000e+00> : vector<16x32xf32>
    %23 = tpu.matmul %18, %22, %cst {dimension_numbers = #tpu.dot_dimension_numbers<[1], [0], [0], [1], [0, 0, 1, 1], [], []>} : vector<16x32xbf16>, vector<32x32xbf16>, vector<16x32xf32> -> vector<16x32xf32>
    %24 = vector.broadcast %13 : vector<1x32xf32> to vector<16x32xf32>
    %25 = arith.addf %23, %24 : vector<16x32xf32>
    %26 = arith.truncf %25 : vector<16x32xf32> to vector<16x32xbf16>
    %27 = vector.shape_cast %26 : vector<16x32xbf16> to vector<2x8x32xbf16>
    %c1 = arith.constant 1 : index
    %c0_24 = arith.constant 0 : index
    %c0_25 = arith.constant 0 : index
    %28 = vector.load %arg7[%c1, %c0_24, %c0_25] : memref<3x32x32xbf16, #tpu.memory_space<vmem>>, vector<1x32x32xbf16>
    %29 = vector.shape_cast %28 : vector<1x32x32xbf16> to vector<32x32xbf16>
    %cst_26 = arith.constant dense<0.000000e+00> : vector<16x32xf32>
    %30 = tpu.matmul %18, %29, %cst_26 {dimension_numbers = #tpu.dot_dimension_numbers<[1], [0], [0], [1], [0, 0, 1, 1], [], []>} : vector<16x32xbf16>, vector<32x32xbf16>, vector<16x32xf32> -> vector<16x32xf32>
    %31 = vector.broadcast %14 : vector<1x32xf32> to vector<16x32xf32>
    %32 = arith.addf %30, %31 : vector<16x32xf32>
    %33 = arith.truncf %32 : vector<16x32xf32> to vector<16x32xbf16>
    %34 = vector.shape_cast %33 : vector<16x32xbf16> to vector<2x8x32xbf16>
    %c2 = arith.constant 2 : index
    %c0_27 = arith.constant 0 : index
    %c0_28 = arith.constant 0 : index
    %35 = vector.load %arg7[%c2, %c0_27, %c0_28] : memref<3x32x32xbf16, #tpu.memory_space<vmem>>, vector<1x32x32xbf16>
    %36 = vector.shape_cast %35 : vector<1x32x32xbf16> to vector<32x32xbf16>
    %cst_29 = arith.constant dense<0.000000e+00> : vector<16x32xf32>
    %37 = tpu.matmul %20, %36, %cst_29 {dimension_numbers = #tpu.dot_dimension_numbers<[1], [0], [0], [1], [0, 0, 1, 1], [], []>} : vector<16x32xbf16>, vector<32x32xbf16>, vector<16x32xf32> -> vector<16x32xf32>
    %38 = vector.broadcast %15 : vector<1x32xf32> to vector<16x32xf32>
    %39 = arith.addf %37, %38 : vector<16x32xf32>
    %40 = arith.truncf %39 : vector<16x32xf32> to vector<16x32xbf16>
    %41 = vector.shape_cast %40 : vector<16x32xbf16> to vector<2x8x32xbf16>
    %cst_30 = arith.constant -1.000000e+30 : f32
    %42 = vector.broadcast %cst_30 : f32 to vector<2x1x8xf32>
    %43 = arith.mulf %8, %42 : vector<2x1x8xf32>
    %44 = vector.extract_strided_slice %27 {offsets = [0, 0, 0], sizes = [2, 8, 8], strides = [1, 1, 1]} : vector<2x8x32xbf16> to vector<2x8x8xbf16>
    %45 = vector.extract_strided_slice %34 {offsets = [0, 0, 0], sizes = [2, 8, 8], strides = [1, 1, 1]} : vector<2x8x32xbf16> to vector<2x8x8xbf16>
    "tpu.trace_start"() <{level = 10 : i32, message = "bqd,bkd->bqk"}> : () -> ()
    %cst_31 = arith.constant dense<0.000000e+00> : vector<2x8x8xf32>
    %46 = tpu.matmul %44, %45, %cst_31 {dimension_numbers = #tpu.dot_dimension_numbers<[2], [2], [1], [1], [0, 0, 0, 1, 1, 1], [0], [0]>} : vector<2x8x8xbf16>, vector<2x8x8xbf16>, vector<2x8x8xf32> -> vector<2x8x8xf32>
    "tpu.trace_stop"() : () -> ()
    %cst_32 = arith.constant 0.353553385 : f32
    %47 = vector.broadcast %cst_32 : f32 to vector<2x8x8xf32>
    %48 = arith.mulf %46, %47 : vector<2x8x8xf32>
    %49 = vector.broadcast %43 : vector<2x1x8xf32> to vector<2x8x8xf32>
    %50 = arith.addf %48, %49 : vector<2x8x8xf32>
    %cst_33 = arith.constant dense<0xFF800000> : vector<2x8xf32>
    %51 = vector.multi_reduction <maximumf>, %50, %cst_33 [2] : vector<2x8x8xf32> to vector<2x8xf32>
    %52 = vector.shape_cast %51 : vector<2x8xf32> to vector<2x8x1xf32>
    %53 = vector.broadcast %52 : vector<2x8x1xf32> to vector<2x8x8xf32>
    %54 = arith.subf %50, %53 : vector<2x8x8xf32>
    %55 = math.exp %54 : vector<2x8x8xf32>
    %cst_34 = arith.constant dense<0.000000e+00> : vector<2x8xf32>
    %56 = vector.multi_reduction <add>, %55, %cst_34 [2] : vector<2x8x8xf32> to vector<2x8xf32>
    %57 = vector.shape_cast %56 : vector<2x8xf32> to vector<2x8x1xf32>
    %58 = tpu.reciprocal %57 {approx = true} : vector<2x8x1xf32> -> vector<2x8x1xf32>
    %59 = vector.broadcast %58 : vector<2x8x1xf32> to vector<2x8x8xf32>
    %60 = arith.mulf %55, %59 : vector<2x8x8xf32>
    %61 = arith.truncf %60 : vector<2x8x8xf32> to vector<2x8x8xbf16>
    %62 = vector.extract_strided_slice %41 {offsets = [0, 0, 0], sizes = [2, 8, 8], strides = [1, 1, 1]} : vector<2x8x32xbf16> to vector<2x8x8xbf16>
    "tpu.trace_start"() <{level = 10 : i32, message = "bqk,bkd->bqd"}> : () -> ()
    %cst_35 = arith.constant dense<0.000000e+00> : vector<2x8x8xf32>
    %63 = tpu.matmul %61, %62, %cst_35 {dimension_numbers = #tpu.dot_dimension_numbers<[2], [1], [1], [2], [0, 0, 0, 1, 1, 2], [0], [0]>} : vector<2x8x8xbf16>, vector<2x8x8xbf16>, vector<2x8x8xf32> -> vector<2x8x8xf32>
    "tpu.trace_stop"() : () -> ()
    %64 = vector.extract_strided_slice %27 {offsets = [0, 0, 8], sizes = [2, 8, 8], strides = [1, 1, 1]} : vector<2x8x32xbf16> to vector<2x8x8xbf16>
    %65 = vector.extract_strided_slice %34 {offsets = [0, 0, 8], sizes = [2, 8, 8], strides = [1, 1, 1]} : vector<2x8x32xbf16> to vector<2x8x8xbf16>
    "tpu.trace_start"() <{level = 10 : i32, message = "bqd,bkd->bqk"}> : () -> ()
    %cst_36 = arith.constant dense<0.000000e+00> : vector<2x8x8xf32>
    %66 = tpu.matmul %64, %65, %cst_36 {dimension_numbers = #tpu.dot_dimension_numbers<[2], [2], [1], [1], [0, 0, 0, 1, 1, 1], [0], [0]>} : vector<2x8x8xbf16>, vector<2x8x8xbf16>, vector<2x8x8xf32> -> vector<2x8x8xf32>
    "tpu.trace_stop"() : () -> ()
    %cst_37 = arith.constant 0.353553385 : f32
    %67 = vector.broadcast %cst_37 : f32 to vector<2x8x8xf32>
    %68 = arith.mulf %66, %67 : vector<2x8x8xf32>
    %69 = vector.broadcast %43 : vector<2x1x8xf32> to vector<2x8x8xf32>
    %70 = arith.addf %68, %69 : vector<2x8x8xf32>
    %cst_38 = arith.constant dense<0xFF800000> : vector<2x8xf32>
    %71 = vector.multi_reduction <maximumf>, %70, %cst_38 [2] : vector<2x8x8xf32> to vector<2x8xf32>
    %72 = vector.shape_cast %71 : vector<2x8xf32> to vector<2x8x1xf32>
    %73 = vector.broadcast %72 : vector<2x8x1xf32> to vector<2x8x8xf32>
    %74 = arith.subf %70, %73 : vector<2x8x8xf32>
    %75 = math.exp %74 : vector<2x8x8xf32>
    %cst_39 = arith.constant dense<0.000000e+00> : vector<2x8xf32>
    %76 = vector.multi_reduction <add>, %75, %cst_39 [2] : vector<2x8x8xf32> to vector<2x8xf32>
    %77 = vector.shape_cast %76 : vector<2x8xf32> to vector<2x8x1xf32>
    %78 = tpu.reciprocal %77 {approx = true} : vector<2x8x1xf32> -> vector<2x8x1xf32>
    %79 = vector.broadcast %78 : vector<2x8x1xf32> to vector<2x8x8xf32>
    %80 = arith.mulf %75, %79 : vector<2x8x8xf32>
    %81 = arith.truncf %80 : vector<2x8x8xf32> to vector<2x8x8xbf16>
    %82 = vector.extract_strided_slice %41 {offsets = [0, 0, 8], sizes = [2, 8, 8], strides = [1, 1, 1]} : vector<2x8x32xbf16> to vector<2x8x8xbf16>
    "tpu.trace_start"() <{level = 10 : i32, message = "bqk,bkd->bqd"}> : () -> ()
    %cst_40 = arith.constant dense<0.000000e+00> : vector<2x8x8xf32>
    %83 = tpu.matmul %81, %82, %cst_40 {dimension_numbers = #tpu.dot_dimension_numbers<[2], [1], [1], [2], [0, 0, 0, 1, 1, 2], [0], [0]>} : vector<2x8x8xbf16>, vector<2x8x8xbf16>, vector<2x8x8xf32> -> vector<2x8x8xf32>
    "tpu.trace_stop"() : () -> ()
    %84 = vector.extract_strided_slice %27 {offsets = [0, 0, 16], sizes = [2, 8, 8], strides = [1, 1, 1]} : vector<2x8x32xbf16> to vector<2x8x8xbf16>
    %85 = vector.extract_strided_slice %34 {offsets = [0, 0, 16], sizes = [2, 8, 8], strides = [1, 1, 1]} : vector<2x8x32xbf16> to vector<2x8x8xbf16>
    "tpu.trace_start"() <{level = 10 : i32, message = "bqd,bkd->bqk"}> : () -> ()
    %cst_41 = arith.constant dense<0.000000e+00> : vector<2x8x8xf32>
    %86 = tpu.matmul %84, %85, %cst_41 {dimension_numbers = #tpu.dot_dimension_numbers<[2], [2], [1], [1], [0, 0, 0, 1, 1, 1], [0], [0]>} : vector<2x8x8xbf16>, vector<2x8x8xbf16>, vector<2x8x8xf32> -> vector<2x8x8xf32>
    "tpu.trace_stop"() : () -> ()
    %cst_42 = arith.constant 0.353553385 : f32
    %87 = vector.broadcast %cst_42 : f32 to vector<2x8x8xf32>
    %88 = arith.mulf %86, %87 : vector<2x8x8xf32>
    %89 = vector.broadcast %43 : vector<2x1x8xf32> to vector<2x8x8xf32>
    %90 = arith.addf %88, %89 : vector<2x8x8xf32>
    %cst_43 = arith.constant dense<0xFF800000> : vector<2x8xf32>
    %91 = vector.multi_reduction <maximumf>, %90, %cst_43 [2] : vector<2x8x8xf32> to vector<2x8xf32>
    %92 = vector.shape_cast %91 : vector<2x8xf32> to vector<2x8x1xf32>
    %93 = vector.broadcast %92 : vector<2x8x1xf32> to vector<2x8x8xf32>
    %94 = arith.subf %90, %93 : vector<2x8x8xf32>
    %95 = math.exp %94 : vector<2x8x8xf32>
    %cst_44 = arith.constant dense<0.000000e+00> : vector<2x8xf32>
    %96 = vector.multi_reduction <add>, %95, %cst_44 [2] : vector<2x8x8xf32> to vector<2x8xf32>
    %97 = vector.shape_cast %96 : vector<2x8xf32> to vector<2x8x1xf32>
    %98 = tpu.reciprocal %97 {approx = true} : vector<2x8x1xf32> -> vector<2x8x1xf32>
    %99 = vector.broadcast %98 : vector<2x8x1xf32> to vector<2x8x8xf32>
    %100 = arith.mulf %95, %99 : vector<2x8x8xf32>
    %101 = arith.truncf %100 : vector<2x8x8xf32> to vector<2x8x8xbf16>
    %102 = vector.extract_strided_slice %41 {offsets = [0, 0, 16], sizes = [2, 8, 8], strides = [1, 1, 1]} : vector<2x8x32xbf16> to vector<2x8x8xbf16>
    "tpu.trace_start"() <{level = 10 : i32, message = "bqk,bkd->bqd"}> : () -> ()
    %cst_45 = arith.constant dense<0.000000e+00> : vector<2x8x8xf32>
    %103 = tpu.matmul %101, %102, %cst_45 {dimension_numbers = #tpu.dot_dimension_numbers<[2], [1], [1], [2], [0, 0, 0, 1, 1, 2], [0], [0]>} : vector<2x8x8xbf16>, vector<2x8x8xbf16>, vector<2x8x8xf32> -> vector<2x8x8xf32>
    "tpu.trace_stop"() : () -> ()
    %104 = vector.extract_strided_slice %27 {offsets = [0, 0, 24], sizes = [2, 8, 8], strides = [1, 1, 1]} : vector<2x8x32xbf16> to vector<2x8x8xbf16>
    %105 = vector.extract_strided_slice %34 {offsets = [0, 0, 24], sizes = [2, 8, 8], strides = [1, 1, 1]} : vector<2x8x32xbf16> to vector<2x8x8xbf16>
    "tpu.trace_start"() <{level = 10 : i32, message = "bqd,bkd->bqk"}> : () -> ()
    %cst_46 = arith.constant dense<0.000000e+00> : vector<2x8x8xf32>
    %106 = tpu.matmul %104, %105, %cst_46 {dimension_numbers = #tpu.dot_dimension_numbers<[2], [2], [1], [1], [0, 0, 0, 1, 1, 1], [0], [0]>} : vector<2x8x8xbf16>, vector<2x8x8xbf16>, vector<2x8x8xf32> -> vector<2x8x8xf32>
    "tpu.trace_stop"() : () -> ()
    %cst_47 = arith.constant 0.353553385 : f32
    %107 = vector.broadcast %cst_47 : f32 to vector<2x8x8xf32>
    %108 = arith.mulf %106, %107 : vector<2x8x8xf32>
    %109 = vector.broadcast %43 : vector<2x1x8xf32> to vector<2x8x8xf32>
    %110 = arith.addf %108, %109 : vector<2x8x8xf32>
    %cst_48 = arith.constant dense<0xFF800000> : vector<2x8xf32>
    %111 = vector.multi_reduction <maximumf>, %110, %cst_48 [2] : vector<2x8x8xf32> to vector<2x8xf32>
    %112 = vector.shape_cast %111 : vector<2x8xf32> to vector<2x8x1xf32>
    %113 = vector.broadcast %112 : vector<2x8x1xf32> to vector<2x8x8xf32>
    %114 = arith.subf %110, %113 : vector<2x8x8xf32>
    %115 = math.exp %114 : vector<2x8x8xf32>
    %cst_49 = arith.constant dense<0.000000e+00> : vector<2x8xf32>
    %116 = vector.multi_reduction <add>, %115, %cst_49 [2] : vector<2x8x8xf32> to vector<2x8xf32>
    %117 = vector.shape_cast %116 : vector<2x8xf32> to vector<2x8x1xf32>
    %118 = tpu.reciprocal %117 {approx = true} : vector<2x8x1xf32> -> vector<2x8x1xf32>
    %119 = vector.broadcast %118 : vector<2x8x1xf32> to vector<2x8x8xf32>
    %120 = arith.mulf %115, %119 : vector<2x8x8xf32>
    %121 = arith.truncf %120 : vector<2x8x8xf32> to vector<2x8x8xbf16>
    %122 = vector.extract_strided_slice %41 {offsets = [0, 0, 24], sizes = [2, 8, 8], strides = [1, 1, 1]} : vector<2x8x32xbf16> to vector<2x8x8xbf16>
    "tpu.trace_start"() <{level = 10 : i32, message = "bqk,bkd->bqd"}> : () -> ()
    %cst_50 = arith.constant dense<0.000000e+00> : vector<2x8x8xf32>
    %123 = tpu.matmul %121, %122, %cst_50 {dimension_numbers = #tpu.dot_dimension_numbers<[2], [1], [1], [2], [0, 0, 0, 1, 1, 2], [0], [0]>} : vector<2x8x8xbf16>, vector<2x8x8xbf16>, vector<2x8x8xf32> -> vector<2x8x8xf32>
    "tpu.trace_stop"() : () -> ()
    %124 = tpu.concatenate %63, %83, %103, %123 in 2 : vector<2x8x8xf32>, vector<2x8x8xf32>, vector<2x8x8xf32>, vector<2x8x8xf32> -> vector<2x8x32xf32>
    %125 = vector.shape_cast %124 : vector<2x8x32xf32> to vector<16x32xf32>
    %126 = arith.truncf %125 : vector<16x32xf32> to vector<16x32xbf16>
    %c0_51 = arith.constant 0 : index
    %c0_52 = arith.constant 0 : index
    %127 = vector.load %arg8[%c0_51, %c0_52] : memref<32x32xbf16, #tpu.memory_space<vmem>>, vector<32x32xbf16>
    %cst_53 = arith.constant dense<0.000000e+00> : vector<16x32xf32>
    %128 = tpu.matmul %126, %127, %cst_53 {dimension_numbers = #tpu.dot_dimension_numbers<[1], [0], [0], [1], [0, 0, 1, 1], [], []>} : vector<16x32xbf16>, vector<32x32xbf16>, vector<16x32xf32> -> vector<16x32xf32>
    %129 = vector.broadcast %16 : vector<1x32xf32> to vector<16x32xf32>
    %130 = arith.addf %128, %129 : vector<16x32xf32>
    %131 = vector.shape_cast %130 : vector<16x32xf32> to vector<2x8x32xf32>
    %132 = arith.addf %1, %131 : vector<2x8x32xf32>
    %133 = vector.extract_strided_slice %10 {offsets = [9, 0], sizes = [1, 32], strides = [1, 1]} : vector<16x32xf32> to vector<1x32xf32>
    %134 = vector.extract_strided_slice %10 {offsets = [10, 0], sizes = [1, 32], strides = [1, 1]} : vector<16x32xf32> to vector<1x32xf32>
    %cst_54 = arith.constant dense<0.000000e+00> : vector<2x8xf32>
    %135 = vector.multi_reduction <add>, %132, %cst_54 [2] : vector<2x8x32xf32> to vector<2x8xf32>
    %136 = vector.shape_cast %135 : vector<2x8xf32> to vector<2x8x1xf32>
    %cst_55 = arith.constant 3.200000e+01 : f32
    %137 = vector.broadcast %cst_55 : f32 to vector<2x8x1xf32>
    %138 = arith.divf %136, %137 : vector<2x8x1xf32>
    %139 = vector.broadcast %138 : vector<2x8x1xf32> to vector<2x8x32xf32>
    %140 = arith.subf %132, %139 : vector<2x8x32xf32>
    %141 = arith.mulf %140, %140 : vector<2x8x32xf32>
    %cst_56 = arith.constant dense<0.000000e+00> : vector<2x8xf32>
    %142 = vector.multi_reduction <add>, %141, %cst_56 [2] : vector<2x8x32xf32> to vector<2x8xf32>
    %143 = vector.shape_cast %142 : vector<2x8xf32> to vector<2x8x1xf32>
    %cst_57 = arith.constant 3.200000e+01 : f32
    %144 = vector.broadcast %cst_57 : f32 to vector<2x8x1xf32>
    %145 = arith.divf %143, %144 : vector<2x8x1xf32>
    %146 = vector.broadcast %138 : vector<2x8x1xf32> to vector<2x8x32xf32>
    %147 = arith.subf %132, %146 : vector<2x8x32xf32>
    %cst_58 = arith.constant 9.99999974E-6 : f32
    %148 = vector.broadcast %cst_58 : f32 to vector<2x8x1xf32>
    %149 = arith.addf %145, %148 : vector<2x8x1xf32>
    %150 = math.rsqrt %149 : vector<2x8x1xf32>
    %151 = vector.broadcast %150 : vector<2x8x1xf32> to vector<2x8x32xf32>
    %152 = arith.mulf %147, %151 : vector<2x8x32xf32>
    %153 = vector.shape_cast %133 : vector<1x32xf32> to vector<1x1x32xf32>
    %154 = vector.broadcast %153 : vector<1x1x32xf32> to vector<2x8x32xf32>
    %155 = arith.mulf %152, %154 : vector<2x8x32xf32>
    %156 = vector.shape_cast %134 : vector<1x32xf32> to vector<1x1x32xf32>
    %157 = vector.broadcast %156 : vector<1x1x32xf32> to vector<2x8x32xf32>
    %158 = arith.addf %155, %157 : vector<2x8x32xf32>
    %159 = arith.addf %158, %5 : vector<2x8x32xf32>
    %160 = arith.addf %3, %7 : vector<2x8x32xf32>
    %161 = vector.extract_strided_slice %10 {offsets = [4, 0], sizes = [1, 32], strides = [1, 1]} : vector<16x32xf32> to vector<1x32xf32>
    %162 = vector.extract_strided_slice %10 {offsets = [5, 0], sizes = [1, 32], strides = [1, 1]} : vector<16x32xf32> to vector<1x32xf32>
    %163 = vector.extract_strided_slice %10 {offsets = [6, 0], sizes = [1, 32], strides = [1, 1]} : vector<16x32xf32> to vector<1x32xf32>
    %164 = vector.extract_strided_slice %10 {offsets = [7, 0], sizes = [1, 32], strides = [1, 1]} : vector<16x32xf32> to vector<1x32xf32>
    %165 = vector.shape_cast %159 : vector<2x8x32xf32> to vector<16x32xf32>
    %166 = arith.truncf %165 : vector<16x32xf32> to vector<16x32xbf16>
    %167 = vector.shape_cast %160 : vector<2x8x32xf32> to vector<16x32xf32>
    %168 = arith.truncf %167 : vector<16x32xf32> to vector<16x32xbf16>
    %169 = vector.shape_cast %3 : vector<2x8x32xf32> to vector<16x32xf32>
    %170 = arith.truncf %169 : vector<16x32xf32> to vector<16x32xbf16>
    %c0_59 = arith.constant 0 : index
    %c0_60 = arith.constant 0 : index
    %c0_61 = arith.constant 0 : index
    %171 = vector.load %arg9[%c0_59, %c0_60, %c0_61] : memref<3x32x32xbf16, #tpu.memory_space<vmem>>, vector<1x32x32xbf16>
    %172 = vector.shape_cast %171 : vector<1x32x32xbf16> to vector<32x32xbf16>
    %cst_62 = arith.constant dense<0.000000e+00> : vector<16x32xf32>
    %173 = tpu.matmul %166, %172, %cst_62 {dimension_numbers = #tpu.dot_dimension_numbers<[1], [0], [0], [1], [0, 0, 1, 1], [], []>} : vector<16x32xbf16>, vector<32x32xbf16>, vector<16x32xf32> -> vector<16x32xf32>
    %174 = vector.broadcast %161 : vector<1x32xf32> to vector<16x32xf32>
    %175 = arith.addf %173, %174 : vector<16x32xf32>
    %176 = arith.truncf %175 : vector<16x32xf32> to vector<16x32xbf16>
    %177 = vector.shape_cast %176 : vector<16x32xbf16> to vector<2x8x32xbf16>
    %c1_63 = arith.constant 1 : index
    %c0_64 = arith.constant 0 : index
    %c0_65 = arith.constant 0 : index
    %178 = vector.load %arg9[%c1_63, %c0_64, %c0_65] : memref<3x32x32xbf16, #tpu.memory_space<vmem>>, vector<1x32x32xbf16>
    %179 = vector.shape_cast %178 : vector<1x32x32xbf16> to vector<32x32xbf16>
    %cst_66 = arith.constant dense<0.000000e+00> : vector<16x32xf32>
    %180 = tpu.matmul %168, %179, %cst_66 {dimension_numbers = #tpu.dot_dimension_numbers<[1], [0], [0], [1], [0, 0, 1, 1], [], []>} : vector<16x32xbf16>, vector<32x32xbf16>, vector<16x32xf32> -> vector<16x32xf32>
    %181 = vector.broadcast %162 : vector<1x32xf32> to vector<16x32xf32>
    %182 = arith.addf %180, %181 : vector<16x32xf32>
    %183 = arith.truncf %182 : vector<16x32xf32> to vector<16x32xbf16>
    %184 = vector.shape_cast %183 : vector<16x32xbf16> to vector<2x8x32xbf16>
    %c2_67 = arith.constant 2 : index
    %c0_68 = arith.constant 0 : index
    %c0_69 = arith.constant 0 : index
    %185 = vector.load %arg9[%c2_67, %c0_68, %c0_69] : memref<3x32x32xbf16, #tpu.memory_space<vmem>>, vector<1x32x32xbf16>
    %186 = vector.shape_cast %185 : vector<1x32x32xbf16> to vector<32x32xbf16>
    %cst_70 = arith.constant dense<0.000000e+00> : vector<16x32xf32>
    %187 = tpu.matmul %170, %186, %cst_70 {dimension_numbers = #tpu.dot_dimension_numbers<[1], [0], [0], [1], [0, 0, 1, 1], [], []>} : vector<16x32xbf16>, vector<32x32xbf16>, vector<16x32xf32> -> vector<16x32xf32>
    %188 = vector.broadcast %163 : vector<1x32xf32> to vector<16x32xf32>
    %189 = arith.addf %187, %188 : vector<16x32xf32>
    %190 = arith.truncf %189 : vector<16x32xf32> to vector<16x32xbf16>
    %191 = vector.shape_cast %190 : vector<16x32xbf16> to vector<2x8x32xbf16>
    %cst_71 = arith.constant -1.000000e+30 : f32
    %192 = vector.broadcast %cst_71 : f32 to vector<2x1x8xf32>
    %193 = arith.mulf %9, %192 : vector<2x1x8xf32>
    %194 = vector.extract_strided_slice %177 {offsets = [0, 0, 0], sizes = [2, 8, 8], strides = [1, 1, 1]} : vector<2x8x32xbf16> to vector<2x8x8xbf16>
    %195 = vector.extract_strided_slice %184 {offsets = [0, 0, 0], sizes = [2, 8, 8], strides = [1, 1, 1]} : vector<2x8x32xbf16> to vector<2x8x8xbf16>
    "tpu.trace_start"() <{level = 10 : i32, message = "bqd,bkd->bqk"}> : () -> ()
    %cst_72 = arith.constant dense<0.000000e+00> : vector<2x8x8xf32>
    %196 = tpu.matmul %194, %195, %cst_72 {dimension_numbers = #tpu.dot_dimension_numbers<[2], [2], [1], [1], [0, 0, 0, 1, 1, 1], [0], [0]>} : vector<2x8x8xbf16>, vector<2x8x8xbf16>, vector<2x8x8xf32> -> vector<2x8x8xf32>
    "tpu.trace_stop"() : () -> ()
    %cst_73 = arith.constant 0.353553385 : f32
    %197 = vector.broadcast %cst_73 : f32 to vector<2x8x8xf32>
    %198 = arith.mulf %196, %197 : vector<2x8x8xf32>
    %199 = vector.broadcast %193 : vector<2x1x8xf32> to vector<2x8x8xf32>
    %200 = arith.addf %198, %199 : vector<2x8x8xf32>
    %cst_74 = arith.constant dense<0xFF800000> : vector<2x8xf32>
    %201 = vector.multi_reduction <maximumf>, %200, %cst_74 [2] : vector<2x8x8xf32> to vector<2x8xf32>
    %202 = vector.shape_cast %201 : vector<2x8xf32> to vector<2x8x1xf32>
    %203 = vector.broadcast %202 : vector<2x8x1xf32> to vector<2x8x8xf32>
    %204 = arith.subf %200, %203 : vector<2x8x8xf32>
    %205 = math.exp %204 : vector<2x8x8xf32>
    %cst_75 = arith.constant dense<0.000000e+00> : vector<2x8xf32>
    %206 = vector.multi_reduction <add>, %205, %cst_75 [2] : vector<2x8x8xf32> to vector<2x8xf32>
    %207 = vector.shape_cast %206 : vector<2x8xf32> to vector<2x8x1xf32>
    %208 = vector.broadcast %207 : vector<2x8x1xf32> to vector<2x8x8xf32>
    %209 = arith.divf %205, %208 : vector<2x8x8xf32>
    %210 = arith.truncf %209 : vector<2x8x8xf32> to vector<2x8x8xbf16>
    %211 = vector.extract_strided_slice %191 {offsets = [0, 0, 0], sizes = [2, 8, 8], strides = [1, 1, 1]} : vector<2x8x32xbf16> to vector<2x8x8xbf16>
    "tpu.trace_start"() <{level = 10 : i32, message = "bqk,bkd->bqd"}> : () -> ()
    %cst_76 = arith.constant dense<0.000000e+00> : vector<2x8x8xf32>
    %212 = tpu.matmul %210, %211, %cst_76 {dimension_numbers = #tpu.dot_dimension_numbers<[2], [1], [1], [2], [0, 0, 0, 1, 1, 2], [0], [0]>} : vector<2x8x8xbf16>, vector<2x8x8xbf16>, vector<2x8x8xf32> -> vector<2x8x8xf32>
    "tpu.trace_stop"() : () -> ()
    %213 = vector.extract_strided_slice %177 {offsets = [0, 0, 8], sizes = [2, 8, 8], strides = [1, 1, 1]} : vector<2x8x32xbf16> to vector<2x8x8xbf16>
    %214 = vector.extract_strided_slice %184 {offsets = [0, 0, 8], sizes = [2, 8, 8], strides = [1, 1, 1]} : vector<2x8x32xbf16> to vector<2x8x8xbf16>
    "tpu.trace_start"() <{level = 10 : i32, message = "bqd,bkd->bqk"}> : () -> ()
    %cst_77 = arith.constant dense<0.000000e+00> : vector<2x8x8xf32>
    %215 = tpu.matmul %213, %214, %cst_77 {dimension_numbers = #tpu.dot_dimension_numbers<[2], [2], [1], [1], [0, 0, 0, 1, 1, 1], [0], [0]>} : vector<2x8x8xbf16>, vector<2x8x8xbf16>, vector<2x8x8xf32> -> vector<2x8x8xf32>
    "tpu.trace_stop"() : () -> ()
    %cst_78 = arith.constant 0.353553385 : f32
    %216 = vector.broadcast %cst_78 : f32 to vector<2x8x8xf32>
    %217 = arith.mulf %215, %216 : vector<2x8x8xf32>
    %218 = vector.broadcast %193 : vector<2x1x8xf32> to vector<2x8x8xf32>
    %219 = arith.addf %217, %218 : vector<2x8x8xf32>
    %cst_79 = arith.constant dense<0xFF800000> : vector<2x8xf32>
    %220 = vector.multi_reduction <maximumf>, %219, %cst_79 [2] : vector<2x8x8xf32> to vector<2x8xf32>
    %221 = vector.shape_cast %220 : vector<2x8xf32> to vector<2x8x1xf32>
    %222 = vector.broadcast %221 : vector<2x8x1xf32> to vector<2x8x8xf32>
    %223 = arith.subf %219, %222 : vector<2x8x8xf32>
    %224 = math.exp %223 : vector<2x8x8xf32>
    %cst_80 = arith.constant dense<0.000000e+00> : vector<2x8xf32>
    %225 = vector.multi_reduction <add>, %224, %cst_80 [2] : vector<2x8x8xf32> to vector<2x8xf32>
    %226 = vector.shape_cast %225 : vector<2x8xf32> to vector<2x8x1xf32>
    %227 = vector.broadcast %226 : vector<2x8x1xf32> to vector<2x8x8xf32>
    %228 = arith.divf %224, %227 : vector<2x8x8xf32>
    %229 = arith.truncf %228 : vector<2x8x8xf32> to vector<2x8x8xbf16>
    %230 = vector.extract_strided_slice %191 {offsets = [0, 0, 8], sizes = [2, 8, 8], strides = [1, 1, 1]} : vector<2x8x32xbf16> to vector<2x8x8xbf16>
    "tpu.trace_start"() <{level = 10 : i32, message = "bqk,bkd->bqd"}> : () -> ()
    %cst_81 = arith.constant dense<0.000000e+00> : vector<2x8x8xf32>
    %231 = tpu.matmul %229, %230, %cst_81 {dimension_numbers = #tpu.dot_dimension_numbers<[2], [1], [1], [2], [0, 0, 0, 1, 1, 2], [0], [0]>} : vector<2x8x8xbf16>, vector<2x8x8xbf16>, vector<2x8x8xf32> -> vector<2x8x8xf32>
    "tpu.trace_stop"() : () -> ()
    %232 = arith.addf %209, %228 : vector<2x8x8xf32>
    %233 = vector.extract_strided_slice %177 {offsets = [0, 0, 16], sizes = [2, 8, 8], strides = [1, 1, 1]} : vector<2x8x32xbf16> to vector<2x8x8xbf16>
    %234 = vector.extract_strided_slice %184 {offsets = [0, 0, 16], sizes = [2, 8, 8], strides = [1, 1, 1]} : vector<2x8x32xbf16> to vector<2x8x8xbf16>
    "tpu.trace_start"() <{level = 10 : i32, message = "bqd,bkd->bqk"}> : () -> ()
    %cst_82 = arith.constant dense<0.000000e+00> : vector<2x8x8xf32>
    %235 = tpu.matmul %233, %234, %cst_82 {dimension_numbers = #tpu.dot_dimension_numbers<[2], [2], [1], [1], [0, 0, 0, 1, 1, 1], [0], [0]>} : vector<2x8x8xbf16>, vector<2x8x8xbf16>, vector<2x8x8xf32> -> vector<2x8x8xf32>
    "tpu.trace_stop"() : () -> ()
    %cst_83 = arith.constant 0.353553385 : f32
    %236 = vector.broadcast %cst_83 : f32 to vector<2x8x8xf32>
    %237 = arith.mulf %235, %236 : vector<2x8x8xf32>
    %238 = vector.broadcast %193 : vector<2x1x8xf32> to vector<2x8x8xf32>
    %239 = arith.addf %237, %238 : vector<2x8x8xf32>
    %cst_84 = arith.constant dense<0xFF800000> : vector<2x8xf32>
    %240 = vector.multi_reduction <maximumf>, %239, %cst_84 [2] : vector<2x8x8xf32> to vector<2x8xf32>
    %241 = vector.shape_cast %240 : vector<2x8xf32> to vector<2x8x1xf32>
    %242 = vector.broadcast %241 : vector<2x8x1xf32> to vector<2x8x8xf32>
    %243 = arith.subf %239, %242 : vector<2x8x8xf32>
    %244 = math.exp %243 : vector<2x8x8xf32>
    %cst_85 = arith.constant dense<0.000000e+00> : vector<2x8xf32>
    %245 = vector.multi_reduction <add>, %244, %cst_85 [2] : vector<2x8x8xf32> to vector<2x8xf32>
    %246 = vector.shape_cast %245 : vector<2x8xf32> to vector<2x8x1xf32>
    %247 = vector.broadcast %246 : vector<2x8x1xf32> to vector<2x8x8xf32>
    %248 = arith.divf %244, %247 : vector<2x8x8xf32>
    %249 = arith.truncf %248 : vector<2x8x8xf32> to vector<2x8x8xbf16>
    %250 = vector.extract_strided_slice %191 {offsets = [0, 0, 16], sizes = [2, 8, 8], strides = [1, 1, 1]} : vector<2x8x32xbf16> to vector<2x8x8xbf16>
    "tpu.trace_start"() <{level = 10 : i32, message = "bqk,bkd->bqd"}> : () -> ()
    %cst_86 = arith.constant dense<0.000000e+00> : vector<2x8x8xf32>
    %251 = tpu.matmul %249, %250, %cst_86 {dimension_numbers = #tpu.dot_dimension_numbers<[2], [1], [1], [2], [0, 0, 0, 1, 1, 2], [0], [0]>} : vector<2x8x8xbf16>, vector<2x8x8xbf16>, vector<2x8x8xf32> -> vector<2x8x8xf32>
    "tpu.trace_stop"() : () -> ()
    %252 = arith.addf %232, %248 : vector<2x8x8xf32>
    %253 = vector.extract_strided_slice %177 {offsets = [0, 0, 24], sizes = [2, 8, 8], strides = [1, 1, 1]} : vector<2x8x32xbf16> to vector<2x8x8xbf16>
    %254 = vector.extract_strided_slice %184 {offsets = [0, 0, 24], sizes = [2, 8, 8], strides = [1, 1, 1]} : vector<2x8x32xbf16> to vector<2x8x8xbf16>
    "tpu.trace_start"() <{level = 10 : i32, message = "bqd,bkd->bqk"}> : () -> ()
    %cst_87 = arith.constant dense<0.000000e+00> : vector<2x8x8xf32>
    %255 = tpu.matmul %253, %254, %cst_87 {dimension_numbers = #tpu.dot_dimension_numbers<[2], [2], [1], [1], [0, 0, 0, 1, 1, 1], [0], [0]>} : vector<2x8x8xbf16>, vector<2x8x8xbf16>, vector<2x8x8xf32> -> vector<2x8x8xf32>
    "tpu.trace_stop"() : () -> ()
    %cst_88 = arith.constant 0.353553385 : f32
    %256 = vector.broadcast %cst_88 : f32 to vector<2x8x8xf32>
    %257 = arith.mulf %255, %256 : vector<2x8x8xf32>
    %258 = vector.broadcast %193 : vector<2x1x8xf32> to vector<2x8x8xf32>
    %259 = arith.addf %257, %258 : vector<2x8x8xf32>
    %cst_89 = arith.constant dense<0xFF800000> : vector<2x8xf32>
    %260 = vector.multi_reduction <maximumf>, %259, %cst_89 [2] : vector<2x8x8xf32> to vector<2x8xf32>
    %261 = vector.shape_cast %260 : vector<2x8xf32> to vector<2x8x1xf32>
    %262 = vector.broadcast %261 : vector<2x8x1xf32> to vector<2x8x8xf32>
    %263 = arith.subf %259, %262 : vector<2x8x8xf32>
    %264 = math.exp %263 : vector<2x8x8xf32>
    %cst_90 = arith.constant dense<0.000000e+00> : vector<2x8xf32>
    %265 = vector.multi_reduction <add>, %264, %cst_90 [2] : vector<2x8x8xf32> to vector<2x8xf32>
    %266 = vector.shape_cast %265 : vector<2x8xf32> to vector<2x8x1xf32>
    %267 = vector.broadcast %266 : vector<2x8x1xf32> to vector<2x8x8xf32>
    %268 = arith.divf %264, %267 : vector<2x8x8xf32>
    %269 = arith.truncf %268 : vector<2x8x8xf32> to vector<2x8x8xbf16>
    %270 = vector.extract_strided_slice %191 {offsets = [0, 0, 24], sizes = [2, 8, 8], strides = [1, 1, 1]} : vector<2x8x32xbf16> to vector<2x8x8xbf16>
    "tpu.trace_start"() <{level = 10 : i32, message = "bqk,bkd->bqd"}> : () -> ()
    %cst_91 = arith.constant dense<0.000000e+00> : vector<2x8x8xf32>
    %271 = tpu.matmul %269, %270, %cst_91 {dimension_numbers = #tpu.dot_dimension_numbers<[2], [1], [1], [2], [0, 0, 0, 1, 1, 2], [0], [0]>} : vector<2x8x8xbf16>, vector<2x8x8xbf16>, vector<2x8x8xf32> -> vector<2x8x8xf32>
    "tpu.trace_stop"() : () -> ()
    %272 = arith.addf %252, %268 : vector<2x8x8xf32>
    %273 = tpu.concatenate %212, %231, %251, %271 in 2 : vector<2x8x8xf32>, vector<2x8x8xf32>, vector<2x8x8xf32>, vector<2x8x8xf32> -> vector<2x8x32xf32>
    %274 = vector.shape_cast %273 : vector<2x8x32xf32> to vector<16x32xf32>
    %275 = arith.truncf %274 : vector<16x32xf32> to vector<16x32xbf16>
    %c0_92 = arith.constant 0 : index
    %c0_93 = arith.constant 0 : index
    %276 = vector.load %arg10[%c0_92, %c0_93] : memref<32x32xbf16, #tpu.memory_space<vmem>>, vector<32x32xbf16>
    %cst_94 = arith.constant dense<0.000000e+00> : vector<16x32xf32>
    %277 = tpu.matmul %275, %276, %cst_94 {dimension_numbers = #tpu.dot_dimension_numbers<[1], [0], [0], [1], [0, 0, 1, 1], [], []>} : vector<16x32xbf16>, vector<32x32xbf16>, vector<16x32xf32> -> vector<16x32xf32>
    %278 = vector.broadcast %164 : vector<1x32xf32> to vector<16x32xf32>
    %279 = arith.addf %277, %278 : vector<16x32xf32>
    %280 = vector.shape_cast %279 : vector<16x32xf32> to vector<2x8x32xf32>
    %281 = arith.addf %158, %280 : vector<2x8x32xf32>
    %282 = vector.extract_strided_slice %10 {offsets = [11, 0], sizes = [1, 32], strides = [1, 1]} : vector<16x32xf32> to vector<1x32xf32>
    %283 = vector.extract_strided_slice %10 {offsets = [12, 0], sizes = [1, 32], strides = [1, 1]} : vector<16x32xf32> to vector<1x32xf32>
    %cst_95 = arith.constant dense<0.000000e+00> : vector<2x8xf32>
    %284 = vector.multi_reduction <add>, %281, %cst_95 [2] : vector<2x8x32xf32> to vector<2x8xf32>
    %285 = vector.shape_cast %284 : vector<2x8xf32> to vector<2x8x1xf32>
    %cst_96 = arith.constant 3.200000e+01 : f32
    %286 = vector.broadcast %cst_96 : f32 to vector<2x8x1xf32>
    %287 = arith.divf %285, %286 : vector<2x8x1xf32>
    %288 = vector.broadcast %287 : vector<2x8x1xf32> to vector<2x8x32xf32>
    %289 = arith.subf %281, %288 : vector<2x8x32xf32>
    %290 = arith.mulf %289, %289 : vector<2x8x32xf32>
    %cst_97 = arith.constant dense<0.000000e+00> : vector<2x8xf32>
    %291 = vector.multi_reduction <add>, %290, %cst_97 [2] : vector<2x8x32xf32> to vector<2x8xf32>
    %292 = vector.shape_cast %291 : vector<2x8xf32> to vector<2x8x1xf32>
    %cst_98 = arith.constant 3.200000e+01 : f32
    %293 = vector.broadcast %cst_98 : f32 to vector<2x8x1xf32>
    %294 = arith.divf %292, %293 : vector<2x8x1xf32>
    %295 = vector.broadcast %287 : vector<2x8x1xf32> to vector<2x8x32xf32>
    %296 = arith.subf %281, %295 : vector<2x8x32xf32>
    %cst_99 = arith.constant 9.99999974E-6 : f32
    %297 = vector.broadcast %cst_99 : f32 to vector<2x8x1xf32>
    %298 = arith.addf %294, %297 : vector<2x8x1xf32>
    %299 = math.rsqrt %298 : vector<2x8x1xf32>
    %300 = vector.broadcast %299 : vector<2x8x1xf32> to vector<2x8x32xf32>
    %301 = arith.mulf %296, %300 : vector<2x8x32xf32>
    %302 = vector.shape_cast %282 : vector<1x32xf32> to vector<1x1x32xf32>
    %303 = vector.broadcast %302 : vector<1x1x32xf32> to vector<2x8x32xf32>
    %304 = arith.mulf %301, %303 : vector<2x8x32xf32>
    %305 = vector.shape_cast %283 : vector<1x32xf32> to vector<1x1x32xf32>
    %306 = vector.broadcast %305 : vector<1x1x32xf32> to vector<2x8x32xf32>
    %307 = arith.addf %304, %306 : vector<2x8x32xf32>
    %308 = vector.shape_cast %307 : vector<2x8x32xf32> to vector<16x32xf32>
    %309 = arith.truncf %308 : vector<16x32xf32> to vector<16x32xbf16>
    %c0_100 = arith.constant 0 : index
    %c0_101 = arith.constant 0 : index
    %310 = vector.load %arg11[%c0_100, %c0_101] : memref<32x64xbf16, #tpu.memory_space<vmem>>, vector<32x64xbf16>
    %cst_102 = arith.constant dense<0.000000e+00> : vector<16x64xf32>
    %311 = tpu.matmul %309, %310, %cst_102 {dimension_numbers = #tpu.dot_dimension_numbers<[1], [0], [0], [1], [0, 0, 1, 1], [], []>} : vector<16x32xbf16>, vector<32x64xbf16>, vector<16x64xf32> -> vector<16x64xf32>
    %312 = vector.broadcast %11 : vector<1x64xf32> to vector<16x64xf32>
    %313 = arith.addf %311, %312 : vector<16x64xf32>
    %cst_103 = arith.constant 0.000000e+00 : f32
    %314 = vector.broadcast %cst_103 : f32 to vector<16x64xf32>
    %315 = arith.maximumf %313, %314 : vector<16x64xf32>
    %316 = arith.truncf %315 : vector<16x64xf32> to vector<16x64xbf16>
    %c0_104 = arith.constant 0 : index
    %c0_105 = arith.constant 0 : index
    %317 = vector.load %arg12[%c0_104, %c0_105] : memref<64x32xbf16, #tpu.memory_space<vmem>>, vector<64x32xbf16>
    %cst_106 = arith.constant dense<0.000000e+00> : vector<16x32xf32>
    %318 = tpu.matmul %316, %317, %cst_106 {dimension_numbers = #tpu.dot_dimension_numbers<[1], [0], [0], [1], [0, 0, 1, 1], [], []>} : vector<16x64xbf16>, vector<64x32xbf16>, vector<16x32xf32> -> vector<16x32xf32>
    %319 = vector.extract_strided_slice %10 {offsets = [8, 0], sizes = [1, 32], strides = [1, 1]} : vector<16x32xf32> to vector<1x32xf32>
    %320 = vector.broadcast %319 : vector<1x32xf32> to vector<16x32xf32>
    %321 = arith.addf %318, %320 : vector<16x32xf32>
    %322 = vector.shape_cast %321 : vector<16x32xf32> to vector<2x8x32xf32>
    %323 = arith.addf %307, %322 : vector<2x8x32xf32>
    %324 = vector.extract_strided_slice %10 {offsets = [13, 0], sizes = [1, 32], strides = [1, 1]} : vector<16x32xf32> to vector<1x32xf32>
    %325 = vector.extract_strided_slice %10 {offsets = [14, 0], sizes = [1, 32], strides = [1, 1]} : vector<16x32xf32> to vector<1x32xf32>
    %cst_107 = arith.constant dense<0.000000e+00> : vector<2x8xf32>
    %326 = vector.multi_reduction <add>, %323, %cst_107 [2] : vector<2x8x32xf32> to vector<2x8xf32>
    %327 = vector.shape_cast %326 : vector<2x8xf32> to vector<2x8x1xf32>
    %cst_108 = arith.constant 3.200000e+01 : f32
    %328 = vector.broadcast %cst_108 : f32 to vector<2x8x1xf32>
    %329 = arith.divf %327, %328 : vector<2x8x1xf32>
    %330 = vector.broadcast %329 : vector<2x8x1xf32> to vector<2x8x32xf32>
    %331 = arith.subf %323, %330 : vector<2x8x32xf32>
    %332 = arith.mulf %331, %331 : vector<2x8x32xf32>
    %cst_109 = arith.constant dense<0.000000e+00> : vector<2x8xf32>
    %333 = vector.multi_reduction <add>, %332, %cst_109 [2] : vector<2x8x32xf32> to vector<2x8xf32>
    %334 = vector.shape_cast %333 : vector<2x8xf32> to vector<2x8x1xf32>
    %cst_110 = arith.constant 3.200000e+01 : f32
    %335 = vector.broadcast %cst_110 : f32 to vector<2x8x1xf32>
    %336 = arith.divf %334, %335 : vector<2x8x1xf32>
    %337 = vector.broadcast %329 : vector<2x8x1xf32> to vector<2x8x32xf32>
    %338 = arith.subf %323, %337 : vector<2x8x32xf32>
    %cst_111 = arith.constant 9.99999974E-6 : f32
    %339 = vector.broadcast %cst_111 : f32 to vector<2x8x1xf32>
    %340 = arith.addf %336, %339 : vector<2x8x1xf32>
    %341 = math.rsqrt %340 : vector<2x8x1xf32>
    %342 = vector.broadcast %341 : vector<2x8x1xf32> to vector<2x8x32xf32>
    %343 = arith.mulf %338, %342 : vector<2x8x32xf32>
    %344 = vector.shape_cast %324 : vector<1x32xf32> to vector<1x1x32xf32>
    %345 = vector.broadcast %344 : vector<1x1x32xf32> to vector<2x8x32xf32>
    %346 = arith.mulf %343, %345 : vector<2x8x32xf32>
    %347 = vector.shape_cast %325 : vector<1x32xf32> to vector<1x1x32xf32>
    %348 = vector.broadcast %347 : vector<1x1x32xf32> to vector<2x8x32xf32>
    %349 = arith.addf %346, %348 : vector<2x8x32xf32>
    %cst_112 = arith.constant 0.000000e+00 : f32
    %350 = vector.broadcast %cst_112 : f32 to vector<2x8x96xf32>
    %351 = tpu.concatenate %349, %350 in 2 : vector<2x8x32xf32>, vector<2x8x96xf32> -> vector<2x8x128xf32>
    %c0_113 = arith.constant 0 : index
    %c0_114 = arith.constant 0 : index
    %c0_115 = arith.constant 0 : index
    %352 = vector.load %arg15[%c0_113, %c0_114, %c0_115] : memref<2x8x128xf32, #tpu.memory_space<vmem>>, vector<2x8x128xf32>
    tpu.vector_store %arg15[%c0_113, %c0_114, %c0_115], %351 {strides = array<i32>} : memref<2x8x128xf32, #tpu.memory_space<vmem>>, vector<2x8x128xf32>,
    %cst_116 = arith.constant 2.500000e-01 : f32
    %353 = vector.broadcast %cst_116 : f32 to vector<2x8x8xf32>
    %354 = arith.mulf %272, %353 : vector<2x8x8xf32>
    %cst_117 = arith.constant 0.000000e+00 : f32
    %355 = vector.broadcast %cst_117 : f32 to vector<2x8x120xf32>
    %356 = tpu.concatenate %354, %355 in 2 : vector<2x8x8xf32>, vector<2x8x120xf32> -> vector<2x8x128xf32>
    %c0_118 = arith.constant 0 : index
    %c0_119 = arith.constant 0 : index
    %c0_120 = arith.constant 0 : index
    %357 = vector.load %arg16[%c0_118, %c0_119, %c0_120] : memref<2x8x128xf32, #tpu.memory_space<vmem>>, vector<2x8x128xf32>
    tpu.vector_store %arg16[%c0_118, %c0_119, %c0_120], %356 {strides = array<i32>} : memref<2x8x128xf32, #tpu.memory_space<vmem>>, vector<2x8x128xf32>,
    return
  }
  func.func @transform_0(%arg0: i32) -> (i32, i32, i32) {
    %c0_i32 = arith.constant 0 : i32
    %c0_i32_0 = arith.constant 0 : i32
    %c0_i32_1 = arith.constant 0 : i32
    return %arg0, %c0_i32, %c0_i32_0 : i32, i32, i32
  }
  func.func @transform_1(%arg0: i32) -> (i32, i32, i32) {
    %c0_i32 = arith.constant 0 : i32
    %c0_i32_0 = arith.constant 0 : i32
    %c0_i32_1 = arith.constant 0 : i32
    return %arg0, %c0_i32, %c0_i32_0 : i32, i32, i32
  }
  func.func @transform_2(%arg0: i32) -> (i32, i32, i32) {
    %c0_i32 = arith.constant 0 : i32
    %c0_i32_0 = arith.constant 0 : i32
    %c0_i32_1 = arith.constant 0 : i32
    return %arg0, %c0_i32, %c0_i32_0 : i32, i32, i32
  }
  func.func @transform_3(%arg0: i32) -> (i32, i32, i32) {
    %c0_i32 = arith.constant 0 : i32
    %c0_i32_0 = arith.constant 0 : i32
    %c0_i32_1 = arith.constant 0 : i32
    return %arg0, %c0_i32, %c0_i32_0 : i32, i32, i32
  }
  func.func @transform_4(%arg0: i32) -> (i32, i32, i32) {
    %c0_i32 = arith.constant 0 : i32
    %c0_i32_0 = arith.constant 0 : i32
    %c0_i32_1 = arith.constant 0 : i32
    return %arg0, %c0_i32, %c0_i32_0 : i32, i32, i32
  }
  func.func @transform_5(%arg0: i32) -> (i32, i32, i32) {
    %c0_i32 = arith.constant 0 : i32
    %c0_i32_0 = arith.constant 0 : i32
    %c0_i32_1 = arith.constant 0 : i32
    return %arg0, %c0_i32, %c0_i32_0 : i32, i32, i32
  }
  func.func @transform_6(%arg0: i32) -> (i32, i32, i32) {
    %c0_i32 = arith.constant 0 : i32
    %c0_i32_0 = arith.constant 0 : i32
    %c0_i32_1 = arith.constant 0 : i32
    %c0_i32_2 = arith.constant 0 : i32
    return %c0_i32, %c0_i32_0, %c0_i32_1 : i32, i32, i32
  }
  func.func @transform_7(%arg0: i32) -> (i32, i32) {
    %c0_i32 = arith.constant 0 : i32
    %c0_i32_0 = arith.constant 0 : i32
    %c0_i32_1 = arith.constant 0 : i32
    return %c0_i32, %c0_i32_0 : i32, i32
  }
  func.func @transform_8(%arg0: i32) -> (i32, i32, i32) {
    %c0_i32 = arith.constant 0 : i32
    %c0_i32_0 = arith.constant 0 : i32
    %c0_i32_1 = arith.constant 0 : i32
    %c0_i32_2 = arith.constant 0 : i32
    return %c0_i32, %c0_i32_0, %c0_i32_1 : i32, i32, i32
  }
  func.func @transform_9(%arg0: i32) -> (i32, i32) {
    %c0_i32 = arith.constant 0 : i32
    %c0_i32_0 = arith.constant 0 : i32
    %c0_i32_1 = arith.constant 0 : i32
    return %c0_i32, %c0_i32_0 : i32, i32
  }
  func.func @transform_10(%arg0: i32) -> (i32, i32) {
    %c0_i32 = arith.constant 0 : i32
    %c0_i32_0 = arith.constant 0 : i32
    %c0_i32_1 = arith.constant 0 : i32
    return %c0_i32, %c0_i32_0 : i32, i32
  }
  func.func @transform_11(%arg0: i32) -> (i32, i32) {
    %c0_i32 = arith.constant 0 : i32
    %c0_i32_0 = arith.constant 0 : i32
    %c0_i32_1 = arith.constant 0 : i32
    return %c0_i32, %c0_i32_0 : i32, i32
  }
  func.func @transform_12(%arg0: i32) -> (i32, i32) {
    %c0_i32 = arith.constant 0 : i32
    %c0_i32_0 = arith.constant 0 : i32
    %c0_i32_1 = arith.constant 0 : i32
    return %c0_i32, %c0_i32_0 : i32, i32
  }
  func.func @transform_13(%arg0: i32) -> (i32, i32) {
    %c0_i32 = arith.constant 0 : i32
    %c0_i32_0 = arith.constant 0 : i32
    %c0_i32_1 = arith.constant 0 : i32
    return %c0_i32, %c0_i32_0 : i32, i32
  }
  func.func @transform_14(%arg0: i32) -> (i32, i32, i32) {
    %c0_i32 = arith.constant 0 : i32
    %c0_i32_0 = arith.constant 0 : i32
    %c0_i32_1 = arith.constant 0 : i32
    return %arg0, %c0_i32, %c0_i32_0 : i32, i32, i32
  }
  func.func @transform_15(%arg0: i32) -> (i32, i32, i32) {
    %c0_i32 = arith.constant 0 : i32
    %c0_i32_0 = arith.constant 0 : i32
    %c0_i32_1 = arith.constant 0 : i32
    return %arg0, %c0_i32, %c0_i32_0 : i32, i32, i32
  }
}

</mosaic_0001>

<llo_original>
// kernel: tpu_custom_call.1
$region0: #{tpu_custom_call.1}
  #allocation0 [shape = 'u32[]', space=smem, size = 0x4, offset = 0x4, fixed_abs, tag = 'smem constant byte address 0x4 - core index']
  #allocation1 [shape = 'u32[144,128]{1,0:T(1,128)}', space=vmem, size = 0x12000, scoped, tag = 'internal scratch']
  %s0 = inlined_call_operand.hbm [shape: bf16[2,8,32], index: 0, kind: input, shape index: {}]
  %s1 = inlined_call_operand.hbm [shape: bf16[2,8,32], index: 1, kind: input, shape index: {}]
  %s2 = inlined_call_operand.hbm [shape: bf16[2,8,32], index: 2, kind: input, shape index: {}]
  %s3 = inlined_call_operand.hbm [shape: bf16[2,8,32], index: 3, kind: input, shape index: {}]
  %s4 = inlined_call_operand.vmem [shape: f32[2,1,8], index: 4, kind: input, shape index: {}]
  %s5 = inlined_call_operand.vmem [shape: f32[2,1,8], index: 5, kind: input, shape index: {}]
  %s6 = inlined_call_operand.vmem [shape: bf16[3,32,32], index: 6, kind: input, shape index: {}]
  %s7 = inlined_call_operand.hbm [shape: bf16[32,32], index: 7, kind: input, shape index: {}]
  %s8 = inlined_call_operand.hbm [shape: bf16[3,32,32], index: 8, kind: input, shape index: {}]
  %s9 = inlined_call_operand.hbm [shape: bf16[32,32], index: 9, kind: input, shape index: {}]
  %s10 = inlined_call_operand.hbm [shape: bf16[32,64], index: 10, kind: input, shape index: {}]
  %s11 = inlined_call_operand.vmem [shape: bf16[64,32], index: 11, kind: input, shape index: {}]
  %s12 = inlined_call_operand.hbm [shape: f32[16,32], index: 12, kind: input, shape index: {}]
  %s13 = inlined_call_operand.vmem [shape: f32[1,64], index: 13, kind: input, shape index: {}]
  %s14 = inlined_call_operand.hbm [shape: f32[2,8,128], index: 14, kind: output, shape index: {0}]
  %s15 = inlined_call_operand.hbm [shape: f32[2,8,128], index: 15, kind: output, shape index: {1}]
  %16 = xla_tuple %s14, %s15
  %s17 = sld [smem:[#allocation0]]
  $region110: #{tpu_custom_call.1} parent=0
    _
  %s19 = ssub.s32 1, %s17
  %s20 = scalar_select 0, %s19, %s17
  $region1: #{tpu_custom_call.1} parent=0
    #allocation2 [shape = 'u8[4096]{0}', space=vmem, size = 0x1000, scoped, tag = 'input window, operand 0, single buffered']
    #allocation3 [shape = 's32[1]{0}', space=sflag, size = 0x4, scoped, tag = 'scoped memory for tpu_custom_call.1']
    #allocation4 [shape = 's32[1]{0}', space=sflag, size = 0x4, scoped, tag = 'scoped memory for tpu_custom_call.1']
    #allocation5 [shape = 'u8[4096]{0}', space=vmem, size = 0x1000, scoped, tag = 'input window, operand 1, single buffered']
    #allocation6 [shape = 's32[1]{0}', space=sflag, size = 0x4, scoped, tag = 'scoped memory for tpu_custom_call.1']
    #allocation7 [shape = 'u8[4096]{0}', space=vmem, size = 0x1000, scoped, tag = 'input window, operand 2, single buffered']
    #allocation8 [shape = 'u8[4096]{0}', space=vmem, size = 0x1000, scoped, tag = 'input window, operand 3, single buffered']
    #allocation9 [shape = 's32[1]{0}', space=sflag, size = 0x4, scoped, tag = 'scoped memory for tpu_custom_call.1']
    #allocation10 [shape = 'u8[8192]{0}', space=vmem, size = 0x2000, scoped, tag = 'input window, operand 7, single buffered']
    #allocation11 [shape = 'u8[24576]{0}', space=vmem, size = 0x6000, scoped, tag = 'input window, operand 8, single buffered']
    #allocation12 [shape = 's32[1]{0}', space=sflag, size = 0x4, scoped, tag = 'scoped memory for tpu_custom_call.1']
    #allocation13 [shape = 'u8[8192]{0}', space=vmem, size = 0x2000, scoped, tag = 'input window, operand 9, single buffered']
    #allocation14 [shape = 'u8[8192]{0}', space=vmem, size = 0x2000, scoped, tag = 'input window, operand 10, single buffered']
    #allocation15 [shape = 's32[1]{0}', space=sflag, size = 0x4, scoped, tag = 'scoped memory for tpu_custom_call.1']
    #allocation16 [shape = 'u8[8192]{0}', space=vmem, size = 0x2000, scoped, tag = 'input window, operand 12, single buffered']
    #allocation17 [shape = 'u8[8192]{0}', space=vmem, size = 0x2000, scoped, tag = 'output window, operand 0, single buffered']
    #allocation18 [shape = 'u8[8192]{0}', space=vmem, size = 0x2000, scoped, tag = 'output window, operand 1, single buffered']
    #allocation19 [shape = 's32[1]{0}', space=sflag, size = 0x4, scoped, tag = 'scoped memory for tpu_custom_call.1']
    %21 = vsyncpa [#allocation3], 0
    %22 = vsyncpa [#allocation6], 0
    %23 = vsyncpa [#allocation9], 0
    %24 = vsyncpa [#allocation12], 0
    %25 = vsyncpa [#allocation15], 0
    %26 = vsyncpa [#allocation4], 0
    %27 = vsyncpa [#allocation19], 0
    // Predicated region
    $region2: #{tpu_custom_call.1} parent=1 // pred_check
      _
    $region3: #{tpu_custom_call.1} parent=1 // pred_check_branch
      %29 = sbr.rel (0) target = $region5
    $region4: #{tpu_custom_call.1} parent=1 // pred_region
      %s31 = ssub.s32 128, 128
      %32 = vsyncadd [#allocation3], %s31
      %s33 = sshll.u32 [#allocation2], 4
      %s34 = int_to_ptr.vmem [resolvable:$true] %s33
      %39 = dma.hbm_to_vmem [thread:$0]  %s0, 128, %s34, [#allocation3], 64, 64, 4
    $region5: #{tpu_custom_call.1} parent=1 // pred_fallthru
      _
    // Predicated region
    $region6: #{tpu_custom_call.1} parent=1 // pred_check
      _
    $region7: #{tpu_custom_call.1} parent=1 // pred_check_branch
      %41 = sbr.rel (0) target = $region9
    $region8: #{tpu_custom_call.1} parent=1 // pred_region
      %s43 = ssub.s32 128, 128
      %44 = vsyncadd [#allocation6], %s43
      %s45 = sshll.u32 [#allocation5], 4
      %s46 = int_to_ptr.vmem [resolvable:$true] %s45
      %51 = dma.hbm_to_vmem [thread:$0]  %s1, 128, %s46, [#allocation6], 64, 64, 4
    $region9: #{tpu_custom_call.1} parent=1 // pred_fallthru
      _
    // Predicated region
    $region10: #{tpu_custom_call.1} parent=1 // pred_check
      _
    $region11: #{tpu_custom_call.1} parent=1 // pred_check_branch
      %53 = sbr.rel (0) target = $region13
    $region12: #{tpu_custom_call.1} parent=1 // pred_region
      %s55 = ssub.s32 128, 128
      %56 = vsyncadd [#allocation6], %s55
      %s57 = sshll.u32 [#allocation7], 4
      %s58 = int_to_ptr.vmem [resolvable:$true] %s57
      %63 = dma.hbm_to_vmem [thread:$0]  %s2, 128, %s58, [#allocation6], 64, 64, 4
    $region13: #{tpu_custom_call.1} parent=1 // pred_fallthru
      _
    // Predicated region
    $region14: #{tpu_custom_call.1} parent=1 // pred_check
      _
    $region15: #{tpu_custom_call.1} parent=1 // pred_check_branch
      %65 = sbr.rel (0) target = $region17
    $region16: #{tpu_custom_call.1} parent=1 // pred_region
      %s67 = ssub.s32 128, 128
      %68 = vsyncadd [#allocation9], %s67
      %s69 = sshll.u32 [#allocation8], 4
      %s70 = int_to_ptr.vmem [resolvable:$true] %s69
      %75 = dma.hbm_to_vmem [thread:$0]  %s3, 128, %s70, [#allocation9], 64, 64, 4
    $region17: #{tpu_custom_call.1} parent=1 // pred_fallthru
      _
    // Predicated region
    $region18: #{tpu_custom_call.1} parent=1 // pred_check
      _
    $region19: #{tpu_custom_call.1} parent=1 // pred_check_branch
      %77 = sbr.rel (0) target = $region21
    $region20: #{tpu_custom_call.1} parent=1 // pred_region
      _
    $region21: #{tpu_custom_call.1} parent=1 // pred_fallthru
      _
    // Predicated region
    $region22: #{tpu_custom_call.1} parent=1 // pred_check
      _
    $region23: #{tpu_custom_call.1} parent=1 // pred_check_branch
      %79 = sbr.rel (0) target = $region25
    $region24: #{tpu_custom_call.1} parent=1 // pred_region
      _
    $region25: #{tpu_custom_call.1} parent=1 // pred_fallthru
      _
    // Predicated region
    $region26: #{tpu_custom_call.1} parent=1 // pred_check
      _
    $region27: #{tpu_custom_call.1} parent=1 // pred_check_branch
      %81 = sbr.rel (0) target = $region29
    $region28: #{tpu_custom_call.1} parent=1 // pred_region
      _
    $region29: #{tpu_custom_call.1} parent=1 // pred_fallthru
      _
    // Predicated region
    $region30: #{tpu_custom_call.1} parent=1 // pred_check
      _
    $region31: #{tpu_custom_call.1} parent=1 // pred_check_branch
      %83 = sbr.rel (0) target = $region33
    $region32: #{tpu_custom_call.1} parent=1 // pred_region
      %s85 = ssub.s32 256, 256
      %86 = vsyncadd [#allocation9], %s85
      %s87 = sshll.u32 [#allocation10], 4
      %s88 = int_to_ptr.vmem [resolvable:$true] %s87
      %93 = dma.hbm_to_vmem [thread:$0]  %s7, 256, %s88, [#allocation9], 64, 64, 4
    $region33: #{tpu_custom_call.1} parent=1 // pred_fallthru
      _
    // Predicated region
    $region34: #{tpu_custom_call.1} parent=1 // pred_check
      _
    $region35: #{tpu_custom_call.1} parent=1 // pred_check_branch
      %95 = sbr.rel (0) target = $region37
    $region36: #{tpu_custom_call.1} parent=1 // pred_region
      %s97 = ssub.s32 768, 768
      %98 = vsyncadd [#allocation12], %s97
      %s99 = sshll.u32 [#allocation11], 4
      %s100 = int_to_ptr.vmem [resolvable:$true] %s99
      %105 = dma.hbm_to_vmem [thread:$0]  %s8, 768, %s100, [#allocation12], 64, 64, 4
    $region37: #{tpu_custom_call.1} parent=1 // pred_fallthru
      _
    // Predicated region
    $region38: #{tpu_custom_call.1} parent=1 // pred_check
      _
    $region39: #{tpu_custom_call.1} parent=1 // pred_check_branch
      %107 = sbr.rel (0) target = $region41
    $region40: #{tpu_custom_call.1} parent=1 // pred_region
      %s109 = ssub.s32 256, 256
      %110 = vsyncadd [#allocation12], %s109
      %s111 = sshll.u32 [#allocation13], 4
      %s112 = int_to_ptr.vmem [resolvable:$true] %s111
      %117 = dma.hbm_to_vmem [thread:$0]  %s9, 256, %s112, [#allocation12], 64, 64, 4
    $region41: #{tpu_custom_call.1} parent=1 // pred_fallthru
      _
    // Predicated region
    $region42: #{tpu_custom_call.1} parent=1 // pred_check
      _
    $region43: #{tpu_custom_call.1} parent=1 // pred_check_branch
      %119 = sbr.rel (0) target = $region45
    $region44: #{tpu_custom_call.1} parent=1 // pred_region
      %s121 = ssub.s32 256, 256
      %122 = vsyncadd [#allocation15], %s121
      %s123 = sshll.u32 [#allocation14], 4
      %s124 = int_to_ptr.vmem [resolvable:$true] %s123
      %129 = dma.hbm_to_vmem [thread:$0]  %s10, 256, %s124, [#allocation15], 64, 64, 4
    $region45: #{tpu_custom_call.1} parent=1 // pred_fallthru
      _
    // Predicated region
    $region46: #{tpu_custom_call.1} parent=1 // pred_check
      _
    $region47: #{tpu_custom_call.1} parent=1 // pred_check_branch
      %131 = sbr.rel (0) target = $region49
    $region48: #{tpu_custom_call.1} parent=1 // pred_region
      _
    $region49: #{tpu_custom_call.1} parent=1 // pred_fallthru
      _
    // Predicated region
    $region50: #{tpu_custom_call.1} parent=1 // pred_check
      _
    $region51: #{tpu_custom_call.1} parent=1 // pred_check_branch
      %133 = sbr.rel (0) target = $region53
    $region52: #{tpu_custom_call.1} parent=1 // pred_region
      %s135 = ssub.s32 256, 256
      %136 = vsyncadd [#allocation15], %s135
      %s137 = sshll.u32 [#allocation16], 4
      %s138 = int_to_ptr.vmem [resolvable:$true] %s137
      %143 = dma.hbm_to_vmem [thread:$0]  %s12, 256, %s138, [#allocation15], 128, 128, 8
    $region53: #{tpu_custom_call.1} parent=1 // pred_fallthru
      _
    // Predicated region
    $region54: #{tpu_custom_call.1} parent=1 // pred_check
      _
    $region55: #{tpu_custom_call.1} parent=1 // pred_check_branch
      %145 = sbr.rel (0) target = $region57
    $region56: #{tpu_custom_call.1} parent=1 // pred_region
      _
    $region57: #{tpu_custom_call.1} parent=1 // pred_fallthru
      _
    // Predicated region
    $region58: #{tpu_custom_call.1} parent=1 // pred_check
      _
    $region59: #{tpu_custom_call.1} parent=1 // pred_check_branch
      %147 = sbr.rel (0) target = $region61
    $region60: #{tpu_custom_call.1} parent=1 // pred_region
      %148 = dma.done [#allocation3], 128
    $region61: #{tpu_custom_call.1} parent=1 // pred_fallthru
      _
    // Predicated region
    $region62: #{tpu_custom_call.1} parent=1 // pred_check
      _
    $region63: #{tpu_custom_call.1} parent=1 // pred_check_branch
      %150 = sbr.rel (0) target = $region65
    $region64: #{tpu_custom_call.1} parent=1 // pred_region
      %151 = dma.done [#allocation6], 128
    $region65: #{tpu_custom_call.1} parent=1 // pred_fallthru
      _
    // Predicated region
    $region66: #{tpu_custom_call.1} parent=1 // pred_check
      _
    $region67: #{tpu_custom_call.1} parent=1 // pred_check_branch
      %153 = sbr.rel (0) target = $region69
    $region68: #{tpu_custom_call.1} parent=1 // pred_region
      %154 = dma.done [#allocation6], 128
    $region69: #{tpu_custom_call.1} parent=1 // pred_fallthru
      _
    // Predicated region
    $region70: #{tpu_custom_call.1} parent=1 // pred_check
      _
    $region71: #{tpu_custom_call.1} parent=1 // pred_check_branch
      %156 = sbr.rel (0) target = $region73
    $region72: #{tpu_custom_call.1} parent=1 // pred_region
      %157 = dma.done [#allocation9], 128
    $region73: #{tpu_custom_call.1} parent=1 // pred_fallthru
      _
    // Predicated region
    $region74: #{tpu_custom_call.1} parent=1 // pred_check
      _
    $region75: #{tpu_custom_call.1} parent=1 // pred_check_branch
      %159 = sbr.rel (0) target = $region77
    $region76: #{tpu_custom_call.1} parent=1 // pred_region
      %160 = dma.done [#allocation9], 256
    $region77: #{tpu_custom_call.1} parent=1 // pred_fallthru
      _
    // Predicated region
    $region78: #{tpu_custom_call.1} parent=1 // pred_check
      _
    $region79: #{tpu_custom_call.1} parent=1 // pred_check_branch
      %162 = sbr.rel (0) target = $region81
    $region80: #{tpu_custom_call.1} parent=1 // pred_region
      %163 = dma.done [#allocation12], 768
    $region81: #{tpu_custom_call.1} parent=1 // pred_fallthru
      _
    // Predicated region
    $region82: #{tpu_custom_call.1} parent=1 // pred_check
      _
    $region83: #{tpu_custom_call.1} parent=1 // pred_check_branch
      %165 = sbr.rel (0) target = $region85
    $region84: #{tpu_custom_call.1} parent=1 // pred_region
      %166 = dma.done [#allocation12], 256
    $region85: #{tpu_custom_call.1} parent=1 // pred_fallthru
      _
    // Predicated region
    $region86: #{tpu_custom_call.1} parent=1 // pred_check
      _
    $region87: #{tpu_custom_call.1} parent=1 // pred_check_branch
      %168 = sbr.rel (0) target = $region89
    $region88: #{tpu_custom_call.1} parent=1 // pred_region
      %169 = dma.done [#allocation15], 256
    $region89: #{tpu_custom_call.1} parent=1 // pred_fallthru
      _
    // Predicated region
    $region90: #{tpu_custom_call.1} parent=1 // pred_check
      _
    $region91: #{tpu_custom_call.1} parent=1 // pred_check_branch
      %171 = sbr.rel (0) target = $region93
    $region92: #{tpu_custom_call.1} parent=1 // pred_region
      %172 = dma.done [#allocation15], 256
    $region93: #{tpu_custom_call.1} parent=1 // pred_fallthru
      _
    %v174 = vld [vmem:[#allocation2] sm:$0xf]
    %v175 = vld [vmem:[#allocation2 + $0x4] sm:$0xf]
    %v176 = vunpack.c.l.bf16 %v174
    %v177 = vunpack.c.l.bf16 %v175
    %v178 = vld [vmem:[#allocation5] sm:$0xf]
    %v179 = vld [vmem:[#allocation5 + $0x4] sm:$0xf]
    %v180 = vunpack.c.l.bf16 %v178
    %v181 = vunpack.c.l.bf16 %v179
    %v182 = vld [vmem:[#allocation7] sm:$0xf]
    %v183 = vld [vmem:[#allocation7 + $0x4] sm:$0xf]
    %v184 = vunpack.c.l.bf16 %v182
    %v185 = vunpack.c.l.bf16 %v183
    %v186 = vld [vmem:[#allocation8] sm:$0xf]
    %v187 = vld [vmem:[#allocation8 + $0x4] sm:$0xf]
    %v188 = vunpack.c.l.bf16 %v186
    %v189 = vunpack.c.l.bf16 %v187
    %v190 = vld [vmem:[%s4] sm:$0x1]
    %v191 = vld [vmem:[%s4 + $0x1] sm:$0x1]
    %v192 = vld [vmem:[%s5] sm:$0x1]
    %v193 = vld [vmem:[%s5 + $0x1] sm:$0x1]
    %v194 = vld [vmem:[#allocation16] sm:$0xff]
    %v195 = vld [vmem:[#allocation16 + $0x8] sm:$0xff]
    %v196 = vld [vmem:[%s13] sm:$0x1]
    %v197 = vadd.f32 %v176, %v184
    %v198 = vadd.f32 %v177, %v185
    %v199 = vpack.c.bf16 %v198, %v197
    %v200 = vpack.c.bf16 %v177, %v176
    %v201 = vld [vmem:[%s6] sm:$0xf]
    %v202 = vld [vmem:[%s6 + $0x4] sm:$0xf]
    %v203 = vld [vmem:[%s6 + $0x8] sm:$0xf]
    %v204 = vld [vmem:[%s6 + $0xc] sm:$0xf]
    %v205 = vlaneseq
    %v206 = vshrl.u32 %v205, 7
    %v207 = vsub.s32 0, %v206
    %v208 = vrot.slane %v194, %v207
    %v213 = vunpack.c.l.b16 %v201
    %v214 = vunpack.c.l.b16 %v202
    %v215 = vunpack.c.l.b16 %v203
    %v216 = vunpack.c.l.b16 %v204
    %v217 = vpack.c.b16 %v214, %v213
    %v218 = vpack.c.b16 %v216, %v215
    %vm221 = vcmask 261120
    %v223 = vsel %vm221, %v199, 0
    %225 = vmatprep.subr.bf16.mxu0 0
    %226 = vmatpush1.bf16.msra.mxu0 0
    %227 = vmatprep.subr.bf16.mxu0 0
    %228 = vmatpush1.bf16.msra.mxu0 0
    %229 = vmatprep.subr.bf16.mxu0 0
    %230 = vmatpush1.bf16.msra.mxu0 0
    %231 = vmatprep.subr.bf16.mxu0 0
    %232 = vmatpush1.bf16.msra.mxu0 0
    %233 = vmatprep.subr.bf16.mxu0 0
    %234 = vmatpush1.bf16.msra.mxu0 0
    %235 = vmatprep.subr.bf16.mxu0 0
    %236 = vmatpush1.bf16.msra.mxu0 0
    %237 = vmatprep.subr.bf16.mxu0 0
    %238 = vmatpush1.bf16.msra.mxu0 %v218
    %239 = vmatprep.subr.bf16.mxu0 0
    %240 = vmatpush1.bf16.msra.mxu0 %v217
    %241 = vmatprep.subr.bf16.mxu0 0
    %242 = vmatpush2.bf16.msra.mxu0 0
    %243 = vmatprep.subr.bf16.mxu0 0
    %244 = vmatpush2.bf16.msra.mxu0 0
    %245 = vmatprep.subr.bf16.mxu0 0
    %246 = vmatpush2.bf16.msra.mxu0 0
    %247 = vmatprep.subr.bf16.mxu0 0
    %248 = vmatpush2.bf16.msra.mxu0 0
    %249 = vmatprep.subr.bf16.mxu0 0
    %250 = vmatpush2.bf16.msra.mxu0 0
    %251 = vmatprep.subr.bf16.mxu0 0
    %252 = vmatpush2.bf16.msra.mxu0 0
    %253 = vmatprep.subr.bf16.mxu0 0
    %254 = vmatpush2.bf16.msra.mxu0 0
    %255 = vmatprep.subr.bf16.mxu0 0
    %256 = vmatpush2.bf16.msra.mxu0 0
    %257 = vmatprep.mubr.bf16.mxu0 0
    %258 = vmatmul.mubr.bf16.gmra.mxu0 %v223
    %v259 = vpop.f32.mrf.mxu0
    %v260 = vadd.f32 %v208, %v259
    %v261 = vpop.f32.mrf.mxu0
    %v262 = vpop.f32.mrf.mxu0
    %v263 = vadd.f32 %v208, %v262
    %v264 = vpop.f32.mrf.mxu0
    %265 = vdwg.mxu0
    %v266 = vpack.c.bf16 %v263, %v260
    %v268 = vunpack.c.l.b16 %v266
    %v269 = vunpack.c.h.b16 %v266
    %v270 = vpack.c.b16 %v268, %v268
    %v271 = vpack.c.b16 %v269, %v269
    %s272 = scalar_lea.vmem %s6, 16
    %v273 = vld [vmem:[%s272] sm:$0xf]
    %v274 = vld [vmem:[%s272 + $0x4] sm:$0xf]
    %v275 = vld [vmem:[%s272 + $0x8] sm:$0xf]
    %v276 = vld [vmem:[%s272 + $0xc] sm:$0xf]
    %v277 = vlaneseq
    %v278 = vshrl.u32 %v277, 7
    %v279 = vsub.s32 1, %v278
    %v280 = vrot.slane %v194, %v279
    %v285 = vunpack.c.l.b16 %v273
    %v286 = vunpack.c.l.b16 %v274
    %v287 = vunpack.c.l.b16 %v275
    %v288 = vunpack.c.l.b16 %v276
    %v289 = vpack.c.b16 %v286, %v285
    %v290 = vpack.c.b16 %v288, %v287
    %293 = vmatprep.subr.bf16.mxu0 0
    %294 = vmatpush1.bf16.msra.mxu0 0
    %295 = vmatprep.subr.bf16.mxu0 0
    %296 = vmatpush1.bf16.msra.mxu0 0
    %297 = vmatprep.subr.bf16.mxu0 0
    %298 = vmatpush1.bf16.msra.mxu0 0
    %299 = vmatprep.subr.bf16.mxu0 0
    %300 = vmatpush1.bf16.msra.mxu0 0
    %301 = vmatprep.subr.bf16.mxu0 0
    %302 = vmatpush1.bf16.msra.mxu0 0
    %303 = vmatprep.subr.bf16.mxu0 0
    %304 = vmatpush1.bf16.msra.mxu0 0
    %305 = vmatprep.subr.bf16.mxu0 0
    %306 = vmatpush1.bf16.msra.mxu0 %v290
    %307 = vmatprep.subr.bf16.mxu0 0
    %308 = vmatpush1.bf16.msra.mxu0 %v289
    %309 = vmatprep.subr.bf16.mxu0 0
    %310 = vmatpush2.bf16.msra.mxu0 0
    %311 = vmatprep.subr.bf16.mxu0 0
    %312 = vmatpush2.bf16.msra.mxu0 0
    %313 = vmatprep.subr.bf16.mxu0 0
    %314 = vmatpush2.bf16.msra.mxu0 0
    %315 = vmatprep.subr.bf16.mxu0 0
    %316 = vmatpush2.bf16.msra.mxu0 0
    %317 = vmatprep.subr.bf16.mxu0 0
    %318 = vmatpush2.bf16.msra.mxu0 0
    %319 = vmatprep.subr.bf16.mxu0 0
    %320 = vmatpush2.bf16.msra.mxu0 0
    %321 = vmatprep.subr.bf16.mxu0 0
    %322 = vmatpush2.bf16.msra.mxu0 0
    %323 = vmatprep.subr.bf16.mxu0 0
    %324 = vmatpush2.bf16.msra.mxu0 0
    %325 = vmatprep.mubr.bf16.mxu0 0
    %326 = vmatmul.mubr.bf16.gmra.mxu0 %v223
    %v327 = vpop.f32.mrf.mxu0
    %v328 = vadd.f32 %v280, %v327
    %v329 = vpop.f32.mrf.mxu0
    %v330 = vpop.f32.mrf.mxu0
    %v331 = vadd.f32 %v280, %v330
    %v332 = vpop.f32.mrf.mxu0
    %333 = vdwg.mxu0
    %v334 = vpack.c.bf16 %v331, %v328
    %v336 = vunpack.c.l.b16 %v334
    %v337 = vunpack.c.h.b16 %v334
    %v338 = vpack.c.b16 %v336, %v336
    %v339 = vpack.c.b16 %v337, %v337
    %s340 = scalar_lea.vmem %s6, 32
    %v341 = vld [vmem:[%s340] sm:$0xf]
    %v342 = vld [vmem:[%s340 + $0x4] sm:$0xf]
    %v343 = vld [vmem:[%s340 + $0x8] sm:$0xf]
    %v344 = vld [vmem:[%s340 + $0xc] sm:$0xf]
    %v345 = vlaneseq
    %v346 = vshrl.u32 %v345, 7
    %v347 = vsub.s32 2, %v346
    %v348 = vrot.slane %v194, %v347
    %v353 = vunpack.c.l.b16 %v341
    %v354 = vunpack.c.l.b16 %v342
    %v355 = vunpack.c.l.b16 %v343
    %v356 = vunpack.c.l.b16 %v344
    %v357 = vpack.c.b16 %v354, %v353
    %v358 = vpack.c.b16 %v356, %v355
    %v362 = vsel %vm221, %v200, 0
    %364 = vmatprep.subr.bf16.mxu0 0
    %365 = vmatpush1.bf16.msra.mxu0 0
    %366 = vmatprep.subr.bf16.mxu0 0
    %367 = vmatpush1.bf16.msra.mxu0 0
    %368 = vmatprep.subr.bf16.mxu0 0
    %369 = vmatpush1.bf16.msra.mxu0 0
    %370 = vmatprep.subr.bf16.mxu0 0
    %371 = vmatpush1.bf16.msra.mxu0 0
    %372 = vmatprep.subr.bf16.mxu0 0
    %373 = vmatpush1.bf16.msra.mxu0 0
    %374 = vmatprep.subr.bf16.mxu0 0
    %375 = vmatpush1.bf16.msra.mxu0 0
    %376 = vmatprep.subr.bf16.mxu0 0
    %377 = vmatpush1.bf16.msra.mxu0 %v358
    %378 = vmatprep.subr.bf16.mxu0 0
    %379 = vmatpush1.bf16.msra.mxu0 %v357
    %380 = vmatprep.subr.bf16.mxu0 0
    %381 = vmatpush2.bf16.msra.mxu0 0
    %382 = vmatprep.subr.bf16.mxu0 0
    %383 = vmatpush2.bf16.msra.mxu0 0
    %384 = vmatprep.subr.bf16.mxu0 0
    %385 = vmatpush2.bf16.msra.mxu0 0
    %386 = vmatprep.subr.bf16.mxu0 0
    %387 = vmatpush2.bf16.msra.mxu0 0
    %388 = vmatprep.subr.bf16.mxu0 0
    %389 = vmatpush2.bf16.msra.mxu0 0
    %390 = vmatprep.subr.bf16.mxu0 0
    %391 = vmatpush2.bf16.msra.mxu0 0
    %392 = vmatprep.subr.bf16.mxu0 0
    %393 = vmatpush2.bf16.msra.mxu0 0
    %394 = vmatprep.subr.bf16.mxu0 0
    %395 = vmatpush2.bf16.msra.mxu0 0
    %396 = vmatprep.mubr.bf16.mxu0 0
    %397 = vmatmul.mubr.bf16.gmra.mxu0 %v362
    %v398 = vpop.f32.mrf.mxu0
    %v399 = vadd.f32 %v348, %v398
    %v400 = vpop.f32.mrf.mxu0
    %v401 = vpop.f32.mrf.mxu0
    %v402 = vadd.f32 %v348, %v401
    %v403 = vpop.f32.mrf.mxu0
    %404 = vdwg.mxu0
    %v405 = vpack.c.bf16 %v402, %v399
    %v407 = vunpack.c.l.b16 %v405
    %v408 = vunpack.c.h.b16 %v405
    %v409 = vpack.c.b16 %v407, %v407
    %v410 = vpack.c.b16 %v408, %v408
    %v411 = vmul.f32 %v190, -1e+30
    %v412 = vmul.f32 %v191, -1e+30
    %vm413 = vcmask 64512
    %v415 = vsel %vm413, %v270, 0
    %v418 = vsel %vm413, %v338, 0
    %420 = vmatprep.subr.bf16.mxu0 0
    %421 = vmatpush1.bf16.xpose.msra.mxu0 0
    %422 = vmatprep.subr.bf16.mxu0 0
    %423 = vmatpush1.bf16.xpose.msra.mxu0 0
    %424 = vmatprep.subr.bf16.mxu0 0
    %425 = vmatpush1.bf16.xpose.msra.mxu0 0
    %426 = vmatprep.subr.bf16.mxu0 0
    %427 = vmatpush1.bf16.xpose.msra.mxu0 0
    %428 = vmatprep.subr.bf16.mxu0 0
    %429 = vmatpush1.bf16.xpose.msra.mxu0 0
    %430 = vmatprep.subr.bf16.mxu0 0
    %431 = vmatpush1.bf16.xpose.msra.mxu0 0
    %432 = vmatprep.subr.bf16.mxu0 0
    %433 = vmatpush1.bf16.xpose.msra.mxu0 0
    %434 = vmatprep.subr.bf16.mxu0 0
    %435 = vmatpush1.bf16.xpose.msra.mxu0 %v418
    %436 = vmatprep.subr.bf16.mxu0 0
    %437 = vmatpush2.bf16.xpose.msra.mxu0 0
    %438 = vmatprep.subr.bf16.mxu0 0
    %439 = vmatpush2.bf16.xpose.msra.mxu0 0
    %440 = vmatprep.subr.bf16.mxu0 0
    %441 = vmatpush2.bf16.xpose.msra.mxu0 0
    %442 = vmatprep.subr.bf16.mxu0 0
    %443 = vmatpush2.bf16.xpose.msra.mxu0 0
    %444 = vmatprep.subr.bf16.mxu0 0
    %445 = vmatpush2.bf16.xpose.msra.mxu0 0
    %446 = vmatprep.subr.bf16.mxu0 0
    %447 = vmatpush2.bf16.xpose.msra.mxu0 0
    %448 = vmatprep.subr.bf16.mxu0 0
    %449 = vmatpush2.bf16.xpose.msra.mxu0 0
    %450 = vmatprep.subr.bf16.mxu0 0
    %451 = vmatpush2.bf16.xpose.msra.mxu0 0
    %452 = vmatprep.mubr.bf16.mxu0 0
    %453 = vmatmul.mubr.bf16.gmra.mxu0 %v415
    %v454 = vpop.f32.mrf.mxu0
    %v455 = vadd.f32 0.0, %v454
    %v456 = vpop.f32.mrf.mxu0
    %v457 = vpop.f32.mrf.mxu0
    %v458 = vpop.f32.mrf.mxu0
    %459 = vdwg.mxu0
    %v461 = vsel %vm413, %v271, 0
    %v464 = vsel %vm413, %v339, 0
    %466 = vmatprep.subr.bf16.mxu0 0
    %467 = vmatpush1.bf16.xpose.msra.mxu0 0
    %468 = vmatprep.subr.bf16.mxu0 0
    %469 = vmatpush1.bf16.xpose.msra.mxu0 0
    %470 = vmatprep.subr.bf16.mxu0 0
    %471 = vmatpush1.bf16.xpose.msra.mxu0 0
    %472 = vmatprep.subr.bf16.mxu0 0
    %473 = vmatpush1.bf16.xpose.msra.mxu0 0
    %474 = vmatprep.subr.bf16.mxu0 0
    %475 = vmatpush1.bf16.xpose.msra.mxu0 0
    %476 = vmatprep.subr.bf16.mxu0 0
    %477 = vmatpush1.bf16.xpose.msra.mxu0 0
    %478 = vmatprep.subr.bf16.mxu0 0
    %479 = vmatpush1.bf16.xpose.msra.mxu0 0
    %480 = vmatprep.subr.bf16.mxu0 0
    %481 = vmatpush1.bf16.xpose.msra.mxu0 %v464
    %482 = vmatprep.subr.bf16.mxu0 0
    %483 = vmatpush2.bf16.xpose.msra.mxu0 0
    %484 = vmatprep.subr.bf16.mxu0 0
    %485 = vmatpush2.bf16.xpose.msra.mxu0 0
    %486 = vmatprep.subr.bf16.mxu0 0
    %487 = vmatpush2.bf16.xpose.msra.mxu0 0
    %488 = vmatprep.subr.bf16.mxu0 0
    %489 = vmatpush2.bf16.xpose.msra.mxu0 0
    %490 = vmatprep.subr.bf16.mxu0 0
    %491 = vmatpush2.bf16.xpose.msra.mxu0 0
    %492 = vmatprep.subr.bf16.mxu0 0
    %493 = vmatpush2.bf16.xpose.msra.mxu0 0
    %494 = vmatprep.subr.bf16.mxu0 0
    %495 = vmatpush2.bf16.xpose.msra.mxu0 0
    %496 = vmatprep.subr.bf16.mxu0 0
    %497 = vmatpush2.bf16.xpose.msra.mxu0 0
    %498 = vmatprep.mubr.bf16.mxu0 0
    %499 = vmatmul.mubr.bf16.gmra.mxu0 %v461
    %v500 = vpop.f32.mrf.mxu0
    %v501 = vadd.f32 0.0, %v500
    %v502 = vpop.f32.mrf.mxu0
    %v503 = vpop.f32.mrf.mxu0
    %v504 = vpop.f32.mrf.mxu0
    %505 = vdwg.mxu0
    %v506 = vmul.f32 %v455, 0.35355338
    %v507 = vmul.f32 %v501, 0.35355338
    %v510 = vlaneseq
    %v511 = vshrl.u32 %v510, 7
    %v512 = vsub.s32 0, %v511
    %v513 = vrot.slane %v411, %v512
    %v514 = vlaneseq
    %v515 = vshrl.u32 %v514, 7
    %v516 = vsub.s32 0, %v515
    %v517 = vrot.slane %v412, %v516
    %v520 = vadd.f32 %v506, %v513
    %v521 = vadd.f32 %v507, %v517
    %v522 = vsel %vm413, %v520, -inf
    %523 = vmax.xlane.f32.xlu0 %v522
    %v524 = vpop.xlane.xlu0 %523
    %v525 = vsel %vm413, %v521, -inf
    %526 = vmax.xlane.f32.xlu0 %v525
    %v527 = vpop.xlane.xlu0 %526
    %v528 = vsub.f32 %v520, %v524
    %v529 = vsub.f32 %v521, %v527
    %v530 = vmul.f32 %v528, 1.442695
    %v531 = vpow.pop %v530
    %v532 = vmul.f32 %v529, 1.442695
    %v533 = vpow.pop %v532
    %v534 = vsel %vm413, %v531, 0.0
    %535 = vadd.xlane.f32.xlu0 %v534
    %v536 = vpop.xlane.xlu0 %535
    %v537 = vsel %vm413, %v533, 0.0
    %538 = vadd.xlane.f32.xlu0 %v537
    %v539 = vpop.xlane.xlu0 %538
    %v540 = vrcp.pop %v536
    %v541 = vrcp.pop %v539
    %v542 = vmul.f32 %v531, %v540
    %v543 = vmul.f32 %v533, %v541
    %v544 = vpack.c.bf16 %v542, %v542
    %v545 = vpack.c.bf16 %v543, %v543
    %v547 = vsel %vm413, %v544, 0
    %vm549 = vcmask 1043456
    %v551 = vsel %vm549, %v409, 0
    %553 = vmatprep.subr.bf16.mxu0 0
    %554 = vmatpush1.bf16.msra.mxu0 0
    %555 = vmatprep.subr.bf16.mxu0 0
    %556 = vmatpush1.bf16.msra.mxu0 0
    %557 = vmatprep.subr.bf16.mxu0 0
    %558 = vmatpush1.bf16.msra.mxu0 0
    %559 = vmatprep.subr.bf16.mxu0 0
    %560 = vmatpush1.bf16.msra.mxu0 0
    %561 = vmatprep.subr.bf16.mxu0 0
    %562 = vmatpush1.bf16.msra.mxu0 0
    %563 = vmatprep.subr.bf16.mxu0 0
    %564 = vmatpush1.bf16.msra.mxu0 0
    %565 = vmatprep.subr.bf16.mxu0 0
    %566 = vmatpush1.bf16.msra.mxu0 0
    %567 = vmatprep.subr.bf16.mxu0 0
    %568 = vmatpush1.bf16.msra.mxu0 %v551
    %569 = vmatprep.subr.bf16.mxu0 0
    %570 = vmatpush2.bf16.msra.mxu0 0
    %571 = vmatprep.subr.bf16.mxu0 0
    %572 = vmatpush2.bf16.msra.mxu0 0
    %573 = vmatprep.subr.bf16.mxu0 0
    %574 = vmatpush2.bf16.msra.mxu0 0
    %575 = vmatprep.subr.bf16.mxu0 0
    %576 = vmatpush2.bf16.msra.mxu0 0
    %577 = vmatprep.subr.bf16.mxu0 0
    %578 = vmatpush2.bf16.msra.mxu0 0
    %579 = vmatprep.subr.bf16.mxu0 0
    %580 = vmatpush2.bf16.msra.mxu0 0
    %581 = vmatprep.subr.bf16.mxu0 0
    %582 = vmatpush2.bf16.msra.mxu0 0
    %583 = vmatprep.subr.bf16.mxu0 0
    %584 = vmatpush2.bf16.msra.mxu0 0
    %585 = vmatprep.mubr.bf16.mxu0 0
    %586 = vmatmul.mubr.bf16.gmra.mxu0 %v547
    %v587 = vpop.f32.mrf.mxu0
    %v588 = vadd.f32 0.0, %v587
    %v589 = vpop.f32.mrf.mxu0
    %v590 = vpop.f32.mrf.mxu0
    %v591 = vpop.f32.mrf.mxu0
    %592 = vdwg.mxu0
    %v594 = vsel %vm413, %v545, 0
    %v597 = vsel %vm549, %v410, 0
    %599 = vmatprep.subr.bf16.mxu0 0
    %600 = vmatpush1.bf16.msra.mxu0 0
    %601 = vmatprep.subr.bf16.mxu0 0
    %602 = vmatpush1.bf16.msra.mxu0 0
    %603 = vmatprep.subr.bf16.mxu0 0
    %604 = vmatpush1.bf16.msra.mxu0 0
    %605 = vmatprep.subr.bf16.mxu0 0
    %606 = vmatpush1.bf16.msra.mxu0 0
    %607 = vmatprep.subr.bf16.mxu0 0
    %608 = vmatpush1.bf16.msra.mxu0 0
    %609 = vmatprep.subr.bf16.mxu0 0
    %610 = vmatpush1.bf16.msra.mxu0 0
    %611 = vmatprep.subr.bf16.mxu0 0
    %612 = vmatpush1.bf16.msra.mxu0 0
    %613 = vmatprep.subr.bf16.mxu0 0
    %614 = vmatpush1.bf16.msra.mxu0 %v597
    %615 = vmatprep.subr.bf16.mxu0 0
    %616 = vmatpush2.bf16.msra.mxu0 0
    %617 = vmatprep.subr.bf16.mxu0 0
    %618 = vmatpush2.bf16.msra.mxu0 0
    %619 = vmatprep.subr.bf16.mxu0 0
    %620 = vmatpush2.bf16.msra.mxu0 0
    %621 = vmatprep.subr.bf16.mxu0 0
    %622 = vmatpush2.bf16.msra.mxu0 0
    %623 = vmatprep.subr.bf16.mxu0 0
    %624 = vmatpush2.bf16.msra.mxu0 0
    %625 = vmatprep.subr.bf16.mxu0 0
    %626 = vmatpush2.bf16.msra.mxu0 0
    %627 = vmatprep.subr.bf16.mxu0 0
    %628 = vmatpush2.bf16.msra.mxu0 0
    %629 = vmatprep.subr.bf16.mxu0 0
    %630 = vmatpush2.bf16.msra.mxu0 0
    %631 = vmatprep.mubr.bf16.mxu0 0
    %632 = vmatmul.mubr.bf16.gmra.mxu0 %v594
    %v633 = vpop.f32.mrf.mxu0
    %v634 = vadd.f32 0.0, %v633
    %v635 = vpop.f32.mrf.mxu0
    %v636 = vpop.f32.mrf.mxu0
    %v637 = vpop.f32.mrf.mxu0
    %638 = vdwg.mxu0
    %639 = vrot.lane.b32.xlu0 %v270, 120
    %v640 = vpop.permute.xlu0 %639
    %641 = vrot.lane.b32.xlu0 %v338, 120
    %v642 = vpop.permute.xlu0 %641
    %v644 = vsel %vm413, %v640, 0
    %v647 = vsel %vm413, %v642, 0
    %649 = vmatprep.subr.bf16.mxu0 0
    %650 = vmatpush1.bf16.xpose.msra.mxu0 0
    %651 = vmatprep.subr.bf16.mxu0 0
    %652 = vmatpush1.bf16.xpose.msra.mxu0 0
    %653 = vmatprep.subr.bf16.mxu0 0
    %654 = vmatpush1.bf16.xpose.msra.mxu0 0
    %655 = vmatprep.subr.bf16.mxu0 0
    %656 = vmatpush1.bf16.xpose.msra.mxu0 0
    %657 = vmatprep.subr.bf16.mxu0 0
    %658 = vmatpush1.bf16.xpose.msra.mxu0 0
    %659 = vmatprep.subr.bf16.mxu0 0
    %660 = vmatpush1.bf16.xpose.msra.mxu0 0
    %661 = vmatprep.subr.bf16.mxu0 0
    %662 = vmatpush1.bf16.xpose.msra.mxu0 0
    %663 = vmatprep.subr.bf16.mxu0 0
    %664 = vmatpush1.bf16.xpose.msra.mxu0 %v647
    %665 = vmatprep.subr.bf16.mxu0 0
    %666 = vmatpush2.bf16.xpose.msra.mxu0 0
    %667 = vmatprep.subr.bf16.mxu0 0
    %668 = vmatpush2.bf16.xpose.msra.mxu0 0
    %669 = vmatprep.subr.bf16.mxu0 0
    %670 = vmatpush2.bf16.xpose.msra.mxu0 0
    %671 = vmatprep.subr.bf16.mxu0 0
    %672 = vmatpush2.bf16.xpose.msra.mxu0 0
    %673 = vmatprep.subr.bf16.mxu0 0
    %674 = vmatpush2.bf16.xpose.msra.mxu0 0
    %675 = vmatprep.subr.bf16.mxu0 0
    %676 = vmatpush2.bf16.xpose.msra.mxu0 0
    %677 = vmatprep.subr.bf16.mxu0 0
    %678 = vmatpush2.bf16.xpose.msra.mxu0 0
    %679 = vmatprep.subr.bf16.mxu0 0
    %680 = vmatpush2.bf16.xpose.msra.mxu0 0
    %681 = vmatprep.mubr.bf16.mxu0 0
    %682 = vmatmul.mubr.bf16.gmra.mxu0 %v644
    %v683 = vpop.f32.mrf.mxu0
    %v684 = vadd.f32 0.0, %v683
    %v685 = vpop.f32.mrf.mxu0
    %v686 = vpop.f32.mrf.mxu0
    %v687 = vpop.f32.mrf.mxu0
    %688 = vdwg.mxu0
    %689 = vrot.lane.b32.xlu0 %v271, 120
    %v690 = vpop.permute.xlu0 %689
    %691 = vrot.lane.b32.xlu0 %v339, 120
    %v692 = vpop.permute.xlu0 %691
    %v694 = vsel %vm413, %v690, 0
    %v697 = vsel %vm413, %v692, 0
    %699 = vmatprep.subr.bf16.mxu0 0
    %700 = vmatpush1.bf16.xpose.msra.mxu0 0
    %701 = vmatprep.subr.bf16.mxu0 0
    %702 = vmatpush1.bf16.xpose.msra.mxu0 0
    %703 = vmatprep.subr.bf16.mxu0 0
    %704 = vmatpush1.bf16.xpose.msra.mxu0 0
    %705 = vmatprep.subr.bf16.mxu0 0
    %706 = vmatpush1.bf16.xpose.msra.mxu0 0
    %707 = vmatprep.subr.bf16.mxu0 0
    %708 = vmatpush1.bf16.xpose.msra.mxu0 0
    %709 = vmatprep.subr.bf16.mxu0 0
    %710 = vmatpush1.bf16.xpose.msra.mxu0 0
    %711 = vmatprep.subr.bf16.mxu0 0
    %712 = vmatpush1.bf16.xpose.msra.mxu0 0
    %713 = vmatprep.subr.bf16.mxu0 0
    %714 = vmatpush1.bf16.xpose.msra.mxu0 %v697
    %715 = vmatprep.subr.bf16.mxu0 0
    %716 = vmatpush2.bf16.xpose.msra.mxu0 0
    %717 = vmatprep.subr.bf16.mxu0 0
    %718 = vmatpush2.bf16.xpose.msra.mxu0 0
    %719 = vmatprep.subr.bf16.mxu0 0
    %720 = vmatpush2.bf16.xpose.msra.mxu0 0
    %721 = vmatprep.subr.bf16.mxu0 0
    %722 = vmatpush2.bf16.xpose.msra.mxu0 0
    %723 = vmatprep.subr.bf16.mxu0 0
    %724 = vmatpush2.bf16.xpose.msra.mxu0 0
    %725 = vmatprep.subr.bf16.mxu0 0
    %726 = vmatpush2.bf16.xpose.msra.mxu0 0
    %727 = vmatprep.subr.bf16.mxu0 0
    %728 = vmatpush2.bf16.xpose.msra.mxu0 0
    %729 = vmatprep.subr.bf16.mxu0 0
    %730 = vmatpush2.bf16.xpose.msra.mxu0 0
    %731 = vmatprep.mubr.bf16.mxu0 0
    %732 = vmatmul.mubr.bf16.gmra.mxu0 %v694
    %v733 = vpop.f32.mrf.mxu0
    %v734 = vadd.f32 0.0, %v733
    %v735 = vpop.f32.mrf.mxu0
    %v736 = vpop.f32.mrf.mxu0
    %v737 = vpop.f32.mrf.mxu0
    %738 = vdwg.mxu0
    %v739 = vmul.f32 %v684, 0.35355338
    %v740 = vmul.f32 %v734, 0.35355338
    %v741 = vadd.f32 %v739, %v513
    %v742 = vadd.f32 %v740, %v517
    %v743 = vsel %vm413, %v741, -inf
    %744 = vmax.xlane.f32.xlu0 %v743
    %v745 = vpop.xlane.xlu0 %744
    %v746 = vsel %vm413, %v742, -inf
    %747 = vmax.xlane.f32.xlu0 %v746
    %v748 = vpop.xlane.xlu0 %747
    %v749 = vsub.f32 %v741, %v745
    %v750 = vsub.f32 %v742, %v748
    %v751 = vmul.f32 %v749, 1.442695
    %v752 = vpow.pop %v751
    %v753 = vmul.f32 %v750, 1.442695
    %v754 = vpow.pop %v753
    %v755 = vsel %vm413, %v752, 0.0
    %756 = vadd.xlane.f32.xlu0 %v755
    %v757 = vpop.xlane.xlu0 %756
    %v758 = vsel %vm413, %v754, 0.0
    %759 = vadd.xlane.f32.xlu0 %v758
    %v760 = vpop.xlane.xlu0 %759
    %v761 = vrcp.pop %v757
    %v762 = vrcp.pop %v760
    %v763 = vmul.f32 %v752, %v761
    %v764 = vmul.f32 %v754, %v762
    %v765 = vpack.c.bf16 %v763, %v763
    %v766 = vpack.c.bf16 %v764, %v764
    %767 = vrot.lane.b32.xlu0 %v409, 120
    %v768 = vpop.permute.xlu0 %767
    %v770 = vsel %vm413, %v765, 0
    %v773 = vsel %vm549, %v768, 0
    %775 = vmatprep.subr.bf16.mxu0 0
    %776 = vmatpush1.bf16.msra.mxu0 0
    %777 = vmatprep.subr.bf16.mxu0 0
    %778 = vmatpush1.bf16.msra.mxu0 0
    %779 = vmatprep.subr.bf16.mxu0 0
    %780 = vmatpush1.bf16.msra.mxu0 0
    %781 = vmatprep.subr.bf16.mxu0 0
    %782 = vmatpush1.bf16.msra.mxu0 0
    %783 = vmatprep.subr.bf16.mxu0 0
    %784 = vmatpush1.bf16.msra.mxu0 0
    %785 = vmatprep.subr.bf16.mxu0 0
    %786 = vmatpush1.bf16.msra.mxu0 0
    %787 = vmatprep.subr.bf16.mxu0 0
    %788 = vmatpush1.bf16.msra.mxu0 0
    %789 = vmatprep.subr.bf16.mxu0 0
    %790 = vmatpush1.bf16.msra.mxu0 %v773
    %791 = vmatprep.subr.bf16.mxu0 0
    %792 = vmatpush2.bf16.msra.mxu0 0
    %793 = vmatprep.subr.bf16.mxu0 0
    %794 = vmatpush2.bf16.msra.mxu0 0
    %795 = vmatprep.subr.bf16.mxu0 0
    %796 = vmatpush2.bf16.msra.mxu0 0
    %797 = vmatprep.subr.bf16.mxu0 0
    %798 = vmatpush2.bf16.msra.mxu0 0
    %799 = vmatprep.subr.bf16.mxu0 0
    %800 = vmatpush2.bf16.msra.mxu0 0
    %801 = vmatprep.subr.bf16.mxu0 0
    %802 = vmatpush2.bf16.msra.mxu0 0
    %803 = vmatprep.subr.bf16.mxu0 0
    %804 = vmatpush2.bf16.msra.mxu0 0
    %805 = vmatprep.subr.bf16.mxu0 0
    %806 = vmatpush2.bf16.msra.mxu0 0
    %807 = vmatprep.mubr.bf16.mxu0 0
    %808 = vmatmul.mubr.bf16.gmra.mxu0 %v770
    %v809 = vpop.f32.mrf.mxu0
    %v810 = vadd.f32 0.0, %v809
    %v811 = vpop.f32.mrf.mxu0
    %v812 = vpop.f32.mrf.mxu0
    %v813 = vpop.f32.mrf.mxu0
    %814 = vdwg.mxu0
    %815 = vrot.lane.b32.xlu0 %v410, 120
    %v816 = vpop.permute.xlu0 %815
    %v818 = vsel %vm413, %v766, 0
    %v821 = vsel %vm549, %v816, 0
    %823 = vmatprep.subr.bf16.mxu0 0
    %824 = vmatpush1.bf16.msra.mxu0 0
    %825 = vmatprep.subr.bf16.mxu0 0
    %826 = vmatpush1.bf16.msra.mxu0 0
    %827 = vmatprep.subr.bf16.mxu0 0
    %828 = vmatpush1.bf16.msra.mxu0 0
    %829 = vmatprep.subr.bf16.mxu0 0
    %830 = vmatpush1.bf16.msra.mxu0 0
    %831 = vmatprep.subr.bf16.mxu0 0
    %832 = vmatpush1.bf16.msra.mxu0 0
    %833 = vmatprep.subr.bf16.mxu0 0
    %834 = vmatpush1.bf16.msra.mxu0 0
    %835 = vmatprep.subr.bf16.mxu0 0
    %836 = vmatpush1.bf16.msra.mxu0 0
    %837 = vmatprep.subr.bf16.mxu0 0
    %838 = vmatpush1.bf16.msra.mxu0 %v821
    %839 = vmatprep.subr.bf16.mxu0 0
    %840 = vmatpush2.bf16.msra.mxu0 0
    %841 = vmatprep.subr.bf16.mxu0 0
    %842 = vmatpush2.bf16.msra.mxu0 0
    %843 = vmatprep.subr.bf16.mxu0 0
    %844 = vmatpush2.bf16.msra.mxu0 0
    %845 = vmatprep.subr.bf16.mxu0 0
    %846 = vmatpush2.bf16.msra.mxu0 0
    %847 = vmatprep.subr.bf16.mxu0 0
    %848 = vmatpush2.bf16.msra.mxu0 0
    %849 = vmatprep.subr.bf16.mxu0 0
    %850 = vmatpush2.bf16.msra.mxu0 0
    %851 = vmatprep.subr.bf16.mxu0 0
    %852 = vmatpush2.bf16.msra.mxu0 0
    %853 = vmatprep.subr.bf16.mxu0 0
    %854 = vmatpush2.bf16.msra.mxu0 0
    %855 = vmatprep.mubr.bf16.mxu0 0
    %856 = vmatmul.mubr.bf16.gmra.mxu0 %v818
    %v857 = vpop.f32.mrf.mxu0
    %v858 = vadd.f32 0.0, %v857
    %v859 = vpop.f32.mrf.mxu0
    %v860 = vpop.f32.mrf.mxu0
    %v861 = vpop.f32.mrf.mxu0
    %862 = vdwg.mxu0
    %863 = vrot.lane.b32.xlu0 %v270, 112
    %v864 = vpop.permute.xlu0 %863
    %865 = vrot.lane.b32.xlu0 %v338, 112
    %v866 = vpop.permute.xlu0 %865
    %v868 = vsel %vm413, %v864, 0
    %v871 = vsel %vm413, %v866, 0
    %873 = vmatprep.subr.bf16.mxu0 0
    %874 = vmatpush1.bf16.xpose.msra.mxu0 0
    %875 = vmatprep.subr.bf16.mxu0 0
    %876 = vmatpush1.bf16.xpose.msra.mxu0 0
    %877 = vmatprep.subr.bf16.mxu0 0
    %878 = vmatpush1.bf16.xpose.msra.mxu0 0
    %879 = vmatprep.subr.bf16.mxu0 0
    %880 = vmatpush1.bf16.xpose.msra.mxu0 0
    %881 = vmatprep.subr.bf16.mxu0 0
    %882 = vmatpush1.bf16.xpose.msra.mxu0 0
    %883 = vmatprep.subr.bf16.mxu0 0
    %884 = vmatpush1.bf16.xpose.msra.mxu0 0
    %885 = vmatprep.subr.bf16.mxu0 0
    %886 = vmatpush1.bf16.xpose.msra.mxu0 0
    %887 = vmatprep.subr.bf16.mxu0 0
    %888 = vmatpush1.bf16.xpose.msra.mxu0 %v871
    %889 = vmatprep.subr.bf16.mxu0 0
    %890 = vmatpush2.bf16.xpose.msra.mxu0 0
    %891 = vmatprep.subr.bf16.mxu0 0
    %892 = vmatpush2.bf16.xpose.msra.mxu0 0
    %893 = vmatprep.subr.bf16.mxu0 0
    %894 = vmatpush2.bf16.xpose.msra.mxu0 0
    %895 = vmatprep.subr.bf16.mxu0 0
    %896 = vmatpush2.bf16.xpose.msra.mxu0 0
    %897 = vmatprep.subr.bf16.mxu0 0
    %898 = vmatpush2.bf16.xpose.msra.mxu0 0
    %899 = vmatprep.subr.bf16.mxu0 0
    %900 = vmatpush2.bf16.xpose.msra.mxu0 0
    %901 = vmatprep.subr.bf16.mxu0 0
    %902 = vmatpush2.bf16.xpose.msra.mxu0 0
    %903 = vmatprep.subr.bf16.mxu0 0
    %904 = vmatpush2.bf16.xpose.msra.mxu0 0
    %905 = vmatprep.mubr.bf16.mxu0 0
    %906 = vmatmul.mubr.bf16.gmra.mxu0 %v868
    %v907 = vpop.f32.mrf.mxu0
    %v908 = vadd.f32 0.0, %v907
    %v909 = vpop.f32.mrf.mxu0
    %v910 = vpop.f32.mrf.mxu0
    %v911 = vpop.f32.mrf.mxu0
    %912 = vdwg.mxu0
    %913 = vrot.lane.b32.xlu0 %v271, 112
    %v914 = vpop.permute.xlu0 %913
    %915 = vrot.lane.b32.xlu0 %v339, 112
    %v916 = vpop.permute.xlu0 %915
    %v918 = vsel %vm413, %v914, 0
    %v921 = vsel %vm413, %v916, 0
    %923 = vmatprep.subr.bf16.mxu0 0
    %924 = vmatpush1.bf16.xpose.msra.mxu0 0
    %925 = vmatprep.subr.bf16.mxu0 0
    %926 = vmatpush1.bf16.xpose.msra.mxu0 0
    %927 = vmatprep.subr.bf16.mxu0 0
    %928 = vmatpush1.bf16.xpose.msra.mxu0 0
    %929 = vmatprep.subr.bf16.mxu0 0
    %930 = vmatpush1.bf16.xpose.msra.mxu0 0
    %931 = vmatprep.subr.bf16.mxu0 0
    %932 = vmatpush1.bf16.xpose.msra.mxu0 0
    %933 = vmatprep.subr.bf16.mxu0 0
    %934 = vmatpush1.bf16.xpose.msra.mxu0 0
    %935 = vmatprep.subr.bf16.mxu0 0
    %936 = vmatpush1.bf16.xpose.msra.mxu0 0
    %937 = vmatprep.subr.bf16.mxu0 0
    %938 = vmatpush1.bf16.xpose.msra.mxu0 %v921
    %939 = vmatprep.subr.bf16.mxu0 0
    %940 = vmatpush2.bf16.xpose.msra.mxu0 0
    %941 = vmatprep.subr.bf16.mxu0 0
    %942 = vmatpush2.bf16.xpose.msra.mxu0 0
    %943 = vmatprep.subr.bf16.mxu0 0
    %944 = vmatpush2.bf16.xpose.msra.mxu0 0
    %945 = vmatprep.subr.bf16.mxu0 0
    %946 = vmatpush2.bf16.xpose.msra.mxu0 0
    %947 = vmatprep.subr.bf16.mxu0 0
    %948 = vmatpush2.bf16.xpose.msra.mxu0 0
    %949 = vmatprep.subr.bf16.mxu0 0
    %950 = vmatpush2.bf16.xpose.msra.mxu0 0
    %951 = vmatprep.subr.bf16.mxu0 0
    %952 = vmatpush2.bf16.xpose.msra.mxu0 0
    %953 = vmatprep.subr.bf16.mxu0 0
    %954 = vmatpush2.bf16.xpose.msra.mxu0 0
    %955 = vmatprep.mubr.bf16.mxu0 0
    %956 = vmatmul.mubr.bf16.gmra.mxu0 %v918
    %v957 = vpop.f32.mrf.mxu0
    %v958 = vadd.f32 0.0, %v957
    %v959 = vpop.f32.mrf.mxu0
    %v960 = vpop.f32.mrf.mxu0
    %v961 = vpop.f32.mrf.mxu0
    %962 = vdwg.mxu0
    %v963 = vmul.f32 %v908, 0.35355338
    %v964 = vmul.f32 %v958, 0.35355338
    %v965 = vadd.f32 %v963, %v513
    %v966 = vadd.f32 %v964, %v517
    %v967 = vsel %vm413, %v965, -inf
    %968 = vmax.xlane.f32.xlu0 %v967
    %v969 = vpop.xlane.xlu0 %968
    %v970 = vsel %vm413, %v966, -inf
    %971 = vmax.xlane.f32.xlu0 %v970
    %v972 = vpop.xlane.xlu0 %971
    %v973 = vsub.f32 %v965, %v969
    %v974 = vsub.f32 %v966, %v972
    %v975 = vmul.f32 %v973, 1.442695
    %v976 = vpow.pop %v975
    %v977 = vmul.f32 %v974, 1.442695
    %v978 = vpow.pop %v977
    %v979 = vsel %vm413, %v976, 0.0
    %980 = vadd.xlane.f32.xlu0 %v979
    %v981 = vpop.xlane.xlu0 %980
    %v982 = vsel %vm413, %v978, 0.0
    %983 = vadd.xlane.f32.xlu0 %v982
    %v984 = vpop.xlane.xlu0 %983
    %v985 = vrcp.pop %v981
    %v986 = vrcp.pop %v984
    %v987 = vmul.f32 %v976, %v985
    %v988 = vmul.f32 %v978, %v986
    %v989 = vpack.c.bf16 %v987, %v987
    %v990 = vpack.c.bf16 %v988, %v988
    %991 = vrot.lane.b32.xlu0 %v409, 112
    %v992 = vpop.permute.xlu0 %991
    %v994 = vsel %vm413, %v989, 0
    %v997 = vsel %vm549, %v992, 0
    %999 = vmatprep.subr.bf16.mxu0 0
    %1000 = vmatpush1.bf16.msra.mxu0 0
    %1001 = vmatprep.subr.bf16.mxu0 0
    %1002 = vmatpush1.bf16.msra.mxu0 0
    %1003 = vmatprep.subr.bf16.mxu0 0
    %1004 = vmatpush1.bf16.msra.mxu0 0
    %1005 = vmatprep.subr.bf16.mxu0 0
    %1006 = vmatpush1.bf16.msra.mxu0 0
    %1007 = vmatprep.subr.bf16.mxu0 0
    %1008 = vmatpush1.bf16.msra.mxu0 0
    %1009 = vmatprep.subr.bf16.mxu0 0
    %1010 = vmatpush1.bf16.msra.mxu0 0
    %1011 = vmatprep.subr.bf16.mxu0 0
    %1012 = vmatpush1.bf16.msra.mxu0 0
    %1013 = vmatprep.subr.bf16.mxu0 0
    %1014 = vmatpush1.bf16.msra.mxu0 %v997
    %1015 = vmatprep.subr.bf16.mxu0 0
    %1016 = vmatpush2.bf16.msra.mxu0 0
    %1017 = vmatprep.subr.bf16.mxu0 0
    %1018 = vmatpush2.bf16.msra.mxu0 0
    %1019 = vmatprep.subr.bf16.mxu0 0
    %1020 = vmatpush2.bf16.msra.mxu0 0
    %1021 = vmatprep.subr.bf16.mxu0 0
    %1022 = vmatpush2.bf16.msra.mxu0 0
    %1023 = vmatprep.subr.bf16.mxu0 0
    %1024 = vmatpush2.bf16.msra.mxu0 0
    %1025 = vmatprep.subr.bf16.mxu0 0
    %1026 = vmatpush2.bf16.msra.mxu0 0
    %1027 = vmatprep.subr.bf16.mxu0 0
    %1028 = vmatpush2.bf16.msra.mxu0 0
    %1029 = vmatprep.subr.bf16.mxu0 0
    %1030 = vmatpush2.bf16.msra.mxu0 0
    %1031 = vmatprep.mubr.bf16.mxu0 0
    %1032 = vmatmul.mubr.bf16.gmra.mxu0 %v994
    %v1033 = vpop.f32.mrf.mxu0
    %v1034 = vadd.f32 0.0, %v1033
    %v1035 = vpop.f32.mrf.mxu0
    %v1036 = vpop.f32.mrf.mxu0
    %v1037 = vpop.f32.mrf.mxu0
    %1038 = vdwg.mxu0
    %1039 = vrot.lane.b32.xlu0 %v410, 112
    %v1040 = vpop.permute.xlu0 %1039
    %v1042 = vsel %vm413, %v990, 0
    %v1045 = vsel %vm549, %v1040, 0
    %1047 = vmatprep.subr.bf16.mxu0 0
    %1048 = vmatpush1.bf16.msra.mxu0 0
    %1049 = vmatprep.subr.bf16.mxu0 0
    %1050 = vmatpush1.bf16.msra.mxu0 0
    %1051 = vmatprep.subr.bf16.mxu0 0
    %1052 = vmatpush1.bf16.msra.mxu0 0
    %1053 = vmatprep.subr.bf16.mxu0 0
    %1054 = vmatpush1.bf16.msra.mxu0 0
    %1055 = vmatprep.subr.bf16.mxu0 0
    %1056 = vmatpush1.bf16.msra.mxu0 0
    %1057 = vmatprep.subr.bf16.mxu0 0
    %1058 = vmatpush1.bf16.msra.mxu0 0
    %1059 = vmatprep.subr.bf16.mxu0 0
    %1060 = vmatpush1.bf16.msra.mxu0 0
    %1061 = vmatprep.subr.bf16.mxu0 0
    %1062 = vmatpush1.bf16.msra.mxu0 %v1045
    %1063 = vmatprep.subr.bf16.mxu0 0
    %1064 = vmatpush2.bf16.msra.mxu0 0
    %1065 = vmatprep.subr.bf16.mxu0 0
    %1066 = vmatpush2.bf16.msra.mxu0 0
    %1067 = vmatprep.subr.bf16.mxu0 0
    %1068 = vmatpush2.bf16.msra.mxu0 0
    %1069 = vmatprep.subr.bf16.mxu0 0
    %1070 = vmatpush2.bf16.msra.mxu0 0
    %1071 = vmatprep.subr.bf16.mxu0 0
    %1072 = vmatpush2.bf16.msra.mxu0 0
    %1073 = vmatprep.subr.bf16.mxu0 0
    %1074 = vmatpush2.bf16.msra.mxu0 0
    %1075 = vmatprep.subr.bf16.mxu0 0
    %1076 = vmatpush2.bf16.msra.mxu0 0
    %1077 = vmatprep.subr.bf16.mxu0 0
    %1078 = vmatpush2.bf16.msra.mxu0 0
    %1079 = vmatprep.mubr.bf16.mxu0 0
    %1080 = vmatmul.mubr.bf16.gmra.mxu0 %v1042
    %v1081 = vpop.f32.mrf.mxu0
    %v1082 = vadd.f32 0.0, %v1081
    %v1083 = vpop.f32.mrf.mxu0
    %v1084 = vpop.f32.mrf.mxu0
    %v1085 = vpop.f32.mrf.mxu0
    %1086 = vdwg.mxu0
    %1087 = vrot.lane.b32.xlu0 %v270, 104
    %v1088 = vpop.permute.xlu0 %1087
    %1089 = vrot.lane.b32.xlu0 %v338, 104
    %v1090 = vpop.permute.xlu0 %1089
    %v1092 = vsel %vm413, %v1088, 0
    %v1095 = vsel %vm413, %v1090, 0
    %1097 = vmatprep.subr.bf16.mxu0 0
    %1098 = vmatpush1.bf16.xpose.msra.mxu0 0
    %1099 = vmatprep.subr.bf16.mxu0 0
    %1100 = vmatpush1.bf16.xpose.msra.mxu0 0
    %1101 = vmatprep.subr.bf16.mxu0 0
    %1102 = vmatpush1.bf16.xpose.msra.mxu0 0
    %1103 = vmatprep.subr.bf16.mxu0 0
    %1104 = vmatpush1.bf16.xpose.msra.mxu0 0
    %1105 = vmatprep.subr.bf16.mxu0 0
    %1106 = vmatpush1.bf16.xpose.msra.mxu0 0
    %1107 = vmatprep.subr.bf16.mxu0 0
    %1108 = vmatpush1.bf16.xpose.msra.mxu0 0
    %1109 = vmatprep.subr.bf16.mxu0 0
    %1110 = vmatpush1.bf16.xpose.msra.mxu0 0
    %1111 = vmatprep.subr.bf16.mxu0 0
    %1112 = vmatpush1.bf16.xpose.msra.mxu0 %v1095
    %1113 = vmatprep.subr.bf16.mxu0 0
    %1114 = vmatpush2.bf16.xpose.msra.mxu0 0
    %1115 = vmatprep.subr.bf16.mxu0 0
    %1116 = vmatpush2.bf16.xpose.msra.mxu0 0
    %1117 = vmatprep.subr.bf16.mxu0 0
    %1118 = vmatpush2.bf16.xpose.msra.mxu0 0
    %1119 = vmatprep.subr.bf16.mxu0 0
    %1120 = vmatpush2.bf16.xpose.msra.mxu0 0
    %1121 = vmatprep.subr.bf16.mxu0 0
    %1122 = vmatpush2.bf16.xpose.msra.mxu0 0
    %1123 = vmatprep.subr.bf16.mxu0 0
    %1124 = vmatpush2.bf16.xpose.msra.mxu0 0
    %1125 = vmatprep.subr.bf16.mxu0 0
    %1126 = vmatpush2.bf16.xpose.msra.mxu0 0
    %1127 = vmatprep.subr.bf16.mxu0 0
    %1128 = vmatpush2.bf16.xpose.msra.mxu0 0
    %1129 = vmatprep.mubr.bf16.mxu0 0
    %1130 = vmatmul.mubr.bf16.gmra.mxu0 %v1092
    %v1131 = vpop.f32.mrf.mxu0
    %v1132 = vadd.f32 0.0, %v1131
    %v1133 = vpop.f32.mrf.mxu0
    %v1134 = vpop.f32.mrf.mxu0
    %v1135 = vpop.f32.mrf.mxu0
    %1136 = vdwg.mxu0
    %1137 = vrot.lane.b32.xlu0 %v271, 104
    %v1138 = vpop.permute.xlu0 %1137
    %1139 = vrot.lane.b32.xlu0 %v339, 104
    %v1140 = vpop.permute.xlu0 %1139
    %v1142 = vsel %vm413, %v1138, 0
    %v1145 = vsel %vm413, %v1140, 0
    %1147 = vmatprep.subr.bf16.mxu0 0
    %1148 = vmatpush1.bf16.xpose.msra.mxu0 0
    %1149 = vmatprep.subr.bf16.mxu0 0
    %1150 = vmatpush1.bf16.xpose.msra.mxu0 0
    %1151 = vmatprep.subr.bf16.mxu0 0
    %1152 = vmatpush1.bf16.xpose.msra.mxu0 0
    %1153 = vmatprep.subr.bf16.mxu0 0
    %1154 = vmatpush1.bf16.xpose.msra.mxu0 0
    %1155 = vmatprep.subr.bf16.mxu0 0
    %1156 = vmatpush1.bf16.xpose.msra.mxu0 0
    %1157 = vmatprep.subr.bf16.mxu0 0
    %1158 = vmatpush1.bf16.xpose.msra.mxu0 0
    %1159 = vmatprep.subr.bf16.mxu0 0
    %1160 = vmatpush1.bf16.xpose.msra.mxu0 0
    %1161 = vmatprep.subr.bf16.mxu0 0
    %1162 = vmatpush1.bf16.xpose.msra.mxu0 %v1145
    %1163 = vmatprep.subr.bf16.mxu0 0
    %1164 = vmatpush2.bf16.xpose.msra.mxu0 0
    %1165 = vmatprep.subr.bf16.mxu0 0
    %1166 = vmatpush2.bf16.xpose.msra.mxu0 0
    %1167 = vmatprep.subr.bf16.mxu0 0
    %1168 = vmatpush2.bf16.xpose.msra.mxu0 0
    %1169 = vmatprep.subr.bf16.mxu0 0
    %1170 = vmatpush2.bf16.xpose.msra.mxu0 0
    %1171 = vmatprep.subr.bf16.mxu0 0
    %1172 = vmatpush2.bf16.xpose.msra.mxu0 0
    %1173 = vmatprep.subr.bf16.mxu0 0
    %1174 = vmatpush2.bf16.xpose.msra.mxu0 0
    %1175 = vmatprep.subr.bf16.mxu0 0
    %1176 = vmatpush2.bf16.xpose.msra.mxu0 0
    %1177 = vmatprep.subr.bf16.mxu0 0
    %1178 = vmatpush2.bf16.xpose.msra.mxu0 0
    %1179 = vmatprep.mubr.bf16.mxu0 0
    %1180 = vmatmul.mubr.bf16.gmra.mxu0 %v1142
    %v1181 = vpop.f32.mrf.mxu0
    %v1182 = vadd.f32 0.0, %v1181
    %v1183 = vpop.f32.mrf.mxu0
    %v1184 = vpop.f32.mrf.mxu0
    %v1185 = vpop.f32.mrf.mxu0
    %1186 = vdwg.mxu0
    %v1187 = vmul.f32 %v1132, 0.35355338
    %v1188 = vmul.f32 %v1182, 0.35355338
    %v1189 = vadd.f32 %v1187, %v513
    %v1190 = vadd.f32 %v1188, %v517
    %v1191 = vsel %vm413, %v1189, -inf
    %1192 = vmax.xlane.f32.xlu0 %v1191
    %v1193 = vpop.xlane.xlu0 %1192
    %v1194 = vsel %vm413, %v1190, -inf
    %1195 = vmax.xlane.f32.xlu0 %v1194
    %v1196 = vpop.xlane.xlu0 %1195
    %v1197 = vsub.f32 %v1189, %v1193
    %v1198 = vsub.f32 %v1190, %v1196
    %v1199 = vmul.f32 %v1197, 1.442695
    %v1200 = vpow.pop %v1199
    %v1201 = vmul.f32 %v1198, 1.442695
    %v1202 = vpow.pop %v1201
    %v1203 = vsel %vm413, %v1200, 0.0
    %1204 = vadd.xlane.f32.xlu0 %v1203
    %v1205 = vpop.xlane.xlu0 %1204
    %v1206 = vsel %vm413, %v1202, 0.0
    %1207 = vadd.xlane.f32.xlu0 %v1206
    %v1208 = vpop.xlane.xlu0 %1207
    %v1209 = vrcp.pop %v1205
    %v1210 = vrcp.pop %v1208
    %v1211 = vmul.f32 %v1200, %v1209
    %v1212 = vmul.f32 %v1202, %v1210
    %v1213 = vpack.c.bf16 %v1211, %v1211
    %v1214 = vpack.c.bf16 %v1212, %v1212
    %1215 = vrot.lane.b32.xlu0 %v409, 104
    %v1216 = vpop.permute.xlu0 %1215
    %v1218 = vsel %vm413, %v1213, 0
    %v1221 = vsel %vm549, %v1216, 0
    %1223 = vmatprep.subr.bf16.mxu0 0
    %1224 = vmatpush1.bf16.msra.mxu0 0
    %1225 = vmatprep.subr.bf16.mxu0 0
    %1226 = vmatpush1.bf16.msra.mxu0 0
    %1227 = vmatprep.subr.bf16.mxu0 0
    %1228 = vmatpush1.bf16.msra.mxu0 0
    %1229 = vmatprep.subr.bf16.mxu0 0
    %1230 = vmatpush1.bf16.msra.mxu0 0
    %1231 = vmatprep.subr.bf16.mxu0 0
    %1232 = vmatpush1.bf16.msra.mxu0 0
    %1233 = vmatprep.subr.bf16.mxu0 0
    %1234 = vmatpush1.bf16.msra.mxu0 0
    %1235 = vmatprep.subr.bf16.mxu0 0
    %1236 = vmatpush1.bf16.msra.mxu0 0
    %1237 = vmatprep.subr.bf16.mxu0 0
    %1238 = vmatpush1.bf16.msra.mxu0 %v1221
    %1239 = vmatprep.subr.bf16.mxu0 0
    %1240 = vmatpush2.bf16.msra.mxu0 0
    %1241 = vmatprep.subr.bf16.mxu0 0
    %1242 = vmatpush2.bf16.msra.mxu0 0
    %1243 = vmatprep.subr.bf16.mxu0 0
    %1244 = vmatpush2.bf16.msra.mxu0 0
    %1245 = vmatprep.subr.bf16.mxu0 0
    %1246 = vmatpush2.bf16.msra.mxu0 0
    %1247 = vmatprep.subr.bf16.mxu0 0
    %1248 = vmatpush2.bf16.msra.mxu0 0
    %1249 = vmatprep.subr.bf16.mxu0 0
    %1250 = vmatpush2.bf16.msra.mxu0 0
    %1251 = vmatprep.subr.bf16.mxu0 0
    %1252 = vmatpush2.bf16.msra.mxu0 0
    %1253 = vmatprep.subr.bf16.mxu0 0
    %1254 = vmatpush2.bf16.msra.mxu0 0
    %1255 = vmatprep.mubr.bf16.mxu0 0
    %1256 = vmatmul.mubr.bf16.gmra.mxu0 %v1218
    %v1257 = vpop.f32.mrf.mxu0
    %v1258 = vadd.f32 0.0, %v1257
    %v1259 = vpop.f32.mrf.mxu0
    %v1260 = vpop.f32.mrf.mxu0
    %v1261 = vpop.f32.mrf.mxu0
    %1262 = vdwg.mxu0
    %1263 = vrot.lane.b32.xlu0 %v410, 104
    %v1264 = vpop.permute.xlu0 %1263
    %v1266 = vsel %vm413, %v1214, 0
    %v1269 = vsel %vm549, %v1264, 0
    %1271 = vmatprep.subr.bf16.mxu0 0
    %1272 = vmatpush1.bf16.msra.mxu0 0
    %1273 = vmatprep.subr.bf16.mxu0 0
    %1274 = vmatpush1.bf16.msra.mxu0 0
    %1275 = vmatprep.subr.bf16.mxu0 0
    %1276 = vmatpush1.bf16.msra.mxu0 0
    %1277 = vmatprep.subr.bf16.mxu0 0
    %1278 = vmatpush1.bf16.msra.mxu0 0
    %1279 = vmatprep.subr.bf16.mxu0 0
    %1280 = vmatpush1.bf16.msra.mxu0 0
    %1281 = vmatprep.subr.bf16.mxu0 0
    %1282 = vmatpush1.bf16.msra.mxu0 0
    %1283 = vmatprep.subr.bf16.mxu0 0
    %1284 = vmatpush1.bf16.msra.mxu0 0
    %1285 = vmatprep.subr.bf16.mxu0 0
    %1286 = vmatpush1.bf16.msra.mxu0 %v1269
    %1287 = vmatprep.subr.bf16.mxu0 0
    %1288 = vmatpush2.bf16.msra.mxu0 0
    %1289 = vmatprep.subr.bf16.mxu0 0
    %1290 = vmatpush2.bf16.msra.mxu0 0
    %1291 = vmatprep.subr.bf16.mxu0 0
    %1292 = vmatpush2.bf16.msra.mxu0 0
    %1293 = vmatprep.subr.bf16.mxu0 0
    %1294 = vmatpush2.bf16.msra.mxu0 0
    %1295 = vmatprep.subr.bf16.mxu0 0
    %1296 = vmatpush2.bf16.msra.mxu0 0
    %1297 = vmatprep.subr.bf16.mxu0 0
    %1298 = vmatpush2.bf16.msra.mxu0 0
    %1299 = vmatprep.subr.bf16.mxu0 0
    %1300 = vmatpush2.bf16.msra.mxu0 0
    %1301 = vmatprep.subr.bf16.mxu0 0
    %1302 = vmatpush2.bf16.msra.mxu0 0
    %1303 = vmatprep.mubr.bf16.mxu0 0
    %1304 = vmatmul.mubr.bf16.gmra.mxu0 %v1266
    %v1305 = vpop.f32.mrf.mxu0
    %v1306 = vadd.f32 0.0, %v1305
    %v1307 = vpop.f32.mrf.mxu0
    %v1308 = vpop.f32.mrf.mxu0
    %v1309 = vpop.f32.mrf.mxu0
    %1310 = vdwg.mxu0
    %1313 = vrot.lane.b32.xlu0 %v810, 8
    %v1314 = vpop.permute.xlu0 %1313
    %1315 = vrot.lane.b32.xlu0 %v858, 8
    %v1316 = vpop.permute.xlu0 %1315
    %1321 = vrot.lane.b32.xlu0 %v1034, 16
    %v1322 = vpop.permute.xlu0 %1321
    %1323 = vrot.lane.b32.xlu0 %v1082, 16
    %v1324 = vpop.permute.xlu0 %1323
    %1329 = vrot.lane.b32.xlu0 %v1258, 24
    %v1330 = vpop.permute.xlu0 %1329
    %1331 = vrot.lane.b32.xlu0 %v1306, 24
    %v1332 = vpop.permute.xlu0 %1331
    %v1335 = vsel %vm413, %v588, %v1314
    %v1336 = vsel %vm413, %v634, %v1316
    %vm1337 = vcmask 130048
    %v1338 = vsel %vm1337, %v1335, %v1322
    %v1339 = vsel %vm1337, %v1336, %v1324
    %vm1340 = vcmask 195584
    %v1341 = vsel %vm1340, %v1338, %v1330
    %v1342 = vsel %vm1340, %v1339, %v1332
    %v1343 = vpack.c.bf16 %v1342, %v1341
    %v1344 = vld [vmem:[#allocation10] sm:$0xf]
    %v1345 = vld [vmem:[#allocation10 + $0x4] sm:$0xf]
    %v1346 = vld [vmem:[#allocation10 + $0x8] sm:$0xf]
    %v1347 = vld [vmem:[#allocation10 + $0xc] sm:$0xf]
    %v1348 = vlaneseq
    %v1349 = vshrl.u32 %v1348, 7
    %v1350 = vsub.s32 3, %v1349
    %v1351 = vrot.slane %v194, %v1350
    %v1356 = vunpack.c.l.b16 %v1344
    %v1357 = vunpack.c.l.b16 %v1345
    %v1358 = vunpack.c.l.b16 %v1346
    %v1359 = vunpack.c.l.b16 %v1347
    %v1360 = vpack.c.b16 %v1357, %v1356
    %v1361 = vpack.c.b16 %v1359, %v1358
    %v1365 = vsel %vm221, %v1343, 0
    %1367 = vmatprep.subr.bf16.mxu0 0
    %1368 = vmatpush1.bf16.msra.mxu0 0
    %1369 = vmatprep.subr.bf16.mxu0 0
    %1370 = vmatpush1.bf16.msra.mxu0 0
    %1371 = vmatprep.subr.bf16.mxu0 0
    %1372 = vmatpush1.bf16.msra.mxu0 0
    %1373 = vmatprep.subr.bf16.mxu0 0
    %1374 = vmatpush1.bf16.msra.mxu0 0
    %1375 = vmatprep.subr.bf16.mxu0 0
    %1376 = vmatpush1.bf16.msra.mxu0 0
    %1377 = vmatprep.subr.bf16.mxu0 0
    %1378 = vmatpush1.bf16.msra.mxu0 0
    %1379 = vmatprep.subr.bf16.mxu0 0
    %1380 = vmatpush1.bf16.msra.mxu0 %v1361
    %1381 = vmatprep.subr.bf16.mxu0 0
    %1382 = vmatpush1.bf16.msra.mxu0 %v1360
    %1383 = vmatprep.subr.bf16.mxu0 0
    %1384 = vmatpush2.bf16.msra.mxu0 0
    %1385 = vmatprep.subr.bf16.mxu0 0
    %1386 = vmatpush2.bf16.msra.mxu0 0
    %1387 = vmatprep.subr.bf16.mxu0 0
    %1388 = vmatpush2.bf16.msra.mxu0 0
    %1389 = vmatprep.subr.bf16.mxu0 0
    %1390 = vmatpush2.bf16.msra.mxu0 0
    %1391 = vmatprep.subr.bf16.mxu0 0
    %1392 = vmatpush2.bf16.msra.mxu0 0
    %1393 = vmatprep.subr.bf16.mxu0 0
    %1394 = vmatpush2.bf16.msra.mxu0 0
    %1395 = vmatprep.subr.bf16.mxu0 0
    %1396 = vmatpush2.bf16.msra.mxu0 0
    %1397 = vmatprep.subr.bf16.mxu0 0
    %1398 = vmatpush2.bf16.msra.mxu0 0
    %1399 = vmatprep.mubr.bf16.mxu0 0
    %1400 = vmatmul.mubr.bf16.gmra.mxu0 %v1365
    %v1401 = vpop.f32.mrf.mxu0
    %v1402 = vadd.f32 %v1351, %v1401
    %v1403 = vpop.f32.mrf.mxu0
    %v1404 = vpop.f32.mrf.mxu0
    %v1405 = vadd.f32 %v1351, %v1404
    %v1406 = vpop.f32.mrf.mxu0
    %1407 = vdwg.mxu0
    %v1408 = vadd.f32 %v176, %v1402
    %v1409 = vadd.f32 %v177, %v1405
    %v1410 = vsel %vm221, %v1408, 0.0
    %1411 = vadd.xlane.f32.xlu0 %v1410
    %v1412 = vpop.xlane.xlu0 %1411
    %v1413 = vsel %vm221, %v1409, 0.0
    %1414 = vadd.xlane.f32.xlu0 %v1413
    %v1415 = vpop.xlane.xlu0 %1414
    %v1416 = vrcp.pop 32.0
    %v1417 = vmul.f32 %v1412, %v1416
    %v1418 = vmul.f32 %v1415, %v1416
    %v1419 = vsub.f32 %v1408, %v1417
    %v1420 = vsub.f32 %v1409, %v1418
    %v1421 = vmul.f32 %v1419, %v1419
    %v1422 = vmul.f32 %v1420, %v1420
    %v1423 = vsel %vm221, %v1421, 0.0
    %1424 = vadd.xlane.f32.xlu0 %v1423
    %v1425 = vpop.xlane.xlu0 %1424
    %v1426 = vsel %vm221, %v1422, 0.0
    %1427 = vadd.xlane.f32.xlu0 %v1426
    %v1428 = vpop.xlane.xlu0 %1427
    %v1429 = vmul.f32 %v1425, %v1416
    %v1430 = vmul.f32 %v1428, %v1416
    %v1431 = vadd.f32 %v1429, 1e-05
    %v1432 = vadd.f32 %v1430, 1e-05
    %v1433 = vrsqrt.pop %v1431
    %v1434 = vrsqrt.pop %v1432
    %v1435 = vmul.f32 %v1419, %v1433
    %v1436 = vmul.f32 %v1420, %v1434
    %v1437 = vlaneseq
    %v1438 = vshrl.u32 %v1437, 7
    %v1439 = vsub.s32 1, %v1438
    %v1440 = vrot.slane %v195, %v1439
    %v1441 = vmul.f32 %v1435, %v1440
    %v1442 = vmul.f32 %v1436, %v1440
    %v1443 = vlaneseq
    %v1444 = vshrl.u32 %v1443, 7
    %v1445 = vsub.s32 2, %v1444
    %v1446 = vrot.slane %v195, %v1445
    %v1447 = vadd.f32 %v1441, %v1446
    %v1448 = vadd.f32 %v1442, %v1446
    %v1449 = vadd.f32 %v1447, %v184
    %v1450 = vadd.f32 %v1448, %v185
    %v1451 = vadd.f32 %v180, %v188
    %v1452 = vadd.f32 %v181, %v189
    %v1453 = vpack.c.bf16 %v1450, %v1449
    %v1454 = vpack.c.bf16 %v1452, %v1451
    %v1455 = vpack.c.bf16 %v181, %v180
    %v1456 = vld [vmem:[#allocation11] sm:$0xf]
    %v1457 = vld [vmem:[#allocation11 + $0x4] sm:$0xf]
    %v1458 = vld [vmem:[#allocation11 + $0x8] sm:$0xf]
    %v1459 = vld [vmem:[#allocation11 + $0xc] sm:$0xf]
    %v1460 = vlaneseq
    %v1461 = vshrl.u32 %v1460, 7
    %v1462 = vsub.s32 4, %v1461
    %v1463 = vrot.slane %v194, %v1462
    %v1468 = vunpack.c.l.b16 %v1456
    %v1469 = vunpack.c.l.b16 %v1457
    %v1470 = vunpack.c.l.b16 %v1458
    %v1471 = vunpack.c.l.b16 %v1459
    %v1472 = vpack.c.b16 %v1469, %v1468
    %v1473 = vpack.c.b16 %v1471, %v1470
    %v1477 = vsel %vm221, %v1453, 0
    %1479 = vmatprep.subr.bf16.mxu0 0
    %1480 = vmatpush1.bf16.msra.mxu0 0
    %1481 = vmatprep.subr.bf16.mxu0 0
    %1482 = vmatpush1.bf16.msra.mxu0 0
    %1483 = vmatprep.subr.bf16.mxu0 0
    %1484 = vmatpush1.bf16.msra.mxu0 0
    %1485 = vmatprep.subr.bf16.mxu0 0
    %1486 = vmatpush1.bf16.msra.mxu0 0
    %1487 = vmatprep.subr.bf16.mxu0 0
    %1488 = vmatpush1.bf16.msra.mxu0 0
    %1489 = vmatprep.subr.bf16.mxu0 0
    %1490 = vmatpush1.bf16.msra.mxu0 0
    %1491 = vmatprep.subr.bf16.mxu0 0
    %1492 = vmatpush1.bf16.msra.mxu0 %v1473
    %1493 = vmatprep.subr.bf16.mxu0 0
    %1494 = vmatpush1.bf16.msra.mxu0 %v1472
    %1495 = vmatprep.subr.bf16.mxu0 0
    %1496 = vmatpush2.bf16.msra.mxu0 0
    %1497 = vmatprep.subr.bf16.mxu0 0
    %1498 = vmatpush2.bf16.msra.mxu0 0
    %1499 = vmatprep.subr.bf16.mxu0 0
    %1500 = vmatpush2.bf16.msra.mxu0 0
    %1501 = vmatprep.subr.bf16.mxu0 0
    %1502 = vmatpush2.bf16.msra.mxu0 0
    %1503 = vmatprep.subr.bf16.mxu0 0
    %1504 = vmatpush2.bf16.msra.mxu0 0
    %1505 = vmatprep.subr.bf16.mxu0 0
    %1506 = vmatpush2.bf16.msra.mxu0 0
    %1507 = vmatprep.subr.bf16.mxu0 0
    %1508 = vmatpush2.bf16.msra.mxu0 0
    %1509 = vmatprep.subr.bf16.mxu0 0
    %1510 = vmatpush2.bf16.msra.mxu0 0
    %1511 = vmatprep.mubr.bf16.mxu0 0
    %1512 = vmatmul.mubr.bf16.gmra.mxu0 %v1477
    %v1513 = vpop.f32.mrf.mxu0
    %v1514 = vadd.f32 %v1463, %v1513
    %v1515 = vpop.f32.mrf.mxu0
    %v1516 = vpop.f32.mrf.mxu0
    %v1517 = vadd.f32 %v1463, %v1516
    %v1518 = vpop.f32.mrf.mxu0
    %1519 = vdwg.mxu0
    %v1520 = vpack.c.bf16 %v1517, %v1514
    %v1522 = vunpack.c.l.b16 %v1520
    %v1523 = vunpack.c.h.b16 %v1520
    %v1524 = vpack.c.b16 %v1522, %v1522
    %v1525 = vpack.c.b16 %v1523, %v1523
    %s1526 = scalar_lea.vmem [#allocation11], 16
    %v1527 = vld [vmem:[%s1526] sm:$0xf]
    %v1528 = vld [vmem:[%s1526 + $0x4] sm:$0xf]
    %v1529 = vld [vmem:[%s1526 + $0x8] sm:$0xf]
    %v1530 = vld [vmem:[%s1526 + $0xc] sm:$0xf]
    %v1531 = vlaneseq
    %v1532 = vshrl.u32 %v1531, 7
    %v1533 = vsub.s32 5, %v1532
    %v1534 = vrot.slane %v194, %v1533
    %v1539 = vunpack.c.l.b16 %v1527
    %v1540 = vunpack.c.l.b16 %v1528
    %v1541 = vunpack.c.l.b16 %v1529
    %v1542 = vunpack.c.l.b16 %v1530
    %v1543 = vpack.c.b16 %v1540, %v1539
    %v1544 = vpack.c.b16 %v1542, %v1541
    %v1548 = vsel %vm221, %v1454, 0
    %1550 = vmatprep.subr.bf16.mxu0 0
    %1551 = vmatpush1.bf16.msra.mxu0 0
    %1552 = vmatprep.subr.bf16.mxu0 0
    %1553 = vmatpush1.bf16.msra.mxu0 0
    %1554 = vmatprep.subr.bf16.mxu0 0
    %1555 = vmatpush1.bf16.msra.mxu0 0
    %1556 = vmatprep.subr.bf16.mxu0 0
    %1557 = vmatpush1.bf16.msra.mxu0 0
    %1558 = vmatprep.subr.bf16.mxu0 0
    %1559 = vmatpush1.bf16.msra.mxu0 0
    %1560 = vmatprep.subr.bf16.mxu0 0
    %1561 = vmatpush1.bf16.msra.mxu0 0
    %1562 = vmatprep.subr.bf16.mxu0 0
    %1563 = vmatpush1.bf16.msra.mxu0 %v1544
    %1564 = vmatprep.subr.bf16.mxu0 0
    %1565 = vmatpush1.bf16.msra.mxu0 %v1543
    %1566 = vmatprep.subr.bf16.mxu0 0
    %1567 = vmatpush2.bf16.msra.mxu0 0
    %1568 = vmatprep.subr.bf16.mxu0 0
    %1569 = vmatpush2.bf16.msra.mxu0 0
    %1570 = vmatprep.subr.bf16.mxu0 0
    %1571 = vmatpush2.bf16.msra.mxu0 0
    %1572 = vmatprep.subr.bf16.mxu0 0
    %1573 = vmatpush2.bf16.msra.mxu0 0
    %1574 = vmatprep.subr.bf16.mxu0 0
    %1575 = vmatpush2.bf16.msra.mxu0 0
    %1576 = vmatprep.subr.bf16.mxu0 0
    %1577 = vmatpush2.bf16.msra.mxu0 0
    %1578 = vmatprep.subr.bf16.mxu0 0
    %1579 = vmatpush2.bf16.msra.mxu0 0
    %1580 = vmatprep.subr.bf16.mxu0 0
    %1581 = vmatpush2.bf16.msra.mxu0 0
    %1582 = vmatprep.mubr.bf16.mxu0 0
    %1583 = vmatmul.mubr.bf16.gmra.mxu0 %v1548
    %v1584 = vpop.f32.mrf.mxu0
    %v1585 = vadd.f32 %v1534, %v1584
    %v1586 = vpop.f32.mrf.mxu0
    %v1587 = vpop.f32.mrf.mxu0
    %v1588 = vadd.f32 %v1534, %v1587
    %v1589 = vpop.f32.mrf.mxu0
    %1590 = vdwg.mxu0
    %v1591 = vpack.c.bf16 %v1588, %v1585
    %v1593 = vunpack.c.l.b16 %v1591
    %v1594 = vunpack.c.h.b16 %v1591
    %v1595 = vpack.c.b16 %v1593, %v1593
    %v1596 = vpack.c.b16 %v1594, %v1594
    %s1597 = scalar_lea.vmem [#allocation11], 32
    %v1598 = vld [vmem:[%s1597] sm:$0xf]
    %v1599 = vld [vmem:[%s1597 + $0x4] sm:$0xf]
    %v1600 = vld [vmem:[%s1597 + $0x8] sm:$0xf]
    %v1601 = vld [vmem:[%s1597 + $0xc] sm:$0xf]
    %v1602 = vlaneseq
    %v1603 = vshrl.u32 %v1602, 7
    %v1604 = vsub.s32 6, %v1603
    %v1605 = vrot.slane %v194, %v1604
    %v1610 = vunpack.c.l.b16 %v1598
    %v1611 = vunpack.c.l.b16 %v1599
    %v1612 = vunpack.c.l.b16 %v1600
    %v1613 = vunpack.c.l.b16 %v1601
    %v1614 = vpack.c.b16 %v1611, %v1610
    %v1615 = vpack.c.b16 %v1613, %v1612
    %v1619 = vsel %vm221, %v1455, 0
    %1621 = vmatprep.subr.bf16.mxu0 0
    %1622 = vmatpush1.bf16.msra.mxu0 0
    %1623 = vmatprep.subr.bf16.mxu0 0
    %1624 = vmatpush1.bf16.msra.mxu0 0
    %1625 = vmatprep.subr.bf16.mxu0 0
    %1626 = vmatpush1.bf16.msra.mxu0 0
    %1627 = vmatprep.subr.bf16.mxu0 0
    %1628 = vmatpush1.bf16.msra.mxu0 0
    %1629 = vmatprep.subr.bf16.mxu0 0
    %1630 = vmatpush1.bf16.msra.mxu0 0
    %1631 = vmatprep.subr.bf16.mxu0 0
    %1632 = vmatpush1.bf16.msra.mxu0 0
    %1633 = vmatprep.subr.bf16.mxu0 0
    %1634 = vmatpush1.bf16.msra.mxu0 %v1615
    %1635 = vmatprep.subr.bf16.mxu0 0
    %1636 = vmatpush1.bf16.msra.mxu0 %v1614
    %1637 = vmatprep.subr.bf16.mxu0 0
    %1638 = vmatpush2.bf16.msra.mxu0 0
    %1639 = vmatprep.subr.bf16.mxu0 0
    %1640 = vmatpush2.bf16.msra.mxu0 0
    %1641 = vmatprep.subr.bf16.mxu0 0
    %1642 = vmatpush2.bf16.msra.mxu0 0
    %1643 = vmatprep.subr.bf16.mxu0 0
    %1644 = vmatpush2.bf16.msra.mxu0 0
    %1645 = vmatprep.subr.bf16.mxu0 0
    %1646 = vmatpush2.bf16.msra.mxu0 0
    %1647 = vmatprep.subr.bf16.mxu0 0
    %1648 = vmatpush2.bf16.msra.mxu0 0
    %1649 = vmatprep.subr.bf16.mxu0 0
    %1650 = vmatpush2.bf16.msra.mxu0 0
    %1651 = vmatprep.subr.bf16.mxu0 0
    %1652 = vmatpush2.bf16.msra.mxu0 0
    %1653 = vmatprep.mubr.bf16.mxu0 0
    %1654 = vmatmul.mubr.bf16.gmra.mxu0 %v1619
    %v1655 = vpop.f32.mrf.mxu0
    %v1656 = vadd.f32 %v1605, %v1655
    %v1657 = vpop.f32.mrf.mxu0
    %v1658 = vpop.f32.mrf.mxu0
    %v1659 = vadd.f32 %v1605, %v1658
    %v1660 = vpop.f32.mrf.mxu0
    %1661 = vdwg.mxu0
    %v1662 = vpack.c.bf16 %v1659, %v1656
    %v1664 = vunpack.c.l.b16 %v1662
    %v1665 = vunpack.c.h.b16 %v1662
    %v1666 = vpack.c.b16 %v1664, %v1664
    %v1667 = vpack.c.b16 %v1665, %v1665
    %v1668 = vmul.f32 %v192, -1e+30
    %v1669 = vmul.f32 %v193, -1e+30
    %v1671 = vsel %vm413, %v1524, 0
    %v1674 = vsel %vm413, %v1595, 0
    %1676 = vmatprep.subr.bf16.mxu0 0
    %1677 = vmatpush1.bf16.xpose.msra.mxu0 0
    %1678 = vmatprep.subr.bf16.mxu0 0
    %1679 = vmatpush1.bf16.xpose.msra.mxu0 0
    %1680 = vmatprep.subr.bf16.mxu0 0
    %1681 = vmatpush1.bf16.xpose.msra.mxu0 0
    %1682 = vmatprep.subr.bf16.mxu0 0
    %1683 = vmatpush1.bf16.xpose.msra.mxu0 0
    %1684 = vmatprep.subr.bf16.mxu0 0
    %1685 = vmatpush1.bf16.xpose.msra.mxu0 0
    %1686 = vmatprep.subr.bf16.mxu0 0
    %1687 = vmatpush1.bf16.xpose.msra.mxu0 0
    %1688 = vmatprep.subr.bf16.mxu0 0
    %1689 = vmatpush1.bf16.xpose.msra.mxu0 0
    %1690 = vmatprep.subr.bf16.mxu0 0
    %1691 = vmatpush1.bf16.xpose.msra.mxu0 %v1674
    %1692 = vmatprep.subr.bf16.mxu0 0
    %1693 = vmatpush2.bf16.xpose.msra.mxu0 0
    %1694 = vmatprep.subr.bf16.mxu0 0
    %1695 = vmatpush2.bf16.xpose.msra.mxu0 0
    %1696 = vmatprep.subr.bf16.mxu0 0
    %1697 = vmatpush2.bf16.xpose.msra.mxu0 0
    %1698 = vmatprep.subr.bf16.mxu0 0
    %1699 = vmatpush2.bf16.xpose.msra.mxu0 0
    %1700 = vmatprep.subr.bf16.mxu0 0
    %1701 = vmatpush2.bf16.xpose.msra.mxu0 0
    %1702 = vmatprep.subr.bf16.mxu0 0
    %1703 = vmatpush2.bf16.xpose.msra.mxu0 0
    %1704 = vmatprep.subr.bf16.mxu0 0
    %1705 = vmatpush2.bf16.xpose.msra.mxu0 0
    %1706 = vmatprep.subr.bf16.mxu0 0
    %1707 = vmatpush2.bf16.xpose.msra.mxu0 0
    %1708 = vmatprep.mubr.bf16.mxu0 0
    %1709 = vmatmul.mubr.bf16.gmra.mxu0 %v1671
    %v1710 = vpop.f32.mrf.mxu0
    %v1711 = vadd.f32 0.0, %v1710
    %v1712 = vpop.f32.mrf.mxu0
    %v1713 = vpop.f32.mrf.mxu0
    %v1714 = vpop.f32.mrf.mxu0
    %1715 = vdwg.mxu0
    %v1717 = vsel %vm413, %v1525, 0
    %v1720 = vsel %vm413, %v1596, 0
    %1722 = vmatprep.subr.bf16.mxu0 0
    %1723 = vmatpush1.bf16.xpose.msra.mxu0 0
    %1724 = vmatprep.subr.bf16.mxu0 0
    %1725 = vmatpush1.bf16.xpose.msra.mxu0 0
    %1726 = vmatprep.subr.bf16.mxu0 0
    %1727 = vmatpush1.bf16.xpose.msra.mxu0 0
    %1728 = vmatprep.subr.bf16.mxu0 0
    %1729 = vmatpush1.bf16.xpose.msra.mxu0 0
    %1730 = vmatprep.subr.bf16.mxu0 0
    %1731 = vmatpush1.bf16.xpose.msra.mxu0 0
    %1732 = vmatprep.subr.bf16.mxu0 0
    %1733 = vmatpush1.bf16.xpose.msra.mxu0 0
    %1734 = vmatprep.subr.bf16.mxu0 0
    %1735 = vmatpush1.bf16.xpose.msra.mxu0 0
    %1736 = vmatprep.subr.bf16.mxu0 0
    %1737 = vmatpush1.bf16.xpose.msra.mxu0 %v1720
    %1738 = vmatprep.subr.bf16.mxu0 0
    %1739 = vmatpush2.bf16.xpose.msra.mxu0 0
    %1740 = vmatprep.subr.bf16.mxu0 0
    %1741 = vmatpush2.bf16.xpose.msra.mxu0 0
    %1742 = vmatprep.subr.bf16.mxu0 0
    %1743 = vmatpush2.bf16.xpose.msra.mxu0 0
    %1744 = vmatprep.subr.bf16.mxu0 0
    %1745 = vmatpush2.bf16.xpose.msra.mxu0 0
    %1746 = vmatprep.subr.bf16.mxu0 0
    %1747 = vmatpush2.bf16.xpose.msra.mxu0 0
    %1748 = vmatprep.subr.bf16.mxu0 0
    %1749 = vmatpush2.bf16.xpose.msra.mxu0 0
    %1750 = vmatprep.subr.bf16.mxu0 0
    %1751 = vmatpush2.bf16.xpose.msra.mxu0 0
    %1752 = vmatprep.subr.bf16.mxu0 0
    %1753 = vmatpush2.bf16.xpose.msra.mxu0 0
    %1754 = vmatprep.mubr.bf16.mxu0 0
    %1755 = vmatmul.mubr.bf16.gmra.mxu0 %v1717
    %v1756 = vpop.f32.mrf.mxu0
    %v1757 = vadd.f32 0.0, %v1756
    %v1758 = vpop.f32.mrf.mxu0
    %v1759 = vpop.f32.mrf.mxu0
    %v1760 = vpop.f32.mrf.mxu0
    %1761 = vdwg.mxu0
    %v1762 = vmul.f32 %v1711, 0.35355338
    %v1763 = vmul.f32 %v1757, 0.35355338
    %v1766 = vlaneseq
    %v1767 = vshrl.u32 %v1766, 7
    %v1768 = vsub.s32 0, %v1767
    %v1769 = vrot.slane %v1668, %v1768
    %v1770 = vlaneseq
    %v1771 = vshrl.u32 %v1770, 7
    %v1772 = vsub.s32 0, %v1771
    %v1773 = vrot.slane %v1669, %v1772
    %v1776 = vadd.f32 %v1762, %v1769
    %v1777 = vadd.f32 %v1763, %v1773
    %v1778 = vsel %vm413, %v1776, -inf
    %1779 = vmax.xlane.f32.xlu0 %v1778
    %v1780 = vpop.xlane.xlu0 %1779
    %v1781 = vsel %vm413, %v1777, -inf
    %1782 = vmax.xlane.f32.xlu0 %v1781
    %v1783 = vpop.xlane.xlu0 %1782
    %v1784 = vsub.f32 %v1776, %v1780
    %v1785 = vsub.f32 %v1777, %v1783
    %v1786 = vmul.f32 %v1784, 1.442695
    %v1787 = vpow.pop %v1786
    %v1788 = vmul.f32 %v1785, 1.442695
    %v1789 = vpow.pop %v1788
    %v1790 = vsel %vm413, %v1787, 0.0
    %1791 = vadd.xlane.f32.xlu0 %v1790
    %v1792 = vpop.xlane.xlu0 %1791
    %v1793 = vsel %vm413, %v1789, 0.0
    %1794 = vadd.xlane.f32.xlu0 %v1793
    %v1795 = vpop.xlane.xlu0 %1794
    %v1796 = vrcp.pop %v1792
    %v1797 = vmul.f32 %v1787, %v1796
    %v1798 = vrcp.pop %v1795
    %v1799 = vmul.f32 %v1789, %v1798
    %v1800 = vpack.c.bf16 %v1797, %v1797
    %v1801 = vpack.c.bf16 %v1799, %v1799
    %v1803 = vsel %vm413, %v1800, 0
    %v1806 = vsel %vm549, %v1666, 0
    %1808 = vmatprep.subr.bf16.mxu0 0
    %1809 = vmatpush1.bf16.msra.mxu0 0
    %1810 = vmatprep.subr.bf16.mxu0 0
    %1811 = vmatpush1.bf16.msra.mxu0 0
    %1812 = vmatprep.subr.bf16.mxu0 0
    %1813 = vmatpush1.bf16.msra.mxu0 0
    %1814 = vmatprep.subr.bf16.mxu0 0
    %1815 = vmatpush1.bf16.msra.mxu0 0
    %1816 = vmatprep.subr.bf16.mxu0 0
    %1817 = vmatpush1.bf16.msra.mxu0 0
    %1818 = vmatprep.subr.bf16.mxu0 0
    %1819 = vmatpush1.bf16.msra.mxu0 0
    %1820 = vmatprep.subr.bf16.mxu0 0
    %1821 = vmatpush1.bf16.msra.mxu0 0
    %1822 = vmatprep.subr.bf16.mxu0 0
    %1823 = vmatpush1.bf16.msra.mxu0 %v1806
    %1824 = vmatprep.subr.bf16.mxu0 0
    %1825 = vmatpush2.bf16.msra.mxu0 0
    %1826 = vmatprep.subr.bf16.mxu0 0
    %1827 = vmatpush2.bf16.msra.mxu0 0
    %1828 = vmatprep.subr.bf16.mxu0 0
    %1829 = vmatpush2.bf16.msra.mxu0 0
    %1830 = vmatprep.subr.bf16.mxu0 0
    %1831 = vmatpush2.bf16.msra.mxu0 0
    %1832 = vmatprep.subr.bf16.mxu0 0
    %1833 = vmatpush2.bf16.msra.mxu0 0
    %1834 = vmatprep.subr.bf16.mxu0 0
    %1835 = vmatpush2.bf16.msra.mxu0 0
    %1836 = vmatprep.subr.bf16.mxu0 0
    %1837 = vmatpush2.bf16.msra.mxu0 0
    %1838 = vmatprep.subr.bf16.mxu0 0
    %1839 = vmatpush2.bf16.msra.mxu0 0
    %1840 = vmatprep.mubr.bf16.mxu0 0
    %1841 = vmatmul.mubr.bf16.gmra.mxu0 %v1803
    %v1842 = vpop.f32.mrf.mxu0
    %v1843 = vadd.f32 0.0, %v1842
    %v1844 = vpop.f32.mrf.mxu0
    %v1845 = vpop.f32.mrf.mxu0
    %v1846 = vpop.f32.mrf.mxu0
    %1847 = vdwg.mxu0
    %v1849 = vsel %vm413, %v1801, 0
    %v1852 = vsel %vm549, %v1667, 0
    %1854 = vmatprep.subr.bf16.mxu0 0
    %1855 = vmatpush1.bf16.msra.mxu0 0
    %1856 = vmatprep.subr.bf16.mxu0 0
    %1857 = vmatpush1.bf16.msra.mxu0 0
    %1858 = vmatprep.subr.bf16.mxu0 0
    %1859 = vmatpush1.bf16.msra.mxu0 0
    %1860 = vmatprep.subr.bf16.mxu0 0
    %1861 = vmatpush1.bf16.msra.mxu0 0
    %1862 = vmatprep.subr.bf16.mxu0 0
    %1863 = vmatpush1.bf16.msra.mxu0 0
    %1864 = vmatprep.subr.bf16.mxu0 0
    %1865 = vmatpush1.bf16.msra.mxu0 0
    %1866 = vmatprep.subr.bf16.mxu0 0
    %1867 = vmatpush1.bf16.msra.mxu0 0
    %1868 = vmatprep.subr.bf16.mxu0 0
    %1869 = vmatpush1.bf16.msra.mxu0 %v1852
    %1870 = vmatprep.subr.bf16.mxu0 0
    %1871 = vmatpush2.bf16.msra.mxu0 0
    %1872 = vmatprep.subr.bf16.mxu0 0
    %1873 = vmatpush2.bf16.msra.mxu0 0
    %1874 = vmatprep.subr.bf16.mxu0 0
    %1875 = vmatpush2.bf16.msra.mxu0 0
    %1876 = vmatprep.subr.bf16.mxu0 0
    %1877 = vmatpush2.bf16.msra.mxu0 0
    %1878 = vmatprep.subr.bf16.mxu0 0
    %1879 = vmatpush2.bf16.msra.mxu0 0
    %1880 = vmatprep.subr.bf16.mxu0 0
    %1881 = vmatpush2.bf16.msra.mxu0 0
    %1882 = vmatprep.subr.bf16.mxu0 0
    %1883 = vmatpush2.bf16.msra.mxu0 0
    %1884 = vmatprep.subr.bf16.mxu0 0
    %1885 = vmatpush2.bf16.msra.mxu0 0
    %1886 = vmatprep.mubr.bf16.mxu0 0
    %1887 = vmatmul.mubr.bf16.gmra.mxu0 %v1849
    %v1888 = vpop.f32.mrf.mxu0
    %v1889 = vadd.f32 0.0, %v1888
    %v1890 = vpop.f32.mrf.mxu0
    %v1891 = vpop.f32.mrf.mxu0
    %v1892 = vpop.f32.mrf.mxu0
    %1893 = vdwg.mxu0
    %1894 = vrot.lane.b32.xlu0 %v1524, 120
    %v1895 = vpop.permute.xlu0 %1894
    %1896 = vrot.lane.b32.xlu0 %v1595, 120
    %v1897 = vpop.permute.xlu0 %1896
    %v1899 = vsel %vm413, %v1895, 0
    %v1902 = vsel %vm413, %v1897, 0
    %1904 = vmatprep.subr.bf16.mxu0 0
    %1905 = vmatpush1.bf16.xpose.msra.mxu0 0
    %1906 = vmatprep.subr.bf16.mxu0 0
    %1907 = vmatpush1.bf16.xpose.msra.mxu0 0
    %1908 = vmatprep.subr.bf16.mxu0 0
    %1909 = vmatpush1.bf16.xpose.msra.mxu0 0
    %1910 = vmatprep.subr.bf16.mxu0 0
    %1911 = vmatpush1.bf16.xpose.msra.mxu0 0
    %1912 = vmatprep.subr.bf16.mxu0 0
    %1913 = vmatpush1.bf16.xpose.msra.mxu0 0
    %1914 = vmatprep.subr.bf16.mxu0 0
    %1915 = vmatpush1.bf16.xpose.msra.mxu0 0
    %1916 = vmatprep.subr.bf16.mxu0 0
    %1917 = vmatpush1.bf16.xpose.msra.mxu0 0
    %1918 = vmatprep.subr.bf16.mxu0 0
    %1919 = vmatpush1.bf16.xpose.msra.mxu0 %v1902
    %1920 = vmatprep.subr.bf16.mxu0 0
    %1921 = vmatpush2.bf16.xpose.msra.mxu0 0
    %1922 = vmatprep.subr.bf16.mxu0 0
    %1923 = vmatpush2.bf16.xpose.msra.mxu0 0
    %1924 = vmatprep.subr.bf16.mxu0 0
    %1925 = vmatpush2.bf16.xpose.msra.mxu0 0
    %1926 = vmatprep.subr.bf16.mxu0 0
    %1927 = vmatpush2.bf16.xpose.msra.mxu0 0
    %1928 = vmatprep.subr.bf16.mxu0 0
    %1929 = vmatpush2.bf16.xpose.msra.mxu0 0
    %1930 = vmatprep.subr.bf16.mxu0 0
    %1931 = vmatpush2.bf16.xpose.msra.mxu0 0
    %1932 = vmatprep.subr.bf16.mxu0 0
    %1933 = vmatpush2.bf16.xpose.msra.mxu0 0
    %1934 = vmatprep.subr.bf16.mxu0 0
    %1935 = vmatpush2.bf16.xpose.msra.mxu0 0
    %1936 = vmatprep.mubr.bf16.mxu0 0
    %1937 = vmatmul.mubr.bf16.gmra.mxu0 %v1899
    %v1938 = vpop.f32.mrf.mxu0
    %v1939 = vadd.f32 0.0, %v1938
    %v1940 = vpop.f32.mrf.mxu0
    %v1941 = vpop.f32.mrf.mxu0
    %v1942 = vpop.f32.mrf.mxu0
    %1943 = vdwg.mxu0
    %1944 = vrot.lane.b32.xlu0 %v1525, 120
    %v1945 = vpop.permute.xlu0 %1944
    %1946 = vrot.lane.b32.xlu0 %v1596, 120
    %v1947 = vpop.permute.xlu0 %1946
    %v1949 = vsel %vm413, %v1945, 0
    %v1952 = vsel %vm413, %v1947, 0
    %1954 = vmatprep.subr.bf16.mxu0 0
    %1955 = vmatpush1.bf16.xpose.msra.mxu0 0
    %1956 = vmatprep.subr.bf16.mxu0 0
    %1957 = vmatpush1.bf16.xpose.msra.mxu0 0
    %1958 = vmatprep.subr.bf16.mxu0 0
    %1959 = vmatpush1.bf16.xpose.msra.mxu0 0
    %1960 = vmatprep.subr.bf16.mxu0 0
    %1961 = vmatpush1.bf16.xpose.msra.mxu0 0
    %1962 = vmatprep.subr.bf16.mxu0 0
    %1963 = vmatpush1.bf16.xpose.msra.mxu0 0
    %1964 = vmatprep.subr.bf16.mxu0 0
    %1965 = vmatpush1.bf16.xpose.msra.mxu0 0
    %1966 = vmatprep.subr.bf16.mxu0 0
    %1967 = vmatpush1.bf16.xpose.msra.mxu0 0
    %1968 = vmatprep.subr.bf16.mxu0 0
    %1969 = vmatpush1.bf16.xpose.msra.mxu0 %v1952
    %1970 = vmatprep.subr.bf16.mxu0 0
    %1971 = vmatpush2.bf16.xpose.msra.mxu0 0
    %1972 = vmatprep.subr.bf16.mxu0 0
    %1973 = vmatpush2.bf16.xpose.msra.mxu0 0
    %1974 = vmatprep.subr.bf16.mxu0 0
    %1975 = vmatpush2.bf16.xpose.msra.mxu0 0
    %1976 = vmatprep.subr.bf16.mxu0 0
    %1977 = vmatpush2.bf16.xpose.msra.mxu0 0
    %1978 = vmatprep.subr.bf16.mxu0 0
    %1979 = vmatpush2.bf16.xpose.msra.mxu0 0
    %1980 = vmatprep.subr.bf16.mxu0 0
    %1981 = vmatpush2.bf16.xpose.msra.mxu0 0
    %1982 = vmatprep.subr.bf16.mxu0 0
    %1983 = vmatpush2.bf16.xpose.msra.mxu0 0
    %1984 = vmatprep.subr.bf16.mxu0 0
    %1985 = vmatpush2.bf16.xpose.msra.mxu0 0
    %1986 = vmatprep.mubr.bf16.mxu0 0
    %1987 = vmatmul.mubr.bf16.gmra.mxu0 %v1949
    %v1988 = vpop.f32.mrf.mxu0
    %v1989 = vadd.f32 0.0, %v1988
    %v1990 = vpop.f32.mrf.mxu0
    %v1991 = vpop.f32.mrf.mxu0
    %v1992 = vpop.f32.mrf.mxu0
    %1993 = vdwg.mxu0
    %v1994 = vmul.f32 %v1939, 0.35355338
    %v1995 = vmul.f32 %v1989, 0.35355338
    %v1996 = vadd.f32 %v1994, %v1769
    %v1997 = vadd.f32 %v1995, %v1773
    %v1998 = vsel %vm413, %v1996, -inf
    %1999 = vmax.xlane.f32.xlu0 %v1998
    %v2000 = vpop.xlane.xlu0 %1999
    %v2001 = vsel %vm413, %v1997, -inf
    %2002 = vmax.xlane.f32.xlu0 %v2001
    %v2003 = vpop.xlane.xlu0 %2002
    %v2004 = vsub.f32 %v1996, %v2000
    %v2005 = vsub.f32 %v1997, %v2003
    %v2006 = vmul.f32 %v2004, 1.442695
    %v2007 = vpow.pop %v2006
    %v2008 = vmul.f32 %v2005, 1.442695
    %v2009 = vpow.pop %v2008
    %v2010 = vsel %vm413, %v2007, 0.0
    %2011 = vadd.xlane.f32.xlu0 %v2010
    %v2012 = vpop.xlane.xlu0 %2011
    %v2013 = vsel %vm413, %v2009, 0.0
    %2014 = vadd.xlane.f32.xlu0 %v2013
    %v2015 = vpop.xlane.xlu0 %2014
    %v2016 = vrcp.pop %v2012
    %v2017 = vmul.f32 %v2007, %v2016
    %v2018 = vrcp.pop %v2015
    %v2019 = vmul.f32 %v2009, %v2018
    %v2020 = vpack.c.bf16 %v2017, %v2017
    %v2021 = vpack.c.bf16 %v2019, %v2019
    %2022 = vrot.lane.b32.xlu0 %v1666, 120
    %v2023 = vpop.permute.xlu0 %2022
    %v2025 = vsel %vm413, %v2020, 0
    %v2028 = vsel %vm549, %v2023, 0
    %2030 = vmatprep.subr.bf16.mxu0 0
    %2031 = vmatpush1.bf16.msra.mxu0 0
    %2032 = vmatprep.subr.bf16.mxu0 0
    %2033 = vmatpush1.bf16.msra.mxu0 0
    %2034 = vmatprep.subr.bf16.mxu0 0
    %2035 = vmatpush1.bf16.msra.mxu0 0
    %2036 = vmatprep.subr.bf16.mxu0 0
    %2037 = vmatpush1.bf16.msra.mxu0 0
    %2038 = vmatprep.subr.bf16.mxu0 0
    %2039 = vmatpush1.bf16.msra.mxu0 0
    %2040 = vmatprep.subr.bf16.mxu0 0
    %2041 = vmatpush1.bf16.msra.mxu0 0
    %2042 = vmatprep.subr.bf16.mxu0 0
    %2043 = vmatpush1.bf16.msra.mxu0 0
    %2044 = vmatprep.subr.bf16.mxu0 0
    %2045 = vmatpush1.bf16.msra.mxu0 %v2028
    %2046 = vmatprep.subr.bf16.mxu0 0
    %2047 = vmatpush2.bf16.msra.mxu0 0
    %2048 = vmatprep.subr.bf16.mxu0 0
    %2049 = vmatpush2.bf16.msra.mxu0 0
    %2050 = vmatprep.subr.bf16.mxu0 0
    %2051 = vmatpush2.bf16.msra.mxu0 0
    %2052 = vmatprep.subr.bf16.mxu0 0
    %2053 = vmatpush2.bf16.msra.mxu0 0
    %2054 = vmatprep.subr.bf16.mxu0 0
    %2055 = vmatpush2.bf16.msra.mxu0 0
    %2056 = vmatprep.subr.bf16.mxu0 0
    %2057 = vmatpush2.bf16.msra.mxu0 0
    %2058 = vmatprep.subr.bf16.mxu0 0
    %2059 = vmatpush2.bf16.msra.mxu0 0
    %2060 = vmatprep.subr.bf16.mxu0 0
    %2061 = vmatpush2.bf16.msra.mxu0 0
    %2062 = vmatprep.mubr.bf16.mxu0 0
    %2063 = vmatmul.mubr.bf16.gmra.mxu0 %v2025
    %v2064 = vpop.f32.mrf.mxu0
    %v2065 = vadd.f32 0.0, %v2064
    %v2066 = vpop.f32.mrf.mxu0
    %v2067 = vpop.f32.mrf.mxu0
    %v2068 = vpop.f32.mrf.mxu0
    %2069 = vdwg.mxu0
    %2070 = vrot.lane.b32.xlu0 %v1667, 120
    %v2071 = vpop.permute.xlu0 %2070
    %v2073 = vsel %vm413, %v2021, 0
    %v2076 = vsel %vm549, %v2071, 0
    %2078 = vmatprep.subr.bf16.mxu0 0
    %2079 = vmatpush1.bf16.msra.mxu0 0
    %2080 = vmatprep.subr.bf16.mxu0 0
    %2081 = vmatpush1.bf16.msra.mxu0 0
    %2082 = vmatprep.subr.bf16.mxu0 0
    %2083 = vmatpush1.bf16.msra.mxu0 0
    %2084 = vmatprep.subr.bf16.mxu0 0
    %2085 = vmatpush1.bf16.msra.mxu0 0
    %2086 = vmatprep.subr.bf16.mxu0 0
    %2087 = vmatpush1.bf16.msra.mxu0 0
    %2088 = vmatprep.subr.bf16.mxu0 0
    %2089 = vmatpush1.bf16.msra.mxu0 0
    %2090 = vmatprep.subr.bf16.mxu0 0
    %2091 = vmatpush1.bf16.msra.mxu0 0
    %2092 = vmatprep.subr.bf16.mxu0 0
    %2093 = vmatpush1.bf16.msra.mxu0 %v2076
    %2094 = vmatprep.subr.bf16.mxu0 0
    %2095 = vmatpush2.bf16.msra.mxu0 0
    %2096 = vmatprep.subr.bf16.mxu0 0
    %2097 = vmatpush2.bf16.msra.mxu0 0
    %2098 = vmatprep.subr.bf16.mxu0 0
    %2099 = vmatpush2.bf16.msra.mxu0 0
    %2100 = vmatprep.subr.bf16.mxu0 0
    %2101 = vmatpush2.bf16.msra.mxu0 0
    %2102 = vmatprep.subr.bf16.mxu0 0
    %2103 = vmatpush2.bf16.msra.mxu0 0
    %2104 = vmatprep.subr.bf16.mxu0 0
    %2105 = vmatpush2.bf16.msra.mxu0 0
    %2106 = vmatprep.subr.bf16.mxu0 0
    %2107 = vmatpush2.bf16.msra.mxu0 0
    %2108 = vmatprep.subr.bf16.mxu0 0
    %2109 = vmatpush2.bf16.msra.mxu0 0
    %2110 = vmatprep.mubr.bf16.mxu0 0
    %2111 = vmatmul.mubr.bf16.gmra.mxu0 %v2073
    %v2112 = vpop.f32.mrf.mxu0
    %v2113 = vadd.f32 0.0, %v2112
    %v2114 = vpop.f32.mrf.mxu0
    %v2115 = vpop.f32.mrf.mxu0
    %v2116 = vpop.f32.mrf.mxu0
    %2117 = vdwg.mxu0
    %v2118 = vadd.f32 %v1797, %v2017
    %v2119 = vadd.f32 %v1799, %v2019
    %2120 = vrot.lane.b32.xlu0 %v1524, 112
    %v2121 = vpop.permute.xlu0 %2120
    %2122 = vrot.lane.b32.xlu0 %v1595, 112
    %v2123 = vpop.permute.xlu0 %2122
    %v2125 = vsel %vm413, %v2121, 0
    %v2128 = vsel %vm413, %v2123, 0
    %2130 = vmatprep.subr.bf16.mxu0 0
    %2131 = vmatpush1.bf16.xpose.msra.mxu0 0
    %2132 = vmatprep.subr.bf16.mxu0 0
    %2133 = vmatpush1.bf16.xpose.msra.mxu0 0
    %2134 = vmatprep.subr.bf16.mxu0 0
    %2135 = vmatpush1.bf16.xpose.msra.mxu0 0
    %2136 = vmatprep.subr.bf16.mxu0 0
    %2137 = vmatpush1.bf16.xpose.msra.mxu0 0
    %2138 = vmatprep.subr.bf16.mxu0 0
    %2139 = vmatpush1.bf16.xpose.msra.mxu0 0
    %2140 = vmatprep.subr.bf16.mxu0 0
    %2141 = vmatpush1.bf16.xpose.msra.mxu0 0
    %2142 = vmatprep.subr.bf16.mxu0 0
    %2143 = vmatpush1.bf16.xpose.msra.mxu0 0
    %2144 = vmatprep.subr.bf16.mxu0 0
    %2145 = vmatpush1.bf16.xpose.msra.mxu0 %v2128
    %2146 = vmatprep.subr.bf16.mxu0 0
    %2147 = vmatpush2.bf16.xpose.msra.mxu0 0
    %2148 = vmatprep.subr.bf16.mxu0 0
    %2149 = vmatpush2.bf16.xpose.msra.mxu0 0
    %2150 = vmatprep.subr.bf16.mxu0 0
    %2151 = vmatpush2.bf16.xpose.msra.mxu0 0
    %2152 = vmatprep.subr.bf16.mxu0 0
    %2153 = vmatpush2.bf16.xpose.msra.mxu0 0
    %2154 = vmatprep.subr.bf16.mxu0 0
    %2155 = vmatpush2.bf16.xpose.msra.mxu0 0
    %2156 = vmatprep.subr.bf16.mxu0 0
    %2157 = vmatpush2.bf16.xpose.msra.mxu0 0
    %2158 = vmatprep.subr.bf16.mxu0 0
    %2159 = vmatpush2.bf16.xpose.msra.mxu0 0
    %2160 = vmatprep.subr.bf16.mxu0 0
    %2161 = vmatpush2.bf16.xpose.msra.mxu0 0
    %2162 = vmatprep.mubr.bf16.mxu0 0
    %2163 = vmatmul.mubr.bf16.gmra.mxu0 %v2125
    %v2164 = vpop.f32.mrf.mxu0
    %v2165 = vadd.f32 0.0, %v2164
    %v2166 = vpop.f32.mrf.mxu0
    %v2167 = vpop.f32.mrf.mxu0
    %v2168 = vpop.f32.mrf.mxu0
    %2169 = vdwg.mxu0
    %2170 = vrot.lane.b32.xlu0 %v1525, 112
    %v2171 = vpop.permute.xlu0 %2170
    %2172 = vrot.lane.b32.xlu0 %v1596, 112
    %v2173 = vpop.permute.xlu0 %2172
    %v2175 = vsel %vm413, %v2171, 0
    %v2178 = vsel %vm413, %v2173, 0
    %2180 = vmatprep.subr.bf16.mxu0 0
    %2181 = vmatpush1.bf16.xpose.msra.mxu0 0
    %2182 = vmatprep.subr.bf16.mxu0 0
    %2183 = vmatpush1.bf16.xpose.msra.mxu0 0
    %2184 = vmatprep.subr.bf16.mxu0 0
    %2185 = vmatpush1.bf16.xpose.msra.mxu0 0
    %2186 = vmatprep.subr.bf16.mxu0 0
    %2187 = vmatpush1.bf16.xpose.msra.mxu0 0
    %2188 = vmatprep.subr.bf16.mxu0 0
    %2189 = vmatpush1.bf16.xpose.msra.mxu0 0
    %2190 = vmatprep.subr.bf16.mxu0 0
    %2191 = vmatpush1.bf16.xpose.msra.mxu0 0
    %2192 = vmatprep.subr.bf16.mxu0 0
    %2193 = vmatpush1.bf16.xpose.msra.mxu0 0
    %2194 = vmatprep.subr.bf16.mxu0 0
    %2195 = vmatpush1.bf16.xpose.msra.mxu0 %v2178
    %2196 = vmatprep.subr.bf16.mxu0 0
    %2197 = vmatpush2.bf16.xpose.msra.mxu0 0
    %2198 = vmatprep.subr.bf16.mxu0 0
    %2199 = vmatpush2.bf16.xpose.msra.mxu0 0
    %2200 = vmatprep.subr.bf16.mxu0 0
    %2201 = vmatpush2.bf16.xpose.msra.mxu0 0
    %2202 = vmatprep.subr.bf16.mxu0 0
    %2203 = vmatpush2.bf16.xpose.msra.mxu0 0
    %2204 = vmatprep.subr.bf16.mxu0 0
    %2205 = vmatpush2.bf16.xpose.msra.mxu0 0
    %2206 = vmatprep.subr.bf16.mxu0 0
    %2207 = vmatpush2.bf16.xpose.msra.mxu0 0
    %2208 = vmatprep.subr.bf16.mxu0 0
    %2209 = vmatpush2.bf16.xpose.msra.mxu0 0
    %2210 = vmatprep.subr.bf16.mxu0 0
    %2211 = vmatpush2.bf16.xpose.msra.mxu0 0
    %2212 = vmatprep.mubr.bf16.mxu0 0
    %2213 = vmatmul.mubr.bf16.gmra.mxu0 %v2175
    %v2214 = vpop.f32.mrf.mxu0
    %v2215 = vadd.f32 0.0, %v2214
    %v2216 = vpop.f32.mrf.mxu0
    %v2217 = vpop.f32.mrf.mxu0
    %v2218 = vpop.f32.mrf.mxu0
    %2219 = vdwg.mxu0
    %v2220 = vmul.f32 %v2165, 0.35355338
    %v2221 = vmul.f32 %v2215, 0.35355338
    %v2222 = vadd.f32 %v2220, %v1769
    %v2223 = vadd.f32 %v2221, %v1773
    %v2224 = vsel %vm413, %v2222, -inf
    %2225 = vmax.xlane.f32.xlu0 %v2224
    %v2226 = vpop.xlane.xlu0 %2225
    %v2227 = vsel %vm413, %v2223, -inf
    %2228 = vmax.xlane.f32.xlu0 %v2227
    %v2229 = vpop.xlane.xlu0 %2228
    %v2230 = vsub.f32 %v2222, %v2226
    %v2231 = vsub.f32 %v2223, %v2229
    %v2232 = vmul.f32 %v2230, 1.442695
    %v2233 = vpow.pop %v2232
    %v2234 = vmul.f32 %v2231, 1.442695
    %v2235 = vpow.pop %v2234
    %v2236 = vsel %vm413, %v2233, 0.0
    %2237 = vadd.xlane.f32.xlu0 %v2236
    %v2238 = vpop.xlane.xlu0 %2237
    %v2239 = vsel %vm413, %v2235, 0.0
    %2240 = vadd.xlane.f32.xlu0 %v2239
    %v2241 = vpop.xlane.xlu0 %2240
    %v2242 = vrcp.pop %v2238
    %v2243 = vmul.f32 %v2233, %v2242
    %v2244 = vrcp.pop %v2241
    %v2245 = vmul.f32 %v2235, %v2244
    %v2246 = vpack.c.bf16 %v2243, %v2243
    %v2247 = vpack.c.bf16 %v2245, %v2245
    %2248 = vrot.lane.b32.xlu0 %v1666, 112
    %v2249 = vpop.permute.xlu0 %2248
    %v2251 = vsel %vm413, %v2246, 0
    %v2254 = vsel %vm549, %v2249, 0
    %2256 = vmatprep.subr.bf16.mxu0 0
    %2257 = vmatpush1.bf16.msra.mxu0 0
    %2258 = vmatprep.subr.bf16.mxu0 0
    %2259 = vmatpush1.bf16.msra.mxu0 0
    %2260 = vmatprep.subr.bf16.mxu0 0
    %2261 = vmatpush1.bf16.msra.mxu0 0
    %2262 = vmatprep.subr.bf16.mxu0 0
    %2263 = vmatpush1.bf16.msra.mxu0 0
    %2264 = vmatprep.subr.bf16.mxu0 0
    %2265 = vmatpush1.bf16.msra.mxu0 0
    %2266 = vmatprep.subr.bf16.mxu0 0
    %2267 = vmatpush1.bf16.msra.mxu0 0
    %2268 = vmatprep.subr.bf16.mxu0 0
    %2269 = vmatpush1.bf16.msra.mxu0 0
    %2270 = vmatprep.subr.bf16.mxu0 0
    %2271 = vmatpush1.bf16.msra.mxu0 %v2254
    %2272 = vmatprep.subr.bf16.mxu0 0
    %2273 = vmatpush2.bf16.msra.mxu0 0
    %2274 = vmatprep.subr.bf16.mxu0 0
    %2275 = vmatpush2.bf16.msra.mxu0 0
    %2276 = vmatprep.subr.bf16.mxu0 0
    %2277 = vmatpush2.bf16.msra.mxu0 0
    %2278 = vmatprep.subr.bf16.mxu0 0
    %2279 = vmatpush2.bf16.msra.mxu0 0
    %2280 = vmatprep.subr.bf16.mxu0 0
    %2281 = vmatpush2.bf16.msra.mxu0 0
    %2282 = vmatprep.subr.bf16.mxu0 0
    %2283 = vmatpush2.bf16.msra.mxu0 0
    %2284 = vmatprep.subr.bf16.mxu0 0
    %2285 = vmatpush2.bf16.msra.mxu0 0
    %2286 = vmatprep.subr.bf16.mxu0 0
    %2287 = vmatpush2.bf16.msra.mxu0 0
    %2288 = vmatprep.mubr.bf16.mxu0 0
    %2289 = vmatmul.mubr.bf16.gmra.mxu0 %v2251
    %v2290 = vpop.f32.mrf.mxu0
    %v2291 = vadd.f32 0.0, %v2290
    %v2292 = vpop.f32.mrf.mxu0
    %v2293 = vpop.f32.mrf.mxu0
    %v2294 = vpop.f32.mrf.mxu0
    %2295 = vdwg.mxu0
    %2296 = vrot.lane.b32.xlu0 %v1667, 112
    %v2297 = vpop.permute.xlu0 %2296
    %v2299 = vsel %vm413, %v2247, 0
    %v2302 = vsel %vm549, %v2297, 0
    %2304 = vmatprep.subr.bf16.mxu0 0
    %2305 = vmatpush1.bf16.msra.mxu0 0
    %2306 = vmatprep.subr.bf16.mxu0 0
    %2307 = vmatpush1.bf16.msra.mxu0 0
    %2308 = vmatprep.subr.bf16.mxu0 0
    %2309 = vmatpush1.bf16.msra.mxu0 0
    %2310 = vmatprep.subr.bf16.mxu0 0
    %2311 = vmatpush1.bf16.msra.mxu0 0
    %2312 = vmatprep.subr.bf16.mxu0 0
    %2313 = vmatpush1.bf16.msra.mxu0 0
    %2314 = vmatprep.subr.bf16.mxu0 0
    %2315 = vmatpush1.bf16.msra.mxu0 0
    %2316 = vmatprep.subr.bf16.mxu0 0
    %2317 = vmatpush1.bf16.msra.mxu0 0
    %2318 = vmatprep.subr.bf16.mxu0 0
    %2319 = vmatpush1.bf16.msra.mxu0 %v2302
    %2320 = vmatprep.subr.bf16.mxu0 0
    %2321 = vmatpush2.bf16.msra.mxu0 0
    %2322 = vmatprep.subr.bf16.mxu0 0
    %2323 = vmatpush2.bf16.msra.mxu0 0
    %2324 = vmatprep.subr.bf16.mxu0 0
    %2325 = vmatpush2.bf16.msra.mxu0 0
    %2326 = vmatprep.subr.bf16.mxu0 0
    %2327 = vmatpush2.bf16.msra.mxu0 0
    %2328 = vmatprep.subr.bf16.mxu0 0
    %2329 = vmatpush2.bf16.msra.mxu0 0
    %2330 = vmatprep.subr.bf16.mxu0 0
    %2331 = vmatpush2.bf16.msra.mxu0 0
    %2332 = vmatprep.subr.bf16.mxu0 0
    %2333 = vmatpush2.bf16.msra.mxu0 0
    %2334 = vmatprep.subr.bf16.mxu0 0
    %2335 = vmatpush2.bf16.msra.mxu0 0
    %2336 = vmatprep.mubr.bf16.mxu0 0
    %2337 = vmatmul.mubr.bf16.gmra.mxu0 %v2299
    %v2338 = vpop.f32.mrf.mxu0
    %v2339 = vadd.f32 0.0, %v2338
    %v2340 = vpop.f32.mrf.mxu0
    %v2341 = vpop.f32.mrf.mxu0
    %v2342 = vpop.f32.mrf.mxu0
    %2343 = vdwg.mxu0
    %v2344 = vadd.f32 %v2118, %v2243
    %v2345 = vadd.f32 %v2119, %v2245
    %2346 = vrot.lane.b32.xlu0 %v1524, 104
    %v2347 = vpop.permute.xlu0 %2346
    %2348 = vrot.lane.b32.xlu0 %v1595, 104
    %v2349 = vpop.permute.xlu0 %2348
    %v2351 = vsel %vm413, %v2347, 0
    %v2354 = vsel %vm413, %v2349, 0
    %2356 = vmatprep.subr.bf16.mxu0 0
    %2357 = vmatpush1.bf16.xpose.msra.mxu0 0
    %2358 = vmatprep.subr.bf16.mxu0 0
    %2359 = vmatpush1.bf16.xpose.msra.mxu0 0
    %2360 = vmatprep.subr.bf16.mxu0 0
    %2361 = vmatpush1.bf16.xpose.msra.mxu0 0
    %2362 = vmatprep.subr.bf16.mxu0 0
    %2363 = vmatpush1.bf16.xpose.msra.mxu0 0
    %2364 = vmatprep.subr.bf16.mxu0 0
    %2365 = vmatpush1.bf16.xpose.msra.mxu0 0
    %2366 = vmatprep.subr.bf16.mxu0 0
    %2367 = vmatpush1.bf16.xpose.msra.mxu0 0
    %2368 = vmatprep.subr.bf16.mxu0 0
    %2369 = vmatpush1.bf16.xpose.msra.mxu0 0
    %2370 = vmatprep.subr.bf16.mxu0 0
    %2371 = vmatpush1.bf16.xpose.msra.mxu0 %v2354
    %2372 = vmatprep.subr.bf16.mxu0 0
    %2373 = vmatpush2.bf16.xpose.msra.mxu0 0
    %2374 = vmatprep.subr.bf16.mxu0 0
    %2375 = vmatpush2.bf16.xpose.msra.mxu0 0
    %2376 = vmatprep.subr.bf16.mxu0 0
    %2377 = vmatpush2.bf16.xpose.msra.mxu0 0
    %2378 = vmatprep.subr.bf16.mxu0 0
    %2379 = vmatpush2.bf16.xpose.msra.mxu0 0
    %2380 = vmatprep.subr.bf16.mxu0 0
    %2381 = vmatpush2.bf16.xpose.msra.mxu0 0
    %2382 = vmatprep.subr.bf16.mxu0 0
    %2383 = vmatpush2.bf16.xpose.msra.mxu0 0
    %2384 = vmatprep.subr.bf16.mxu0 0
    %2385 = vmatpush2.bf16.xpose.msra.mxu0 0
    %2386 = vmatprep.subr.bf16.mxu0 0
    %2387 = vmatpush2.bf16.xpose.msra.mxu0 0
    %2388 = vmatprep.mubr.bf16.mxu0 0
    %2389 = vmatmul.mubr.bf16.gmra.mxu0 %v2351
    %v2390 = vpop.f32.mrf.mxu0
    %v2391 = vadd.f32 0.0, %v2390
    %v2392 = vpop.f32.mrf.mxu0
    %v2393 = vpop.f32.mrf.mxu0
    %v2394 = vpop.f32.mrf.mxu0
    %2395 = vdwg.mxu0
    %2396 = vrot.lane.b32.xlu0 %v1525, 104
    %v2397 = vpop.permute.xlu0 %2396
    %2398 = vrot.lane.b32.xlu0 %v1596, 104
    %v2399 = vpop.permute.xlu0 %2398
    %v2401 = vsel %vm413, %v2397, 0
    %v2404 = vsel %vm413, %v2399, 0
    %2406 = vmatprep.subr.bf16.mxu0 0
    %2407 = vmatpush1.bf16.xpose.msra.mxu0 0
    %2408 = vmatprep.subr.bf16.mxu0 0
    %2409 = vmatpush1.bf16.xpose.msra.mxu0 0
    %2410 = vmatprep.subr.bf16.mxu0 0
    %2411 = vmatpush1.bf16.xpose.msra.mxu0 0
    %2412 = vmatprep.subr.bf16.mxu0 0
    %2413 = vmatpush1.bf16.xpose.msra.mxu0 0
    %2414 = vmatprep.subr.bf16.mxu0 0
    %2415 = vmatpush1.bf16.xpose.msra.mxu0 0
    %2416 = vmatprep.subr.bf16.mxu0 0
    %2417 = vmatpush1.bf16.xpose.msra.mxu0 0
    %2418 = vmatprep.subr.bf16.mxu0 0
    %2419 = vmatpush1.bf16.xpose.msra.mxu0 0
    %2420 = vmatprep.subr.bf16.mxu0 0
    %2421 = vmatpush1.bf16.xpose.msra.mxu0 %v2404
    %2422 = vmatprep.subr.bf16.mxu0 0
    %2423 = vmatpush2.bf16.xpose.msra.mxu0 0
    %2424 = vmatprep.subr.bf16.mxu0 0
    %2425 = vmatpush2.bf16.xpose.msra.mxu0 0
    %2426 = vmatprep.subr.bf16.mxu0 0
    %2427 = vmatpush2.bf16.xpose.msra.mxu0 0
    %2428 = vmatprep.subr.bf16.mxu0 0
    %2429 = vmatpush2.bf16.xpose.msra.mxu0 0
    %2430 = vmatprep.subr.bf16.mxu0 0
    %2431 = vmatpush2.bf16.xpose.msra.mxu0 0
    %2432 = vmatprep.subr.bf16.mxu0 0
    %2433 = vmatpush2.bf16.xpose.msra.mxu0 0
    %2434 = vmatprep.subr.bf16.mxu0 0
    %2435 = vmatpush2.bf16.xpose.msra.mxu0 0
    %2436 = vmatprep.subr.bf16.mxu0 0
    %2437 = vmatpush2.bf16.xpose.msra.mxu0 0
    %2438 = vmatprep.mubr.bf16.mxu0 0
    %2439 = vmatmul.mubr.bf16.gmra.mxu0 %v2401
    %v2440 = vpop.f32.mrf.mxu0
    %v2441 = vadd.f32 0.0, %v2440
    %v2442 = vpop.f32.mrf.mxu0
    %v2443 = vpop.f32.mrf.mxu0
    %v2444 = vpop.f32.mrf.mxu0
    %2445 = vdwg.mxu0
    %v2446 = vmul.f32 %v2391, 0.35355338
    %v2447 = vmul.f32 %v2441, 0.35355338
    %v2448 = vadd.f32 %v2446, %v1769
    %v2449 = vadd.f32 %v2447, %v1773
    %v2450 = vsel %vm413, %v2448, -inf
    %2451 = vmax.xlane.f32.xlu0 %v2450
    %v2452 = vpop.xlane.xlu0 %2451
    %v2453 = vsel %vm413, %v2449, -inf
    %2454 = vmax.xlane.f32.xlu0 %v2453
    %v2455 = vpop.xlane.xlu0 %2454
    %v2456 = vsub.f32 %v2448, %v2452
    %v2457 = vsub.f32 %v2449, %v2455
    %v2458 = vmul.f32 %v2456, 1.442695
    %v2459 = vpow.pop %v2458
    %v2460 = vmul.f32 %v2457, 1.442695
    %v2461 = vpow.pop %v2460
    %v2462 = vsel %vm413, %v2459, 0.0
    %2463 = vadd.xlane.f32.xlu0 %v2462
    %v2464 = vpop.xlane.xlu0 %2463
    %v2465 = vsel %vm413, %v2461, 0.0
    %2466 = vadd.xlane.f32.xlu0 %v2465
    %v2467 = vpop.xlane.xlu0 %2466
    %v2468 = vrcp.pop %v2464
    %v2469 = vmul.f32 %v2459, %v2468
    %v2470 = vrcp.pop %v2467
    %v2471 = vmul.f32 %v2461, %v2470
    %v2472 = vpack.c.bf16 %v2469, %v2469
    %v2473 = vpack.c.bf16 %v2471, %v2471
    %2474 = vrot.lane.b32.xlu0 %v1666, 104
    %v2475 = vpop.permute.xlu0 %2474
    %v2477 = vsel %vm413, %v2472, 0
    %v2480 = vsel %vm549, %v2475, 0
    %2482 = vmatprep.subr.bf16.mxu0 0
    %2483 = vmatpush1.bf16.msra.mxu0 0
    %2484 = vmatprep.subr.bf16.mxu0 0
    %2485 = vmatpush1.bf16.msra.mxu0 0
    %2486 = vmatprep.subr.bf16.mxu0 0
    %2487 = vmatpush1.bf16.msra.mxu0 0
    %2488 = vmatprep.subr.bf16.mxu0 0
    %2489 = vmatpush1.bf16.msra.mxu0 0
    %2490 = vmatprep.subr.bf16.mxu0 0
    %2491 = vmatpush1.bf16.msra.mxu0 0
    %2492 = vmatprep.subr.bf16.mxu0 0
    %2493 = vmatpush1.bf16.msra.mxu0 0
    %2494 = vmatprep.subr.bf16.mxu0 0
    %2495 = vmatpush1.bf16.msra.mxu0 0
    %2496 = vmatprep.subr.bf16.mxu0 0
    %2497 = vmatpush1.bf16.msra.mxu0 %v2480
    %2498 = vmatprep.subr.bf16.mxu0 0
    %2499 = vmatpush2.bf16.msra.mxu0 0
    %2500 = vmatprep.subr.bf16.mxu0 0
    %2501 = vmatpush2.bf16.msra.mxu0 0
    %2502 = vmatprep.subr.bf16.mxu0 0
    %2503 = vmatpush2.bf16.msra.mxu0 0
    %2504 = vmatprep.subr.bf16.mxu0 0
    %2505 = vmatpush2.bf16.msra.mxu0 0
    %2506 = vmatprep.subr.bf16.mxu0 0
    %2507 = vmatpush2.bf16.msra.mxu0 0
    %2508 = vmatprep.subr.bf16.mxu0 0
    %2509 = vmatpush2.bf16.msra.mxu0 0
    %2510 = vmatprep.subr.bf16.mxu0 0
    %2511 = vmatpush2.bf16.msra.mxu0 0
    %2512 = vmatprep.subr.bf16.mxu0 0
    %2513 = vmatpush2.bf16.msra.mxu0 0
    %2514 = vmatprep.mubr.bf16.mxu0 0
    %2515 = vmatmul.mubr.bf16.gmra.mxu0 %v2477
    %v2516 = vpop.f32.mrf.mxu0
    %v2517 = vadd.f32 0.0, %v2516
    %v2518 = vpop.f32.mrf.mxu0
    %v2519 = vpop.f32.mrf.mxu0
    %v2520 = vpop.f32.mrf.mxu0
    %2521 = vdwg.mxu0
    %2522 = vrot.lane.b32.xlu0 %v1667, 104
    %v2523 = vpop.permute.xlu0 %2522
    %v2525 = vsel %vm413, %v2473, 0
    %v2528 = vsel %vm549, %v2523, 0
    %2530 = vmatprep.subr.bf16.mxu0 0
    %2531 = vmatpush1.bf16.msra.mxu0 0
    %2532 = vmatprep.subr.bf16.mxu0 0
    %2533 = vmatpush1.bf16.msra.mxu0 0
    %2534 = vmatprep.subr.bf16.mxu0 0
    %2535 = vmatpush1.bf16.msra.mxu0 0
    %2536 = vmatprep.subr.bf16.mxu0 0
    %2537 = vmatpush1.bf16.msra.mxu0 0
    %2538 = vmatprep.subr.bf16.mxu0 0
    %2539 = vmatpush1.bf16.msra.mxu0 0
    %2540 = vmatprep.subr.bf16.mxu0 0
    %2541 = vmatpush1.bf16.msra.mxu0 0
    %2542 = vmatprep.subr.bf16.mxu0 0
    %2543 = vmatpush1.bf16.msra.mxu0 0
    %2544 = vmatprep.subr.bf16.mxu0 0
    %2545 = vmatpush1.bf16.msra.mxu0 %v2528
    %2546 = vmatprep.subr.bf16.mxu0 0
    %2547 = vmatpush2.bf16.msra.mxu0 0
    %2548 = vmatprep.subr.bf16.mxu0 0
    %2549 = vmatpush2.bf16.msra.mxu0 0
    %2550 = vmatprep.subr.bf16.mxu0 0
    %2551 = vmatpush2.bf16.msra.mxu0 0
    %2552 = vmatprep.subr.bf16.mxu0 0
    %2553 = vmatpush2.bf16.msra.mxu0 0
    %2554 = vmatprep.subr.bf16.mxu0 0
    %2555 = vmatpush2.bf16.msra.mxu0 0
    %2556 = vmatprep.subr.bf16.mxu0 0
    %2557 = vmatpush2.bf16.msra.mxu0 0
    %2558 = vmatprep.subr.bf16.mxu0 0
    %2559 = vmatpush2.bf16.msra.mxu0 0
    %2560 = vmatprep.subr.bf16.mxu0 0
    %2561 = vmatpush2.bf16.msra.mxu0 0
    %2562 = vmatprep.mubr.bf16.mxu0 0
    %2563 = vmatmul.mubr.bf16.gmra.mxu0 %v2525
    %v2564 = vpop.f32.mrf.mxu0
    %v2565 = vadd.f32 0.0, %v2564
    %v2566 = vpop.f32.mrf.mxu0
    %v2567 = vpop.f32.mrf.mxu0
    %v2568 = vpop.f32.mrf.mxu0
    %2569 = vdwg.mxu0
    %v2570 = vadd.f32 %v2344, %v2469
    %v2571 = vadd.f32 %v2345, %v2471
    %2574 = vrot.lane.b32.xlu0 %v2065, 8
    %v2575 = vpop.permute.xlu0 %2574
    %2576 = vrot.lane.b32.xlu0 %v2113, 8
    %v2577 = vpop.permute.xlu0 %2576
    %2582 = vrot.lane.b32.xlu0 %v2291, 16
    %v2583 = vpop.permute.xlu0 %2582
    %2584 = vrot.lane.b32.xlu0 %v2339, 16
    %v2585 = vpop.permute.xlu0 %2584
    %2590 = vrot.lane.b32.xlu0 %v2517, 24
    %v2591 = vpop.permute.xlu0 %2590
    %2592 = vrot.lane.b32.xlu0 %v2565, 24
    %v2593 = vpop.permute.xlu0 %2592
    %v2596 = vsel %vm413, %v1843, %v2575
    %v2597 = vsel %vm413, %v1889, %v2577
    %v2598 = vsel %vm1337, %v2596, %v2583
    %v2599 = vsel %vm1337, %v2597, %v2585
    %v2600 = vsel %vm1340, %v2598, %v2591
    %v2601 = vsel %vm1340, %v2599, %v2593
    %v2602 = vpack.c.bf16 %v2601, %v2600
    %v2603 = vld [vmem:[#allocation13] sm:$0xf]
    %v2604 = vld [vmem:[#allocation13 + $0x4] sm:$0xf]
    %v2605 = vld [vmem:[#allocation13 + $0x8] sm:$0xf]
    %v2606 = vld [vmem:[#allocation13 + $0xc] sm:$0xf]
    %v2607 = vlaneseq
    %v2608 = vshrl.u32 %v2607, 7
    %v2609 = vsub.s32 7, %v2608
    %v2610 = vrot.slane %v194, %v2609
    %v2615 = vunpack.c.l.b16 %v2603
    %v2616 = vunpack.c.l.b16 %v2604
    %v2617 = vunpack.c.l.b16 %v2605
    %v2618 = vunpack.c.l.b16 %v2606
    %v2619 = vpack.c.b16 %v2616, %v2615
    %v2620 = vpack.c.b16 %v2618, %v2617
    %v2624 = vsel %vm221, %v2602, 0
    %2626 = vmatprep.subr.bf16.mxu0 0
    %2627 = vmatpush1.bf16.msra.mxu0 0
    %2628 = vmatprep.subr.bf16.mxu0 0
    %2629 = vmatpush1.bf16.msra.mxu0 0
    %2630 = vmatprep.subr.bf16.mxu0 0
    %2631 = vmatpush1.bf16.msra.mxu0 0
    %2632 = vmatprep.subr.bf16.mxu0 0
    %2633 = vmatpush1.bf16.msra.mxu0 0
    %2634 = vmatprep.subr.bf16.mxu0 0
    %2635 = vmatpush1.bf16.msra.mxu0 0
    %2636 = vmatprep.subr.bf16.mxu0 0
    %2637 = vmatpush1.bf16.msra.mxu0 0
    %2638 = vmatprep.subr.bf16.mxu0 0
    %2639 = vmatpush1.bf16.msra.mxu0 %v2620
    %2640 = vmatprep.subr.bf16.mxu0 0
    %2641 = vmatpush1.bf16.msra.mxu0 %v2619
    %2642 = vmatprep.subr.bf16.mxu0 0
    %2643 = vmatpush2.bf16.msra.mxu0 0
    %2644 = vmatprep.subr.bf16.mxu0 0
    %2645 = vmatpush2.bf16.msra.mxu0 0
    %2646 = vmatprep.subr.bf16.mxu0 0
    %2647 = vmatpush2.bf16.msra.mxu0 0
    %2648 = vmatprep.subr.bf16.mxu0 0
    %2649 = vmatpush2.bf16.msra.mxu0 0
    %2650 = vmatprep.subr.bf16.mxu0 0
    %2651 = vmatpush2.bf16.msra.mxu0 0
    %2652 = vmatprep.subr.bf16.mxu0 0
    %2653 = vmatpush2.bf16.msra.mxu0 0
    %2654 = vmatprep.subr.bf16.mxu0 0
    %2655 = vmatpush2.bf16.msra.mxu0 0
    %2656 = vmatprep.subr.bf16.mxu0 0
    %2657 = vmatpush2.bf16.msra.mxu0 0
    %2658 = vmatprep.mubr.bf16.mxu0 0
    %2659 = vmatmul.mubr.bf16.gmra.mxu0 %v2624
    %v2660 = vpop.f32.mrf.mxu0
    %v2661 = vadd.f32 %v2610, %v2660
    %v2662 = vpop.f32.mrf.mxu0
    %v2663 = vpop.f32.mrf.mxu0
    %v2664 = vadd.f32 %v2610, %v2663
    %v2665 = vpop.f32.mrf.mxu0
    %2666 = vdwg.mxu0
    %v2667 = vadd.f32 %v1447, %v2661
    %v2668 = vadd.f32 %v1448, %v2664
    %v2669 = vsel %vm221, %v2667, 0.0
    %2670 = vadd.xlane.f32.xlu0 %v2669
    %v2671 = vpop.xlane.xlu0 %2670
    %v2672 = vsel %vm221, %v2668, 0.0
    %2673 = vadd.xlane.f32.xlu0 %v2672
    %v2674 = vpop.xlane.xlu0 %2673
    %v2675 = vmul.f32 %v2671, %v1416
    %v2676 = vmul.f32 %v2674, %v1416
    %v2677 = vsub.f32 %v2667, %v2675
    %v2678 = vsub.f32 %v2668, %v2676
    %v2679 = vmul.f32 %v2677, %v2677
    %v2680 = vmul.f32 %v2678, %v2678
    %v2681 = vsel %vm221, %v2679, 0.0
    %2682 = vadd.xlane.f32.xlu0 %v2681
    %v2683 = vpop.xlane.xlu0 %2682
    %v2684 = vsel %vm221, %v2680, 0.0
    %2685 = vadd.xlane.f32.xlu0 %v2684
    %v2686 = vpop.xlane.xlu0 %2685
    %v2687 = vmul.f32 %v2683, %v1416
    %v2688 = vmul.f32 %v2686, %v1416
    %v2689 = vadd.f32 %v2687, 1e-05
    %v2690 = vadd.f32 %v2688, 1e-05
    %v2691 = vrsqrt.pop %v2689
    %v2692 = vrsqrt.pop %v2690
    %v2693 = vmul.f32 %v2677, %v2691
    %v2694 = vmul.f32 %v2678, %v2692
    %v2695 = vlaneseq
    %v2696 = vshrl.u32 %v2695, 7
    %v2697 = vsub.s32 3, %v2696
    %v2698 = vrot.slane %v195, %v2697
    %v2699 = vmul.f32 %v2693, %v2698
    %v2700 = vmul.f32 %v2694, %v2698
    %v2701 = vlaneseq
    %v2702 = vshrl.u32 %v2701, 7
    %v2703 = vsub.s32 4, %v2702
    %v2704 = vrot.slane %v195, %v2703
    %v2705 = vadd.f32 %v2699, %v2704
    %v2706 = vadd.f32 %v2700, %v2704
    %v2707 = vpack.c.bf16 %v2706, %v2705
    %v2708 = vld [vmem:[#allocation14] sm:$0xf]
    %v2709 = vld [vmem:[#allocation14 + $0x4] sm:$0xf]
    %v2710 = vld [vmem:[#allocation14 + $0x8] sm:$0xf]
    %v2711 = vld [vmem:[#allocation14 + $0xc] sm:$0xf]
    %v2713 = vlaneseq
    %v2714 = vshrl.u32 %v2713, 7
    %v2715 = vsub.s32 0, %v2714
    %v2716 = vrot.slane %v196, %v2715
    %v2722 = vunpack.c.l.b16 %v2708
    %v2723 = vunpack.c.l.b16 %v2709
    %v2724 = vunpack.c.l.b16 %v2710
    %v2725 = vunpack.c.l.b16 %v2711
    %v2726 = vpack.c.b16 %v2723, %v2722
    %v2727 = vpack.c.b16 %v2725, %v2724
    %v2731 = vsel %vm221, %v2707, 0
    %2733 = vmatprep.subr.bf16.mxu0 0
    %2734 = vmatpush1.bf16.msra.mxu0 0
    %2735 = vmatprep.subr.bf16.mxu0 0
    %2736 = vmatpush1.bf16.msra.mxu0 0
    %2737 = vmatprep.subr.bf16.mxu0 0
    %2738 = vmatpush1.bf16.msra.mxu0 0
    %2739 = vmatprep.subr.bf16.mxu0 0
    %2740 = vmatpush1.bf16.msra.mxu0 0
    %2741 = vmatprep.subr.bf16.mxu0 0
    %2742 = vmatpush1.bf16.msra.mxu0 0
    %2743 = vmatprep.subr.bf16.mxu0 0
    %2744 = vmatpush1.bf16.msra.mxu0 0
    %2745 = vmatprep.subr.bf16.mxu0 0
    %2746 = vmatpush1.bf16.msra.mxu0 %v2727
    %2747 = vmatprep.subr.bf16.mxu0 0
    %2748 = vmatpush1.bf16.msra.mxu0 %v2726
    %2749 = vmatprep.subr.bf16.mxu0 0
    %2750 = vmatpush2.bf16.msra.mxu0 0
    %2751 = vmatprep.subr.bf16.mxu0 0
    %2752 = vmatpush2.bf16.msra.mxu0 0
    %2753 = vmatprep.subr.bf16.mxu0 0
    %2754 = vmatpush2.bf16.msra.mxu0 0
    %2755 = vmatprep.subr.bf16.mxu0 0
    %2756 = vmatpush2.bf16.msra.mxu0 0
    %2757 = vmatprep.subr.bf16.mxu0 0
    %2758 = vmatpush2.bf16.msra.mxu0 0
    %2759 = vmatprep.subr.bf16.mxu0 0
    %2760 = vmatpush2.bf16.msra.mxu0 0
    %2761 = vmatprep.subr.bf16.mxu0 0
    %2762 = vmatpush2.bf16.msra.mxu0 0
    %2763 = vmatprep.subr.bf16.mxu0 0
    %2764 = vmatpush2.bf16.msra.mxu0 0
    %2765 = vmatprep.mubr.bf16.mxu0 0
    %2766 = vmatmul.mubr.bf16.gmra.mxu0 %v2731
    %v2767 = vpop.f32.mrf.mxu0
    %v2768 = vadd.f32 %v2716, %v2767
    %v2769 = vpop.f32.mrf.mxu0
    %v2770 = vpop.f32.mrf.mxu0
    %v2771 = vadd.f32 %v2716, %v2770
    %v2772 = vpop.f32.mrf.mxu0
    %2773 = vdwg.mxu0
    %v2774 = vmax.f32 %v2768, 0.0
    %v2775 = vmax.f32 %v2771, 0.0
    %v2776 = vpack.c.bf16 %v2775, %v2774
    %v2777 = vld [vmem:[%s11] sm:$0xf]
    %v2778 = vld [vmem:[%s11 + $0x4] sm:$0xf]
    %v2779 = vld [vmem:[%s11 + $0x8] sm:$0xf]
    %v2780 = vld [vmem:[%s11 + $0xc] sm:$0xf]
    %v2781 = vld [vmem:[%s11 + $0x10] sm:$0xf]
    %v2782 = vld [vmem:[%s11 + $0x14] sm:$0xf]
    %v2783 = vld [vmem:[%s11 + $0x18] sm:$0xf]
    %v2784 = vld [vmem:[%s11 + $0x1c] sm:$0xf]
    %v2785 = vlaneseq
    %v2786 = vshrl.u32 %v2785, 7
    %v2787 = vsub.s32 0, %v2786
    %v2788 = vrot.slane %v195, %v2787
    %v2797 = vunpack.c.l.b16 %v2777
    %v2798 = vunpack.c.l.b16 %v2778
    %v2799 = vunpack.c.l.b16 %v2779
    %v2800 = vunpack.c.l.b16 %v2780
    %v2801 = vunpack.c.l.b16 %v2781
    %v2802 = vunpack.c.l.b16 %v2782
    %v2803 = vunpack.c.l.b16 %v2783
    %v2804 = vunpack.c.l.b16 %v2784
    %v2805 = vpack.c.b16 %v2798, %v2797
    %v2806 = vpack.c.b16 %v2800, %v2799
    %v2807 = vpack.c.b16 %v2802, %v2801
    %v2808 = vpack.c.b16 %v2804, %v2803
    %vm2813 = vcmask 523264
    %v2815 = vsel %vm2813, %v2776, 0
    %2817 = vmatprep.subr.bf16.mxu0 0
    %2818 = vmatpush1.bf16.msra.mxu0 0
    %2819 = vmatprep.subr.bf16.mxu0 0
    %2820 = vmatpush1.bf16.msra.mxu0 0
    %2821 = vmatprep.subr.bf16.mxu0 0
    %2822 = vmatpush1.bf16.msra.mxu0 0
    %2823 = vmatprep.subr.bf16.mxu0 0
    %2824 = vmatpush1.bf16.msra.mxu0 0
    %2825 = vmatprep.subr.bf16.mxu0 0
    %2826 = vmatpush1.bf16.msra.mxu0 %v2808
    %2827 = vmatprep.subr.bf16.mxu0 0
    %2828 = vmatpush1.bf16.msra.mxu0 %v2807
    %2829 = vmatprep.subr.bf16.mxu0 0
    %2830 = vmatpush1.bf16.msra.mxu0 %v2806
    %2831 = vmatprep.subr.bf16.mxu0 0
    %2832 = vmatpush1.bf16.msra.mxu0 %v2805
    %2833 = vmatprep.subr.bf16.mxu0 0
    %2834 = vmatpush2.bf16.msra.mxu0 0
    %2835 = vmatprep.subr.bf16.mxu0 0
    %2836 = vmatpush2.bf16.msra.mxu0 0
    %2837 = vmatprep.subr.bf16.mxu0 0
    %2838 = vmatpush2.bf16.msra.mxu0 0
    %2839 = vmatprep.subr.bf16.mxu0 0
    %2840 = vmatpush2.bf16.msra.mxu0 0
    %2841 = vmatprep.subr.bf16.mxu0 0
    %2842 = vmatpush2.bf16.msra.mxu0 0
    %2843 = vmatprep.subr.bf16.mxu0 0
    %2844 = vmatpush2.bf16.msra.mxu0 0
    %2845 = vmatprep.subr.bf16.mxu0 0
    %2846 = vmatpush2.bf16.msra.mxu0 0
    %2847 = vmatprep.subr.bf16.mxu0 0
    %2848 = vmatpush2.bf16.msra.mxu0 0
    %2849 = vmatprep.mubr.bf16.mxu0 0
    %2850 = vmatmul.mubr.bf16.gmra.mxu0 %v2815
    %v2851 = vpop.f32.mrf.mxu0
    %v2852 = vadd.f32 %v2788, %v2851
    %v2853 = vpop.f32.mrf.mxu0
    %v2854 = vpop.f32.mrf.mxu0
    %v2855 = vadd.f32 %v2788, %v2854
    %v2856 = vpop.f32.mrf.mxu0
    %2857 = vdwg.mxu0
    %v2858 = vadd.f32 %v2705, %v2852
    %v2859 = vadd.f32 %v2706, %v2855
    %v2860 = vsel %vm221, %v2858, 0.0
    %2861 = vadd.xlane.f32.xlu0 %v2860
    %v2862 = vpop.xlane.xlu0 %2861
    %v2863 = vsel %vm221, %v2859, 0.0
    %2864 = vadd.xlane.f32.xlu0 %v2863
    %v2865 = vpop.xlane.xlu0 %2864
    %v2866 = vmul.f32 %v2862, %v1416
    %v2867 = vmul.f32 %v2865, %v1416
    %v2868 = vsub.f32 %v2858, %v2866
    %v2869 = vsub.f32 %v2859, %v2867
    %v2870 = vmul.f32 %v2868, %v2868
    %v2871 = vmul.f32 %v2869, %v2869
    %v2872 = vsel %vm221, %v2870, 0.0
    %2873 = vadd.xlane.f32.xlu0 %v2872
    %v2874 = vpop.xlane.xlu0 %2873
    %v2875 = vsel %vm221, %v2871, 0.0
    %2876 = vadd.xlane.f32.xlu0 %v2875
    %v2877 = vpop.xlane.xlu0 %2876
    %v2878 = vmul.f32 %v2874, %v1416
    %v2879 = vmul.f32 %v2877, %v1416
    %v2880 = vadd.f32 %v2878, 1e-05
    %v2881 = vadd.f32 %v2879, 1e-05
    %v2882 = vrsqrt.pop %v2880
    %v2883 = vrsqrt.pop %v2881
    %v2884 = vmul.f32 %v2868, %v2882
    %v2885 = vmul.f32 %v2869, %v2883
    %v2886 = vlaneseq
    %v2887 = vshrl.u32 %v2886, 7
    %v2888 = vsub.s32 5, %v2887
    %v2889 = vrot.slane %v195, %v2888
    %v2890 = vmul.f32 %v2884, %v2889
    %v2891 = vmul.f32 %v2885, %v2889
    %v2892 = vlaneseq
    %v2893 = vshrl.u32 %v2892, 7
    %v2894 = vsub.s32 6, %v2893
    %v2895 = vrot.slane %v195, %v2894
    %v2896 = vadd.f32 %v2890, %v2895
    %v2897 = vadd.f32 %v2891, %v2895
    %v2898 = vsel %vm221, %v2896, 0.0
    %v2899 = vsel %vm221, %v2897, 0.0
    %2900 = vst [vmem:[#allocation17] sm:$0xff] %v2898
    %2901 = vst [vmem:[#allocation17 + $0x8] sm:$0xff] %v2899
    %v2902 = vmul.f32 %v2570, 0.25
    %v2903 = vmul.f32 %v2571, 0.25
    %v2904 = vsel %vm413, %v2902, 0.0
    %v2905 = vsel %vm413, %v2903, 0.0
    %2906 = vst [vmem:[#allocation18] sm:$0xff] %v2904
    %2907 = vst [vmem:[#allocation18 + $0x8] sm:$0xff] %v2905
    // Predicated region
    $region94: #{tpu_custom_call.1} parent=1 // pred_check
      _
    $region95: #{tpu_custom_call.1} parent=1 // pred_check_branch
      %2909 = sbr.rel (0) target = $region97
    $region96: #{tpu_custom_call.1} parent=1 // pred_region
      %s2911 = ssub.s32 256, 256
      %2912 = vsyncadd [#allocation4], %s2911
      %s2913 = sshll.u32 [#allocation17], 4
      %s2914 = int_to_ptr.vmem [resolvable:$true] %s2913
      %2919 = dma.vmem_to_hbm [thread:$0]  %s2914, 256, %s14, [#allocation4], 128, 128, 8
    $region97: #{tpu_custom_call.1} parent=1 // pred_fallthru
      _
    // Predicated region
    $region98: #{tpu_custom_call.1} parent=1 // pred_check
      _
    $region99: #{tpu_custom_call.1} parent=1 // pred_check_branch
      %2921 = sbr.rel (0) target = $region101
    $region100: #{tpu_custom_call.1} parent=1 // pred_region
      %s2923 = ssub.s32 256, 256
      %2924 = vsyncadd [#allocation19], %s2923
      %s2925 = sshll.u32 [#allocation18], 4
      %s2926 = int_to_ptr.vmem [resolvable:$true] %s2925
      %2931 = dma.vmem_to_hbm [thread:$0]  %s2926, 256, %s15, [#allocation19], 128, 128, 8
    $region101: #{tpu_custom_call.1} parent=1 // pred_fallthru
      _
    // Predicated region
    $region102: #{tpu_custom_call.1} parent=1 // pred_check
      _
    $region103: #{tpu_custom_call.1} parent=1 // pred_check_branch
      %2933 = sbr.rel (0) target = $region105
    $region104: #{tpu_custom_call.1} parent=1 // pred_region
      %2934 = dma.done [#allocation4], 256
    $region105: #{tpu_custom_call.1} parent=1 // pred_fallthru
      _
    // Predicated region
    $region106: #{tpu_custom_call.1} parent=1 // pred_check
      _
    $region107: #{tpu_custom_call.1} parent=1 // pred_check_branch
      %2936 = sbr.rel (0) target = $region109
    $region108: #{tpu_custom_call.1} parent=1 // pred_region
      %2937 = dma.done [#allocation19], 256
    $region109: #{tpu_custom_call.1} parent=1 // pred_fallthru
      _
    %2938 = vsyncpa [#allocation3], 1
    %2939 = vsyncpa [#allocation6], 1
    %2940 = vsyncpa [#allocation9], 1
    %2941 = vsyncpa [#allocation12], 1
    %2942 = vsyncpa [#allocation15], 1
    %2943 = vsyncpa [#allocation4], 1
    %2944 = vsyncpa [#allocation19], 1

</llo_original>
